<compile_context>
chip_gen: v5e
topology: v5e:2x2
jax: 0.10.0
libtpu: 0.0.40
codegen_flags: <defaults>
</compile_context>

<pallas_src>
import functools

import jax
import jax.numpy as jnp
from jax.experimental import pallas as pl
from jax.experimental.pallas import tpu as pltpu


def _round_up(v, m):
    return ((v + m - 1) // m) * m


# ---------------------------------------------------------------------------
# Fused Pallas kernel: depth x [conv(KxK, stride S, pad K//2) + bias + LeakyReLU]
# ---------------------------------------------------------------------------
def _fused_topdown_kernel(*refs, cfg, N, slope):
    """refs = [x, (w, b) * L, out * L, (xpad, col) * L].

    cfg[i] = (K, S, P, Cin, Cout, Hin, Win, Ho, Wo, KKC, KKCpad, CP) -- static.
    """
    L = len(cfg)
    x_ref = refs[0]
    w_refs = [refs[1 + 2 * i] for i in range(L)]
    b_refs = [refs[2 + 2 * i] for i in range(L)]
    out_refs = refs[1 + 2 * L:1 + 3 * L]
    scratch = refs[1 + 3 * L:]
    xpad_refs = [scratch[2 * i] for i in range(L)]
    col_refs = [scratch[2 * i + 1] for i in range(L)]
    f32 = jnp.float32

    prev_act = None  # per-batch (Ho, Wo, Cout) activations of the previous layer
    for i in range(L):
        K, S, P, Cin, Cout, Hin, Win, Ho, Wo, KKC, KKCpad, CP = cfg[i]
        Hp, Wp = Hin + 2 * P, Win + 2 * P
        xpad, col = xpad_refs[i], col_refs[i]

        # ---- halo: zero only the P-wide border strips (interior overwritten) ----
        if P > 0:
            zcols = jnp.zeros((N * Hp, P, Cin), f32)
            xpad[:, 0:P, :] = zcols
            xpad[:, P + Win:Wp, :] = zcols
            zrows = jnp.zeros((P, Wp, Cin), f32)
            for n in range(N):
                xpad[n * Hp:n * Hp + P, :, :] = zrows
                xpad[n * Hp + P + Hin:(n + 1) * Hp, :, :] = zrows

        # ---- interior fill (layer 0 from the input block, else prev layer) ----
        for n in range(N):
            xin = x_ref[n].astype(f32) if i == 0 else prev_act[n]
            xpad[n * Hp + P:n * Hp + P + Hin, P:P + Win, :] = xin

        # ---- im2col into lane-padded scratch: tap t -> cols [t*Cin,(t+1)*Cin) ----
        if KKCpad > KKC:
            col[:, :, KKC:KKCpad] = jnp.zeros((N * Ho, Wo, KKCpad - KKC), f32)
        for n in range(N):
            for ky in range(K):
                for kx in range(K):
                    t = ky * K + kx
                    if S == 1:
                        patch = xpad[n * Hp + ky:n * Hp + ky + Ho,
                                     kx:kx + Wo, :]
                    else:
                        patch = xpad[pl.ds(n * Hp + ky, Ho, stride=S),
                                     pl.ds(kx, Wo, stride=S), :]
                    col[n * Ho:(n + 1) * Ho, :, t * Cin:(t + 1) * Cin] = patch

        # ---- one lane-aligned MXU matmul + bias + LeakyReLU(0.1) ----
        lhs = col[...].reshape(N * Ho * Wo, KKCpad)
        acc = jnp.dot(lhs, w_refs[i][...], preferred_element_type=f32)
        acc = acc + b_refs[i][...]                      # (1, CP) broadcast
        acc = jnp.where(acc >= 0, acc, slope * acc)     # padded lanes stay 0

        out_refs[i][...] = acc.astype(out_refs[i].dtype)   # lane-dense store

        if i + 1 < L:
            prev_act = [acc[n * Ho * Wo:(n + 1) * Ho * Wo, :Cout]
                        .reshape(Ho, Wo, Cout) for n in range(N)]


# ---------------------------------------------------------------------------
# Module forward: TopDown_extractor (single fused pallas_call)
# ---------------------------------------------------------------------------
def topdown_extractor(x_nchw, params, slope=0.1):
    """params: list of (w [Cout,Cin,K,K], b [Cout], stride).

    Returns (features [NCHW per layer], features_size [(H, W) per layer]).
    """
    N, C0, H, W = x_nchw.shape
    x = jnp.transpose(x_nchw, (0, 2, 3, 1)).astype(jnp.float32)   # NCHW -> NHWC

    cfg, packed = [], []
    Hin, Win, Cin = H, W, C0
    for (w, b, s) in params:
        Cout, _, K, _ = w.shape
        P = K // 2
        Ho = (Hin + 2 * P - K) // s + 1
        Wo = (Win + 2 * P - K) // s + 1
        KKC = K * K * Cin
        KKCpad = _round_up(KKC, 128)
        CP = _round_up(Cout, 128)
        # (ky, kx, cin) -> row of the im2col weight matrix; zero-pad to lane tiles.
        w_col = jnp.transpose(w, (2, 3, 1, 0)).reshape(KKC, Cout)
        w_pad = jnp.zeros((KKCpad, CP), jnp.float32).at[:KKC, :Cout].set(w_col)
        b_pad = jnp.zeros((1, CP), jnp.float32).at[0, :Cout].set(b)
        cfg.append((K, s, P, Cin, Cout, Hin, Win, Ho, Wo, KKC, KKCpad, CP))
        packed += [w_pad, b_pad]
        Hin, Win, Cin = Ho, Wo, Cout

    kern = functools.partial(_fused_topdown_kernel, cfg=tuple(cfg), N=N, slope=slope)

    in_specs = [pl.BlockSpec((N, H, W, C0), lambda i: (0, 0, 0, 0))]
    for c in cfg:
        _, _, _, _, _, _, _, _, _, _, KKCpad, CP = c
        in_specs.append(pl.BlockSpec((KKCpad, CP), lambda i: (0, 0)))
        in_specs.append(pl.BlockSpec((1, CP), lambda i: (0, 0)))

    out_shape = tuple(jax.ShapeDtypeStruct((N * c[7] * c[8], c[11]), x.dtype)
                      for c in cfg)
    out_specs = tuple(pl.BlockSpec((N * c[7] * c[8], c[11]), lambda i: (0, 0))
                      for c in cfg)

    scratch_shapes = []
    for (K, s, P, Cin_, Cout_, Hin_, Win_, Ho, Wo, KKC, KKCpad, CP) in cfg:
        scratch_shapes.append(
            pltpu.VMEM((N * (Hin_ + 2 * P), Win_ + 2 * P, Cin_), jnp.float32))
        scratch_shapes.append(pltpu.VMEM((N * Ho, Wo, KKCpad), jnp.float32))

    flops = sum(2 * N * c[7] * c[8] * c[10] * c[11] for c in cfg)
    bytes_accessed = 4 * (x.size + sum(int(p.size) for p in packed)
                          + sum(N * c[7] * c[8] * c[11] for c in cfg))

    outs = pl.pallas_call(
        kern,
        out_shape=out_shape,
        grid=(1,),
        in_specs=in_specs,
        out_specs=out_specs,
        scratch_shapes=scratch_shapes,
        compiler_params=pltpu.CompilerParams(
            dimension_semantics=("arbitrary",),
            vmem_limit_bytes=32 * 1024 * 1024),
        cost_estimate=pl.CostEstimate(flops=flops, transcendentals=0,
                                      bytes_accessed=bytes_accessed),
    )(x, *packed)

    features, features_size = [], []
    for o, c in zip(outs, cfg):
        Cout, Ho, Wo = c[4], c[7], c[8]
        f = o[:, :Cout].reshape(N, Ho, Wo, Cout)           # row-major (N,Ho,Wo,C)
        features.append(jnp.transpose(f, (0, 3, 1, 2)))    # back to torch NCHW
        features_size.append((Ho, Wo))
    return features, features_size


# ---------------------------------------------------------------------------
# Deterministic parameter init (PyTorch-default-style uniform bounds)
# ---------------------------------------------------------------------------
def init_conv(key, cout, cin, k):
    kw, kb = jax.random.split(key)
    bound = 1.0 / float(jnp.sqrt(cin * k * k))
    w = jax.random.uniform(kw, (cout, cin, k, k), jnp.float32, -bound, bound)
    b = jax.random.uniform(kb, (cout,), jnp.float32, -bound, bound)
    return w, b


def init_params(key, dims, kernel_size, scale_list):
    keys = jax.random.split(key, len(kernel_size))
    params = []
    for i in range(len(kernel_size)):
        w, b = init_conv(keys[i], dims[i + 1], dims[i], kernel_size[i])
        params.append((w, b, scale_list[i]))
    return params


# ---------------------------------------------------------------------------
# Pure-JAX reference (lax.conv) for correctness check
# ---------------------------------------------------------------------------
def _ref_forward(x_nchw, params, slope=0.1):
    feats, sizes = [], []
    x = x_nchw
    for w, b, s in params:
        p = w.shape[2] // 2
        x = jax.lax.conv_general_dilated(
            x, w, window_strides=(s, s), padding=((p, p), (p, p)),
            dimension_numbers=("NCHW", "OIHW", "NCHW"),
            precision=jax.lax.Precision.HIGHEST)
        x = x + b[None, :, None, None]
        x = jnp.where(x >= 0, x, slope * x)
        feats.append(x)
        sizes.append((x.shape[2], x.shape[3]))
    return feats, sizes


if __name__ == "__main__":
    key = jax.random.PRNGKey(0)

    # TopDown_extractor(dims, kernel_size, scale_list)
    dims = [4, 8, 16, 32]
    kernel_size = [5, 3, 3]
    scale_list = [2, 2, 2]
    N, H, W = 2, 16, 16

    kx, kp = jax.random.split(key)
    x_nchw = jax.random.normal(kx, (N, dims[0], H, W), jnp.float32)
    params = init_params(kp, dims, kernel_size, scale_list)

    feats, sizes = topdown_extractor(x_nchw, params)
    feats = jax.block_until_ready(feats)

    ref_feats, ref_sizes = _ref_forward(x_nchw, params)
    assert sizes == ref_sizes, (sizes, ref_sizes)
    for o, r in zip(feats, ref_feats):
        assert o.shape == r.shape, (o.shape, r.shape)
        err = float(jnp.max(jnp.abs(o - r)))
        assert jnp.allclose(o, r, atol=1e-3, rtol=1e-3), err

    # Expected NCHW shapes: (2,8,8,8), (2,16,4,4), (2,32,2,2)
    print("KERNEL_OK")
</pallas_src>

<mosaic_0001>
module attributes {stable_mosaic.version = 11 : i64} {
  func.func @_fused_topdown_kernel(%arg0: i32, %arg1: memref<2x16x16x4xf32, #tpu.memory_space<vmem>>, %arg2: memref<128x128xf32, #tpu.memory_space<vmem>>, %arg3: memref<1x128xf32, #tpu.memory_space<vmem>>, %arg4: memref<128x128xf32, #tpu.memory_space<vmem>>, %arg5: memref<1x128xf32, #tpu.memory_space<vmem>>, %arg6: memref<256x128xf32, #tpu.memory_space<vmem>>, %arg7: memref<1x128xf32, #tpu.memory_space<vmem>>, %arg8: memref<128x128xf32, #tpu.memory_space<vmem>>, %arg9: memref<32x128xf32, #tpu.memory_space<vmem>>, %arg10: memref<8x128xf32, #tpu.memory_space<vmem>>, %arg11: memref<40x20x4xf32, #tpu.memory_space<vmem>>, %arg12: memref<16x8x128xf32, #tpu.memory_space<vmem>>, %arg13: memref<20x10x8xf32, #tpu.memory_space<vmem>>, %arg14: memref<8x4x128xf32, #tpu.memory_space<vmem>>, %arg15: memref<12x6x16xf32, #tpu.memory_space<vmem>>, %arg16: memref<4x2x256xf32, #tpu.memory_space<vmem>>) attributes {dimension_semantics = [#tpu.dimension_semantics<arbitrary>], iteration_bounds = array<i64: 1>, scalar_prefetch = 0 : i64, scratch_operands = 6 : i64, tpu.core_type = #tpu.core_type<tc>, window_params = [{pipeline_mode = #tpu.pipeline_mode<synchronous>, transform_indices = @transform_0, window_bounds = array<i64: 2, 16, 16, 4>}, {pipeline_mode = #tpu.pipeline_mode<synchronous>, transform_indices = @transform_1, window_bounds = array<i64: 128, 128>}, {pipeline_mode = #tpu.pipeline_mode<synchronous>, transform_indices = @transform_2, window_bounds = array<i64: 1, 128>}, {pipeline_mode = #tpu.pipeline_mode<synchronous>, transform_indices = @transform_3, window_bounds = array<i64: 128, 128>}, {pipeline_mode = #tpu.pipeline_mode<synchronous>, transform_indices = @transform_4, window_bounds = array<i64: 1, 128>}, {pipeline_mode = #tpu.pipeline_mode<synchronous>, transform_indices = @transform_5, window_bounds = array<i64: 256, 128>}, {pipeline_mode = #tpu.pipeline_mode<synchronous>, transform_indices = @transform_6, window_bounds = array<i64: 1, 128>}, {pipeline_mode = #tpu.pipeline_mode<synchronous>, transform_indices = @transform_7, window_bounds = array<i64: 128, 128>}, {pipeline_mode = #tpu.pipeline_mode<synchronous>, transform_indices = @transform_8, window_bounds = array<i64: 32, 128>}, {pipeline_mode = #tpu.pipeline_mode<synchronous>, transform_indices = @transform_9, window_bounds = array<i64: 8, 128>}]} {
    %cst = arith.constant 0.000000e+00 : f32
    %0 = vector.broadcast %cst : f32 to vector<40x2x4xf32>
    %c0 = arith.constant 0 : index
    %c0_0 = arith.constant 0 : index
    %c0_1 = arith.constant 0 : index
    %1 = vector.load %arg11[%c0, %c0_0, %c0_1] : memref<40x20x4xf32, #tpu.memory_space<vmem>>, vector<40x2x4xf32>
    tpu.vector_store %arg11[%c0, %c0_0, %c0_1], %0 {strides = array<i32>} : memref<40x20x4xf32, #tpu.memory_space<vmem>>, vector<40x2x4xf32>,
    %c0_2 = arith.constant 0 : index
    %c18 = arith.constant 18 : index
    %c0_3 = arith.constant 0 : index
    %2 = vector.load %arg11[%c0_2, %c18, %c0_3] : memref<40x20x4xf32, #tpu.memory_space<vmem>>, vector<40x2x4xf32>
    tpu.vector_store %arg11[%c0_2, %c18, %c0_3], %0 {strides = array<i32>} : memref<40x20x4xf32, #tpu.memory_space<vmem>>, vector<40x2x4xf32>,
    %cst_4 = arith.constant 0.000000e+00 : f32
    %3 = vector.broadcast %cst_4 : f32 to vector<2x20x4xf32>
    %c0_5 = arith.constant 0 : index
    %c0_6 = arith.constant 0 : index
    %c0_7 = arith.constant 0 : index
    %4 = vector.load %arg11[%c0_5, %c0_6, %c0_7] : memref<40x20x4xf32, #tpu.memory_space<vmem>>, vector<2x20x4xf32>
    tpu.vector_store %arg11[%c0_5, %c0_6, %c0_7], %3 {strides = array<i32>} : memref<40x20x4xf32, #tpu.memory_space<vmem>>, vector<2x20x4xf32>,
    %c18_8 = arith.constant 18 : index
    %c0_9 = arith.constant 0 : index
    %c0_10 = arith.constant 0 : index
    %5 = vector.load %arg11[%c18_8, %c0_9, %c0_10] : memref<40x20x4xf32, #tpu.memory_space<vmem>>, vector<2x20x4xf32>
    tpu.vector_store %arg11[%c18_8, %c0_9, %c0_10], %3 {strides = array<i32>} : memref<40x20x4xf32, #tpu.memory_space<vmem>>, vector<2x20x4xf32>,
    %c20 = arith.constant 20 : index
    %c0_11 = arith.constant 0 : index
    %c0_12 = arith.constant 0 : index
    %6 = vector.load %arg11[%c20, %c0_11, %c0_12] : memref<40x20x4xf32, #tpu.memory_space<vmem>>, vector<2x20x4xf32>
    tpu.vector_store %arg11[%c20, %c0_11, %c0_12], %3 {strides = array<i32>} : memref<40x20x4xf32, #tpu.memory_space<vmem>>, vector<2x20x4xf32>,
    %c38 = arith.constant 38 : index
    %c0_13 = arith.constant 0 : index
    %c0_14 = arith.constant 0 : index
    %7 = vector.load %arg11[%c38, %c0_13, %c0_14] : memref<40x20x4xf32, #tpu.memory_space<vmem>>, vector<2x20x4xf32>
    tpu.vector_store %arg11[%c38, %c0_13, %c0_14], %3 {strides = array<i32>} : memref<40x20x4xf32, #tpu.memory_space<vmem>>, vector<2x20x4xf32>,
    %c0_15 = arith.constant 0 : index
    %c0_16 = arith.constant 0 : index
    %c0_17 = arith.constant 0 : index
    %c0_18 = arith.constant 0 : index
    %8 = vector.load %arg1[%c0_15, %c0_16, %c0_17, %c0_18] : memref<2x16x16x4xf32, #tpu.memory_space<vmem>>, vector<1x16x16x4xf32>
    %9 = vector.shape_cast %8 : vector<1x16x16x4xf32> to vector<16x16x4xf32>
    %c2 = arith.constant 2 : index
    %c2_19 = arith.constant 2 : index
    %c0_20 = arith.constant 0 : index
    %10 = vector.load %arg11[%c2, %c2_19, %c0_20] : memref<40x20x4xf32, #tpu.memory_space<vmem>>, vector<16x16x4xf32>
    tpu.vector_store %arg11[%c2, %c2_19, %c0_20], %9 {strides = array<i32>} : memref<40x20x4xf32, #tpu.memory_space<vmem>>, vector<16x16x4xf32>,
    %c1 = arith.constant 1 : index
    %c0_21 = arith.constant 0 : index
    %c0_22 = arith.constant 0 : index
    %c0_23 = arith.constant 0 : index
    %11 = vector.load %arg1[%c1, %c0_21, %c0_22, %c0_23] : memref<2x16x16x4xf32, #tpu.memory_space<vmem>>, vector<1x16x16x4xf32>
    %12 = vector.shape_cast %11 : vector<1x16x16x4xf32> to vector<16x16x4xf32>
    %c22 = arith.constant 22 : index
    %c2_24 = arith.constant 2 : index
    %c0_25 = arith.constant 0 : index
    %13 = vector.load %arg11[%c22, %c2_24, %c0_25] : memref<40x20x4xf32, #tpu.memory_space<vmem>>, vector<16x16x4xf32>
    tpu.vector_store %arg11[%c22, %c2_24, %c0_25], %12 {strides = array<i32>} : memref<40x20x4xf32, #tpu.memory_space<vmem>>, vector<16x16x4xf32>,
    %cst_26 = arith.constant 0.000000e+00 : f32
    %14 = vector.broadcast %cst_26 : f32 to vector<16x8x28xf32>
    %c0_27 = arith.constant 0 : index
    %c0_28 = arith.constant 0 : index
    %c100 = arith.constant 100 : index
    %15 = vector.load %arg12[%c0_27, %c0_28, %c100] : memref<16x8x128xf32, #tpu.memory_space<vmem>>, vector<16x8x28xf32>
    tpu.vector_store %arg12[%c0_27, %c0_28, %c100], %14 {strides = array<i32>} : memref<16x8x128xf32, #tpu.memory_space<vmem>>, vector<16x8x28xf32>,
    %c0_29 = arith.constant 0 : index
    %c0_30 = arith.constant 0 : index
    %c0_31 = arith.constant 0 : index
    %16 = tpu.strided_load %arg11[%c0_29, %c0_30, %c0_31] {strides = array<i32: 2, 2, 1>} : memref<40x20x4xf32, #tpu.memory_space<vmem>>, vector<8x8x4xf32>
    %c0_32 = arith.constant 0 : index
    %c0_33 = arith.constant 0 : index
    %c0_34 = arith.constant 0 : index
    %17 = vector.load %arg12[%c0_32, %c0_33, %c0_34] : memref<16x8x128xf32, #tpu.memory_space<vmem>>, vector<8x8x4xf32>
    tpu.vector_store %arg12[%c0_32, %c0_33, %c0_34], %16 {strides = array<i32>} : memref<16x8x128xf32, #tpu.memory_space<vmem>>, vector<8x8x4xf32>,
    %c0_35 = arith.constant 0 : index
    %c1_36 = arith.constant 1 : index
    %c0_37 = arith.constant 0 : index
    %18 = tpu.strided_load %arg11[%c0_35, %c1_36, %c0_37] {strides = array<i32: 2, 2, 1>} : memref<40x20x4xf32, #tpu.memory_space<vmem>>, vector<8x8x4xf32>
    %c0_38 = arith.constant 0 : index
    %c0_39 = arith.constant 0 : index
    %c4 = arith.constant 4 : index
    %19 = vector.load %arg12[%c0_38, %c0_39, %c4] : memref<16x8x128xf32, #tpu.memory_space<vmem>>, vector<8x8x4xf32>
    tpu.vector_store %arg12[%c0_38, %c0_39, %c4], %18 {strides = array<i32>} : memref<16x8x128xf32, #tpu.memory_space<vmem>>, vector<8x8x4xf32>,
    %c0_40 = arith.constant 0 : index
    %c2_41 = arith.constant 2 : index
    %c0_42 = arith.constant 0 : index
    %20 = tpu.strided_load %arg11[%c0_40, %c2_41, %c0_42] {strides = array<i32: 2, 2, 1>} : memref<40x20x4xf32, #tpu.memory_space<vmem>>, vector<8x8x4xf32>
    %c0_43 = arith.constant 0 : index
    %c0_44 = arith.constant 0 : index
    %c8 = arith.constant 8 : index
    %21 = vector.load %arg12[%c0_43, %c0_44, %c8] : memref<16x8x128xf32, #tpu.memory_space<vmem>>, vector<8x8x4xf32>
    tpu.vector_store %arg12[%c0_43, %c0_44, %c8], %20 {strides = array<i32>} : memref<16x8x128xf32, #tpu.memory_space<vmem>>, vector<8x8x4xf32>,
    %c0_45 = arith.constant 0 : index
    %c3 = arith.constant 3 : index
    %c0_46 = arith.constant 0 : index
    %22 = tpu.strided_load %arg11[%c0_45, %c3, %c0_46] {strides = array<i32: 2, 2, 1>} : memref<40x20x4xf32, #tpu.memory_space<vmem>>, vector<8x8x4xf32>
    %c0_47 = arith.constant 0 : index
    %c0_48 = arith.constant 0 : index
    %c12 = arith.constant 12 : index
    %23 = vector.load %arg12[%c0_47, %c0_48, %c12] : memref<16x8x128xf32, #tpu.memory_space<vmem>>, vector<8x8x4xf32>
    tpu.vector_store %arg12[%c0_47, %c0_48, %c12], %22 {strides = array<i32>} : memref<16x8x128xf32, #tpu.memory_space<vmem>>, vector<8x8x4xf32>,
    %c0_49 = arith.constant 0 : index
    %c4_50 = arith.constant 4 : index
    %c0_51 = arith.constant 0 : index
    %24 = tpu.strided_load %arg11[%c0_49, %c4_50, %c0_51] {strides = array<i32: 2, 2, 1>} : memref<40x20x4xf32, #tpu.memory_space<vmem>>, vector<8x8x4xf32>
    %c0_52 = arith.constant 0 : index
    %c0_53 = arith.constant 0 : index
    %c16 = arith.constant 16 : index
    %25 = vector.load %arg12[%c0_52, %c0_53, %c16] : memref<16x8x128xf32, #tpu.memory_space<vmem>>, vector<8x8x4xf32>
    tpu.vector_store %arg12[%c0_52, %c0_53, %c16], %24 {strides = array<i32>} : memref<16x8x128xf32, #tpu.memory_space<vmem>>, vector<8x8x4xf32>,
    %c1_54 = arith.constant 1 : index
    %c0_55 = arith.constant 0 : index
    %c0_56 = arith.constant 0 : index
    %26 = tpu.strided_load %arg11[%c1_54, %c0_55, %c0_56] {strides = array<i32: 2, 2, 1>} : memref<40x20x4xf32, #tpu.memory_space<vmem>>, vector<8x8x4xf32>
    %c0_57 = arith.constant 0 : index
    %c0_58 = arith.constant 0 : index
    %c20_59 = arith.constant 20 : index
    %27 = vector.load %arg12[%c0_57, %c0_58, %c20_59] : memref<16x8x128xf32, #tpu.memory_space<vmem>>, vector<8x8x4xf32>
    tpu.vector_store %arg12[%c0_57, %c0_58, %c20_59], %26 {strides = array<i32>} : memref<16x8x128xf32, #tpu.memory_space<vmem>>, vector<8x8x4xf32>,
    %c1_60 = arith.constant 1 : index
    %c1_61 = arith.constant 1 : index
    %c0_62 = arith.constant 0 : index
    %28 = tpu.strided_load %arg11[%c1_60, %c1_61, %c0_62] {strides = array<i32: 2, 2, 1>} : memref<40x20x4xf32, #tpu.memory_space<vmem>>, vector<8x8x4xf32>
    %c0_63 = arith.constant 0 : index
    %c0_64 = arith.constant 0 : index
    %c24 = arith.constant 24 : index
    %29 = vector.load %arg12[%c0_63, %c0_64, %c24] : memref<16x8x128xf32, #tpu.memory_space<vmem>>, vector<8x8x4xf32>
    tpu.vector_store %arg12[%c0_63, %c0_64, %c24], %28 {strides = array<i32>} : memref<16x8x128xf32, #tpu.memory_space<vmem>>, vector<8x8x4xf32>,
    %c1_65 = arith.constant 1 : index
    %c2_66 = arith.constant 2 : index
    %c0_67 = arith.constant 0 : index
    %30 = tpu.strided_load %arg11[%c1_65, %c2_66, %c0_67] {strides = array<i32: 2, 2, 1>} : memref<40x20x4xf32, #tpu.memory_space<vmem>>, vector<8x8x4xf32>
    %c0_68 = arith.constant 0 : index
    %c0_69 = arith.constant 0 : index
    %c28 = arith.constant 28 : index
    %31 = vector.load %arg12[%c0_68, %c0_69, %c28] : memref<16x8x128xf32, #tpu.memory_space<vmem>>, vector<8x8x4xf32>
    tpu.vector_store %arg12[%c0_68, %c0_69, %c28], %30 {strides = array<i32>} : memref<16x8x128xf32, #tpu.memory_space<vmem>>, vector<8x8x4xf32>,
    %c1_70 = arith.constant 1 : index
    %c3_71 = arith.constant 3 : index
    %c0_72 = arith.constant 0 : index
    %32 = tpu.strided_load %arg11[%c1_70, %c3_71, %c0_72] {strides = array<i32: 2, 2, 1>} : memref<40x20x4xf32, #tpu.memory_space<vmem>>, vector<8x8x4xf32>
    %c0_73 = arith.constant 0 : index
    %c0_74 = arith.constant 0 : index
    %c32 = arith.constant 32 : index
    %33 = vector.load %arg12[%c0_73, %c0_74, %c32] : memref<16x8x128xf32, #tpu.memory_space<vmem>>, vector<8x8x4xf32>
    tpu.vector_store %arg12[%c0_73, %c0_74, %c32], %32 {strides = array<i32>} : memref<16x8x128xf32, #tpu.memory_space<vmem>>, vector<8x8x4xf32>,
    %c1_75 = arith.constant 1 : index
    %c4_76 = arith.constant 4 : index
    %c0_77 = arith.constant 0 : index
    %34 = tpu.strided_load %arg11[%c1_75, %c4_76, %c0_77] {strides = array<i32: 2, 2, 1>} : memref<40x20x4xf32, #tpu.memory_space<vmem>>, vector<8x8x4xf32>
    %c0_78 = arith.constant 0 : index
    %c0_79 = arith.constant 0 : index
    %c36 = arith.constant 36 : index
    %35 = vector.load %arg12[%c0_78, %c0_79, %c36] : memref<16x8x128xf32, #tpu.memory_space<vmem>>, vector<8x8x4xf32>
    tpu.vector_store %arg12[%c0_78, %c0_79, %c36], %34 {strides = array<i32>} : memref<16x8x128xf32, #tpu.memory_space<vmem>>, vector<8x8x4xf32>,
    %c2_80 = arith.constant 2 : index
    %c0_81 = arith.constant 0 : index
    %c0_82 = arith.constant 0 : index
    %36 = tpu.strided_load %arg11[%c2_80, %c0_81, %c0_82] {strides = array<i32: 2, 2, 1>} : memref<40x20x4xf32, #tpu.memory_space<vmem>>, vector<8x8x4xf32>
    %c0_83 = arith.constant 0 : index
    %c0_84 = arith.constant 0 : index
    %c40 = arith.constant 40 : index
    %37 = vector.load %arg12[%c0_83, %c0_84, %c40] : memref<16x8x128xf32, #tpu.memory_space<vmem>>, vector<8x8x4xf32>
    tpu.vector_store %arg12[%c0_83, %c0_84, %c40], %36 {strides = array<i32>} : memref<16x8x128xf32, #tpu.memory_space<vmem>>, vector<8x8x4xf32>,
    %c2_85 = arith.constant 2 : index
    %c1_86 = arith.constant 1 : index
    %c0_87 = arith.constant 0 : index
    %38 = tpu.strided_load %arg11[%c2_85, %c1_86, %c0_87] {strides = array<i32: 2, 2, 1>} : memref<40x20x4xf32, #tpu.memory_space<vmem>>, vector<8x8x4xf32>
    %c0_88 = arith.constant 0 : index
    %c0_89 = arith.constant 0 : index
    %c44 = arith.constant 44 : index
    %39 = vector.load %arg12[%c0_88, %c0_89, %c44] : memref<16x8x128xf32, #tpu.memory_space<vmem>>, vector<8x8x4xf32>
    tpu.vector_store %arg12[%c0_88, %c0_89, %c44], %38 {strides = array<i32>} : memref<16x8x128xf32, #tpu.memory_space<vmem>>, vector<8x8x4xf32>,
    %c2_90 = arith.constant 2 : index
    %c2_91 = arith.constant 2 : index
    %c0_92 = arith.constant 0 : index
    %40 = tpu.strided_load %arg11[%c2_90, %c2_91, %c0_92] {strides = array<i32: 2, 2, 1>} : memref<40x20x4xf32, #tpu.memory_space<vmem>>, vector<8x8x4xf32>
    %c0_93 = arith.constant 0 : index
    %c0_94 = arith.constant 0 : index
    %c48 = arith.constant 48 : index
    %41 = vector.load %arg12[%c0_93, %c0_94, %c48] : memref<16x8x128xf32, #tpu.memory_space<vmem>>, vector<8x8x4xf32>
    tpu.vector_store %arg12[%c0_93, %c0_94, %c48], %40 {strides = array<i32>} : memref<16x8x128xf32, #tpu.memory_space<vmem>>, vector<8x8x4xf32>,
    %c2_95 = arith.constant 2 : index
    %c3_96 = arith.constant 3 : index
    %c0_97 = arith.constant 0 : index
    %42 = tpu.strided_load %arg11[%c2_95, %c3_96, %c0_97] {strides = array<i32: 2, 2, 1>} : memref<40x20x4xf32, #tpu.memory_space<vmem>>, vector<8x8x4xf32>
    %c0_98 = arith.constant 0 : index
    %c0_99 = arith.constant 0 : index
    %c52 = arith.constant 52 : index
    %43 = vector.load %arg12[%c0_98, %c0_99, %c52] : memref<16x8x128xf32, #tpu.memory_space<vmem>>, vector<8x8x4xf32>
    tpu.vector_store %arg12[%c0_98, %c0_99, %c52], %42 {strides = array<i32>} : memref<16x8x128xf32, #tpu.memory_space<vmem>>, vector<8x8x4xf32>,
    %c2_100 = arith.constant 2 : index
    %c4_101 = arith.constant 4 : index
    %c0_102 = arith.constant 0 : index
    %44 = tpu.strided_load %arg11[%c2_100, %c4_101, %c0_102] {strides = array<i32: 2, 2, 1>} : memref<40x20x4xf32, #tpu.memory_space<vmem>>, vector<8x8x4xf32>
    %c0_103 = arith.constant 0 : index
    %c0_104 = arith.constant 0 : index
    %c56 = arith.constant 56 : index
    %45 = vector.load %arg12[%c0_103, %c0_104, %c56] : memref<16x8x128xf32, #tpu.memory_space<vmem>>, vector<8x8x4xf32>
    tpu.vector_store %arg12[%c0_103, %c0_104, %c56], %44 {strides = array<i32>} : memref<16x8x128xf32, #tpu.memory_space<vmem>>, vector<8x8x4xf32>,
    %c3_105 = arith.constant 3 : index
    %c0_106 = arith.constant 0 : index
    %c0_107 = arith.constant 0 : index
    %46 = tpu.strided_load %arg11[%c3_105, %c0_106, %c0_107] {strides = array<i32: 2, 2, 1>} : memref<40x20x4xf32, #tpu.memory_space<vmem>>, vector<8x8x4xf32>
    %c0_108 = arith.constant 0 : index
    %c0_109 = arith.constant 0 : index
    %c60 = arith.constant 60 : index
    %47 = vector.load %arg12[%c0_108, %c0_109, %c60] : memref<16x8x128xf32, #tpu.memory_space<vmem>>, vector<8x8x4xf32>
    tpu.vector_store %arg12[%c0_108, %c0_109, %c60], %46 {strides = array<i32>} : memref<16x8x128xf32, #tpu.memory_space<vmem>>, vector<8x8x4xf32>,
    %c3_110 = arith.constant 3 : index
    %c1_111 = arith.constant 1 : index
    %c0_112 = arith.constant 0 : index
    %48 = tpu.strided_load %arg11[%c3_110, %c1_111, %c0_112] {strides = array<i32: 2, 2, 1>} : memref<40x20x4xf32, #tpu.memory_space<vmem>>, vector<8x8x4xf32>
    %c0_113 = arith.constant 0 : index
    %c0_114 = arith.constant 0 : index
    %c64 = arith.constant 64 : index
    %49 = vector.load %arg12[%c0_113, %c0_114, %c64] : memref<16x8x128xf32, #tpu.memory_space<vmem>>, vector<8x8x4xf32>
    tpu.vector_store %arg12[%c0_113, %c0_114, %c64], %48 {strides = array<i32>} : memref<16x8x128xf32, #tpu.memory_space<vmem>>, vector<8x8x4xf32>,
    %c3_115 = arith.constant 3 : index
    %c2_116 = arith.constant 2 : index
    %c0_117 = arith.constant 0 : index
    %50 = tpu.strided_load %arg11[%c3_115, %c2_116, %c0_117] {strides = array<i32: 2, 2, 1>} : memref<40x20x4xf32, #tpu.memory_space<vmem>>, vector<8x8x4xf32>
    %c0_118 = arith.constant 0 : index
    %c0_119 = arith.constant 0 : index
    %c68 = arith.constant 68 : index
    %51 = vector.load %arg12[%c0_118, %c0_119, %c68] : memref<16x8x128xf32, #tpu.memory_space<vmem>>, vector<8x8x4xf32>
    tpu.vector_store %arg12[%c0_118, %c0_119, %c68], %50 {strides = array<i32>} : memref<16x8x128xf32, #tpu.memory_space<vmem>>, vector<8x8x4xf32>,
    %c3_120 = arith.constant 3 : index
    %c3_121 = arith.constant 3 : index
    %c0_122 = arith.constant 0 : index
    %52 = tpu.strided_load %arg11[%c3_120, %c3_121, %c0_122] {strides = array<i32: 2, 2, 1>} : memref<40x20x4xf32, #tpu.memory_space<vmem>>, vector<8x8x4xf32>
    %c0_123 = arith.constant 0 : index
    %c0_124 = arith.constant 0 : index
    %c72 = arith.constant 72 : index
    %53 = vector.load %arg12[%c0_123, %c0_124, %c72] : memref<16x8x128xf32, #tpu.memory_space<vmem>>, vector<8x8x4xf32>
    tpu.vector_store %arg12[%c0_123, %c0_124, %c72], %52 {strides = array<i32>} : memref<16x8x128xf32, #tpu.memory_space<vmem>>, vector<8x8x4xf32>,
    %c3_125 = arith.constant 3 : index
    %c4_126 = arith.constant 4 : index
    %c0_127 = arith.constant 0 : index
    %54 = tpu.strided_load %arg11[%c3_125, %c4_126, %c0_127] {strides = array<i32: 2, 2, 1>} : memref<40x20x4xf32, #tpu.memory_space<vmem>>, vector<8x8x4xf32>
    %c0_128 = arith.constant 0 : index
    %c0_129 = arith.constant 0 : index
    %c76 = arith.constant 76 : index
    %55 = vector.load %arg12[%c0_128, %c0_129, %c76] : memref<16x8x128xf32, #tpu.memory_space<vmem>>, vector<8x8x4xf32>
    tpu.vector_store %arg12[%c0_128, %c0_129, %c76], %54 {strides = array<i32>} : memref<16x8x128xf32, #tpu.memory_space<vmem>>, vector<8x8x4xf32>,
    %c4_130 = arith.constant 4 : index
    %c0_131 = arith.constant 0 : index
    %c0_132 = arith.constant 0 : index
    %56 = tpu.strided_load %arg11[%c4_130, %c0_131, %c0_132] {strides = array<i32: 2, 2, 1>} : memref<40x20x4xf32, #tpu.memory_space<vmem>>, vector<8x8x4xf32>
    %c0_133 = arith.constant 0 : index
    %c0_134 = arith.constant 0 : index
    %c80 = arith.constant 80 : index
    %57 = vector.load %arg12[%c0_133, %c0_134, %c80] : memref<16x8x128xf32, #tpu.memory_space<vmem>>, vector<8x8x4xf32>
    tpu.vector_store %arg12[%c0_133, %c0_134, %c80], %56 {strides = array<i32>} : memref<16x8x128xf32, #tpu.memory_space<vmem>>, vector<8x8x4xf32>,
    %c4_135 = arith.constant 4 : index
    %c1_136 = arith.constant 1 : index
    %c0_137 = arith.constant 0 : index
    %58 = tpu.strided_load %arg11[%c4_135, %c1_136, %c0_137] {strides = array<i32: 2, 2, 1>} : memref<40x20x4xf32, #tpu.memory_space<vmem>>, vector<8x8x4xf32>
    %c0_138 = arith.constant 0 : index
    %c0_139 = arith.constant 0 : index
    %c84 = arith.constant 84 : index
    %59 = vector.load %arg12[%c0_138, %c0_139, %c84] : memref<16x8x128xf32, #tpu.memory_space<vmem>>, vector<8x8x4xf32>
    tpu.vector_store %arg12[%c0_138, %c0_139, %c84], %58 {strides = array<i32>} : memref<16x8x128xf32, #tpu.memory_space<vmem>>, vector<8x8x4xf32>,
    %c4_140 = arith.constant 4 : index
    %c2_141 = arith.constant 2 : index
    %c0_142 = arith.constant 0 : index
    %60 = tpu.strided_load %arg11[%c4_140, %c2_141, %c0_142] {strides = array<i32: 2, 2, 1>} : memref<40x20x4xf32, #tpu.memory_space<vmem>>, vector<8x8x4xf32>
    %c0_143 = arith.constant 0 : index
    %c0_144 = arith.constant 0 : index
    %c88 = arith.constant 88 : index
    %61 = vector.load %arg12[%c0_143, %c0_144, %c88] : memref<16x8x128xf32, #tpu.memory_space<vmem>>, vector<8x8x4xf32>
    tpu.vector_store %arg12[%c0_143, %c0_144, %c88], %60 {strides = array<i32>} : memref<16x8x128xf32, #tpu.memory_space<vmem>>, vector<8x8x4xf32>,
    %c4_145 = arith.constant 4 : index
    %c3_146 = arith.constant 3 : index
    %c0_147 = arith.constant 0 : index
    %62 = tpu.strided_load %arg11[%c4_145, %c3_146, %c0_147] {strides = array<i32: 2, 2, 1>} : memref<40x20x4xf32, #tpu.memory_space<vmem>>, vector<8x8x4xf32>
    %c0_148 = arith.constant 0 : index
    %c0_149 = arith.constant 0 : index
    %c92 = arith.constant 92 : index
    %63 = vector.load %arg12[%c0_148, %c0_149, %c92] : memref<16x8x128xf32, #tpu.memory_space<vmem>>, vector<8x8x4xf32>
    tpu.vector_store %arg12[%c0_148, %c0_149, %c92], %62 {strides = array<i32>} : memref<16x8x128xf32, #tpu.memory_space<vmem>>, vector<8x8x4xf32>,
    %c4_150 = arith.constant 4 : index
    %c4_151 = arith.constant 4 : index
    %c0_152 = arith.constant 0 : index
    %64 = tpu.strided_load %arg11[%c4_150, %c4_151, %c0_152] {strides = array<i32: 2, 2, 1>} : memref<40x20x4xf32, #tpu.memory_space<vmem>>, vector<8x8x4xf32>
    %c0_153 = arith.constant 0 : index
    %c0_154 = arith.constant 0 : index
    %c96 = arith.constant 96 : index
    %65 = vector.load %arg12[%c0_153, %c0_154, %c96] : memref<16x8x128xf32, #tpu.memory_space<vmem>>, vector<8x8x4xf32>
    tpu.vector_store %arg12[%c0_153, %c0_154, %c96], %64 {strides = array<i32>} : memref<16x8x128xf32, #tpu.memory_space<vmem>>, vector<8x8x4xf32>,
    %c20_155 = arith.constant 20 : index
    %c0_156 = arith.constant 0 : index
    %c0_157 = arith.constant 0 : index
    %66 = tpu.strided_load %arg11[%c20_155, %c0_156, %c0_157] {strides = array<i32: 2, 2, 1>} : memref<40x20x4xf32, #tpu.memory_space<vmem>>, vector<8x8x4xf32>
    %c8_158 = arith.constant 8 : index
    %c0_159 = arith.constant 0 : index
    %c0_160 = arith.constant 0 : index
    %67 = vector.load %arg12[%c8_158, %c0_159, %c0_160] : memref<16x8x128xf32, #tpu.memory_space<vmem>>, vector<8x8x4xf32>
    tpu.vector_store %arg12[%c8_158, %c0_159, %c0_160], %66 {strides = array<i32>} : memref<16x8x128xf32, #tpu.memory_space<vmem>>, vector<8x8x4xf32>,
    %c20_161 = arith.constant 20 : index
    %c1_162 = arith.constant 1 : index
    %c0_163 = arith.constant 0 : index
    %68 = tpu.strided_load %arg11[%c20_161, %c1_162, %c0_163] {strides = array<i32: 2, 2, 1>} : memref<40x20x4xf32, #tpu.memory_space<vmem>>, vector<8x8x4xf32>
    %c8_164 = arith.constant 8 : index
    %c0_165 = arith.constant 0 : index
    %c4_166 = arith.constant 4 : index
    %69 = vector.load %arg12[%c8_164, %c0_165, %c4_166] : memref<16x8x128xf32, #tpu.memory_space<vmem>>, vector<8x8x4xf32>
    tpu.vector_store %arg12[%c8_164, %c0_165, %c4_166], %68 {strides = array<i32>} : memref<16x8x128xf32, #tpu.memory_space<vmem>>, vector<8x8x4xf32>,
    %c20_167 = arith.constant 20 : index
    %c2_168 = arith.constant 2 : index
    %c0_169 = arith.constant 0 : index
    %70 = tpu.strided_load %arg11[%c20_167, %c2_168, %c0_169] {strides = array<i32: 2, 2, 1>} : memref<40x20x4xf32, #tpu.memory_space<vmem>>, vector<8x8x4xf32>
    %c8_170 = arith.constant 8 : index
    %c0_171 = arith.constant 0 : index
    %c8_172 = arith.constant 8 : index
    %71 = vector.load %arg12[%c8_170, %c0_171, %c8_172] : memref<16x8x128xf32, #tpu.memory_space<vmem>>, vector<8x8x4xf32>
    tpu.vector_store %arg12[%c8_170, %c0_171, %c8_172], %70 {strides = array<i32>} : memref<16x8x128xf32, #tpu.memory_space<vmem>>, vector<8x8x4xf32>,
    %c20_173 = arith.constant 20 : index
    %c3_174 = arith.constant 3 : index
    %c0_175 = arith.constant 0 : index
    %72 = tpu.strided_load %arg11[%c20_173, %c3_174, %c0_175] {strides = array<i32: 2, 2, 1>} : memref<40x20x4xf32, #tpu.memory_space<vmem>>, vector<8x8x4xf32>
    %c8_176 = arith.constant 8 : index
    %c0_177 = arith.constant 0 : index
    %c12_178 = arith.constant 12 : index
    %73 = vector.load %arg12[%c8_176, %c0_177, %c12_178] : memref<16x8x128xf32, #tpu.memory_space<vmem>>, vector<8x8x4xf32>
    tpu.vector_store %arg12[%c8_176, %c0_177, %c12_178], %72 {strides = array<i32>} : memref<16x8x128xf32, #tpu.memory_space<vmem>>, vector<8x8x4xf32>,
    %c20_179 = arith.constant 20 : index
    %c4_180 = arith.constant 4 : index
    %c0_181 = arith.constant 0 : index
    %74 = tpu.strided_load %arg11[%c20_179, %c4_180, %c0_181] {strides = array<i32: 2, 2, 1>} : memref<40x20x4xf32, #tpu.memory_space<vmem>>, vector<8x8x4xf32>
    %c8_182 = arith.constant 8 : index
    %c0_183 = arith.constant 0 : index
    %c16_184 = arith.constant 16 : index
    %75 = vector.load %arg12[%c8_182, %c0_183, %c16_184] : memref<16x8x128xf32, #tpu.memory_space<vmem>>, vector<8x8x4xf32>
    tpu.vector_store %arg12[%c8_182, %c0_183, %c16_184], %74 {strides = array<i32>} : memref<16x8x128xf32, #tpu.memory_space<vmem>>, vector<8x8x4xf32>,
    %c21 = arith.constant 21 : index
    %c0_185 = arith.constant 0 : index
    %c0_186 = arith.constant 0 : index
    %76 = tpu.strided_load %arg11[%c21, %c0_185, %c0_186] {strides = array<i32: 2, 2, 1>} : memref<40x20x4xf32, #tpu.memory_space<vmem>>, vector<8x8x4xf32>
    %c8_187 = arith.constant 8 : index
    %c0_188 = arith.constant 0 : index
    %c20_189 = arith.constant 20 : index
    %77 = vector.load %arg12[%c8_187, %c0_188, %c20_189] : memref<16x8x128xf32, #tpu.memory_space<vmem>>, vector<8x8x4xf32>
    tpu.vector_store %arg12[%c8_187, %c0_188, %c20_189], %76 {strides = array<i32>} : memref<16x8x128xf32, #tpu.memory_space<vmem>>, vector<8x8x4xf32>,
    %c21_190 = arith.constant 21 : index
    %c1_191 = arith.constant 1 : index
    %c0_192 = arith.constant 0 : index
    %78 = tpu.strided_load %arg11[%c21_190, %c1_191, %c0_192] {strides = array<i32: 2, 2, 1>} : memref<40x20x4xf32, #tpu.memory_space<vmem>>, vector<8x8x4xf32>
    %c8_193 = arith.constant 8 : index
    %c0_194 = arith.constant 0 : index
    %c24_195 = arith.constant 24 : index
    %79 = vector.load %arg12[%c8_193, %c0_194, %c24_195] : memref<16x8x128xf32, #tpu.memory_space<vmem>>, vector<8x8x4xf32>
    tpu.vector_store %arg12[%c8_193, %c0_194, %c24_195], %78 {strides = array<i32>} : memref<16x8x128xf32, #tpu.memory_space<vmem>>, vector<8x8x4xf32>,
    %c21_196 = arith.constant 21 : index
    %c2_197 = arith.constant 2 : index
    %c0_198 = arith.constant 0 : index
    %80 = tpu.strided_load %arg11[%c21_196, %c2_197, %c0_198] {strides = array<i32: 2, 2, 1>} : memref<40x20x4xf32, #tpu.memory_space<vmem>>, vector<8x8x4xf32>
    %c8_199 = arith.constant 8 : index
    %c0_200 = arith.constant 0 : index
    %c28_201 = arith.constant 28 : index
    %81 = vector.load %arg12[%c8_199, %c0_200, %c28_201] : memref<16x8x128xf32, #tpu.memory_space<vmem>>, vector<8x8x4xf32>
    tpu.vector_store %arg12[%c8_199, %c0_200, %c28_201], %80 {strides = array<i32>} : memref<16x8x128xf32, #tpu.memory_space<vmem>>, vector<8x8x4xf32>,
    %c21_202 = arith.constant 21 : index
    %c3_203 = arith.constant 3 : index
    %c0_204 = arith.constant 0 : index
    %82 = tpu.strided_load %arg11[%c21_202, %c3_203, %c0_204] {strides = array<i32: 2, 2, 1>} : memref<40x20x4xf32, #tpu.memory_space<vmem>>, vector<8x8x4xf32>
    %c8_205 = arith.constant 8 : index
    %c0_206 = arith.constant 0 : index
    %c32_207 = arith.constant 32 : index
    %83 = vector.load %arg12[%c8_205, %c0_206, %c32_207] : memref<16x8x128xf32, #tpu.memory_space<vmem>>, vector<8x8x4xf32>
    tpu.vector_store %arg12[%c8_205, %c0_206, %c32_207], %82 {strides = array<i32>} : memref<16x8x128xf32, #tpu.memory_space<vmem>>, vector<8x8x4xf32>,
    %c21_208 = arith.constant 21 : index
    %c4_209 = arith.constant 4 : index
    %c0_210 = arith.constant 0 : index
    %84 = tpu.strided_load %arg11[%c21_208, %c4_209, %c0_210] {strides = array<i32: 2, 2, 1>} : memref<40x20x4xf32, #tpu.memory_space<vmem>>, vector<8x8x4xf32>
    %c8_211 = arith.constant 8 : index
    %c0_212 = arith.constant 0 : index
    %c36_213 = arith.constant 36 : index
    %85 = vector.load %arg12[%c8_211, %c0_212, %c36_213] : memref<16x8x128xf32, #tpu.memory_space<vmem>>, vector<8x8x4xf32>
    tpu.vector_store %arg12[%c8_211, %c0_212, %c36_213], %84 {strides = array<i32>} : memref<16x8x128xf32, #tpu.memory_space<vmem>>, vector<8x8x4xf32>,
    %c22_214 = arith.constant 22 : index
    %c0_215 = arith.constant 0 : index
    %c0_216 = arith.constant 0 : index
    %86 = tpu.strided_load %arg11[%c22_214, %c0_215, %c0_216] {strides = array<i32: 2, 2, 1>} : memref<40x20x4xf32, #tpu.memory_space<vmem>>, vector<8x8x4xf32>
    %c8_217 = arith.constant 8 : index
    %c0_218 = arith.constant 0 : index
    %c40_219 = arith.constant 40 : index
    %87 = vector.load %arg12[%c8_217, %c0_218, %c40_219] : memref<16x8x128xf32, #tpu.memory_space<vmem>>, vector<8x8x4xf32>
    tpu.vector_store %arg12[%c8_217, %c0_218, %c40_219], %86 {strides = array<i32>} : memref<16x8x128xf32, #tpu.memory_space<vmem>>, vector<8x8x4xf32>,
    %c22_220 = arith.constant 22 : index
    %c1_221 = arith.constant 1 : index
    %c0_222 = arith.constant 0 : index
    %88 = tpu.strided_load %arg11[%c22_220, %c1_221, %c0_222] {strides = array<i32: 2, 2, 1>} : memref<40x20x4xf32, #tpu.memory_space<vmem>>, vector<8x8x4xf32>
    %c8_223 = arith.constant 8 : index
    %c0_224 = arith.constant 0 : index
    %c44_225 = arith.constant 44 : index
    %89 = vector.load %arg12[%c8_223, %c0_224, %c44_225] : memref<16x8x128xf32, #tpu.memory_space<vmem>>, vector<8x8x4xf32>
    tpu.vector_store %arg12[%c8_223, %c0_224, %c44_225], %88 {strides = array<i32>} : memref<16x8x128xf32, #tpu.memory_space<vmem>>, vector<8x8x4xf32>,
    %c22_226 = arith.constant 22 : index
    %c2_227 = arith.constant 2 : index
    %c0_228 = arith.constant 0 : index
    %90 = tpu.strided_load %arg11[%c22_226, %c2_227, %c0_228] {strides = array<i32: 2, 2, 1>} : memref<40x20x4xf32, #tpu.memory_space<vmem>>, vector<8x8x4xf32>
    %c8_229 = arith.constant 8 : index
    %c0_230 = arith.constant 0 : index
    %c48_231 = arith.constant 48 : index
    %91 = vector.load %arg12[%c8_229, %c0_230, %c48_231] : memref<16x8x128xf32, #tpu.memory_space<vmem>>, vector<8x8x4xf32>
    tpu.vector_store %arg12[%c8_229, %c0_230, %c48_231], %90 {strides = array<i32>} : memref<16x8x128xf32, #tpu.memory_space<vmem>>, vector<8x8x4xf32>,
    %c22_232 = arith.constant 22 : index
    %c3_233 = arith.constant 3 : index
    %c0_234 = arith.constant 0 : index
    %92 = tpu.strided_load %arg11[%c22_232, %c3_233, %c0_234] {strides = array<i32: 2, 2, 1>} : memref<40x20x4xf32, #tpu.memory_space<vmem>>, vector<8x8x4xf32>
    %c8_235 = arith.constant 8 : index
    %c0_236 = arith.constant 0 : index
    %c52_237 = arith.constant 52 : index
    %93 = vector.load %arg12[%c8_235, %c0_236, %c52_237] : memref<16x8x128xf32, #tpu.memory_space<vmem>>, vector<8x8x4xf32>
    tpu.vector_store %arg12[%c8_235, %c0_236, %c52_237], %92 {strides = array<i32>} : memref<16x8x128xf32, #tpu.memory_space<vmem>>, vector<8x8x4xf32>,
    %c22_238 = arith.constant 22 : index
    %c4_239 = arith.constant 4 : index
    %c0_240 = arith.constant 0 : index
    %94 = tpu.strided_load %arg11[%c22_238, %c4_239, %c0_240] {strides = array<i32: 2, 2, 1>} : memref<40x20x4xf32, #tpu.memory_space<vmem>>, vector<8x8x4xf32>
    %c8_241 = arith.constant 8 : index
    %c0_242 = arith.constant 0 : index
    %c56_243 = arith.constant 56 : index
    %95 = vector.load %arg12[%c8_241, %c0_242, %c56_243] : memref<16x8x128xf32, #tpu.memory_space<vmem>>, vector<8x8x4xf32>
    tpu.vector_store %arg12[%c8_241, %c0_242, %c56_243], %94 {strides = array<i32>} : memref<16x8x128xf32, #tpu.memory_space<vmem>>, vector<8x8x4xf32>,
    %c23 = arith.constant 23 : index
    %c0_244 = arith.constant 0 : index
    %c0_245 = arith.constant 0 : index
    %96 = tpu.strided_load %arg11[%c23, %c0_244, %c0_245] {strides = array<i32: 2, 2, 1>} : memref<40x20x4xf32, #tpu.memory_space<vmem>>, vector<8x8x4xf32>
    %c8_246 = arith.constant 8 : index
    %c0_247 = arith.constant 0 : index
    %c60_248 = arith.constant 60 : index
    %97 = vector.load %arg12[%c8_246, %c0_247, %c60_248] : memref<16x8x128xf32, #tpu.memory_space<vmem>>, vector<8x8x4xf32>
    tpu.vector_store %arg12[%c8_246, %c0_247, %c60_248], %96 {strides = array<i32>} : memref<16x8x128xf32, #tpu.memory_space<vmem>>, vector<8x8x4xf32>,
    %c23_249 = arith.constant 23 : index
    %c1_250 = arith.constant 1 : index
    %c0_251 = arith.constant 0 : index
    %98 = tpu.strided_load %arg11[%c23_249, %c1_250, %c0_251] {strides = array<i32: 2, 2, 1>} : memref<40x20x4xf32, #tpu.memory_space<vmem>>, vector<8x8x4xf32>
    %c8_252 = arith.constant 8 : index
    %c0_253 = arith.constant 0 : index
    %c64_254 = arith.constant 64 : index
    %99 = vector.load %arg12[%c8_252, %c0_253, %c64_254] : memref<16x8x128xf32, #tpu.memory_space<vmem>>, vector<8x8x4xf32>
    tpu.vector_store %arg12[%c8_252, %c0_253, %c64_254], %98 {strides = array<i32>} : memref<16x8x128xf32, #tpu.memory_space<vmem>>, vector<8x8x4xf32>,
    %c23_255 = arith.constant 23 : index
    %c2_256 = arith.constant 2 : index
    %c0_257 = arith.constant 0 : index
    %100 = tpu.strided_load %arg11[%c23_255, %c2_256, %c0_257] {strides = array<i32: 2, 2, 1>} : memref<40x20x4xf32, #tpu.memory_space<vmem>>, vector<8x8x4xf32>
    %c8_258 = arith.constant 8 : index
    %c0_259 = arith.constant 0 : index
    %c68_260 = arith.constant 68 : index
    %101 = vector.load %arg12[%c8_258, %c0_259, %c68_260] : memref<16x8x128xf32, #tpu.memory_space<vmem>>, vector<8x8x4xf32>
    tpu.vector_store %arg12[%c8_258, %c0_259, %c68_260], %100 {strides = array<i32>} : memref<16x8x128xf32, #tpu.memory_space<vmem>>, vector<8x8x4xf32>,
    %c23_261 = arith.constant 23 : index
    %c3_262 = arith.constant 3 : index
    %c0_263 = arith.constant 0 : index
    %102 = tpu.strided_load %arg11[%c23_261, %c3_262, %c0_263] {strides = array<i32: 2, 2, 1>} : memref<40x20x4xf32, #tpu.memory_space<vmem>>, vector<8x8x4xf32>
    %c8_264 = arith.constant 8 : index
    %c0_265 = arith.constant 0 : index
    %c72_266 = arith.constant 72 : index
    %103 = vector.load %arg12[%c8_264, %c0_265, %c72_266] : memref<16x8x128xf32, #tpu.memory_space<vmem>>, vector<8x8x4xf32>
    tpu.vector_store %arg12[%c8_264, %c0_265, %c72_266], %102 {strides = array<i32>} : memref<16x8x128xf32, #tpu.memory_space<vmem>>, vector<8x8x4xf32>,
    %c23_267 = arith.constant 23 : index
    %c4_268 = arith.constant 4 : index
    %c0_269 = arith.constant 0 : index
    %104 = tpu.strided_load %arg11[%c23_267, %c4_268, %c0_269] {strides = array<i32: 2, 2, 1>} : memref<40x20x4xf32, #tpu.memory_space<vmem>>, vector<8x8x4xf32>
    %c8_270 = arith.constant 8 : index
    %c0_271 = arith.constant 0 : index
    %c76_272 = arith.constant 76 : index
    %105 = vector.load %arg12[%c8_270, %c0_271, %c76_272] : memref<16x8x128xf32, #tpu.memory_space<vmem>>, vector<8x8x4xf32>
    tpu.vector_store %arg12[%c8_270, %c0_271, %c76_272], %104 {strides = array<i32>} : memref<16x8x128xf32, #tpu.memory_space<vmem>>, vector<8x8x4xf32>,
    %c24_273 = arith.constant 24 : index
    %c0_274 = arith.constant 0 : index
    %c0_275 = arith.constant 0 : index
    %106 = tpu.strided_load %arg11[%c24_273, %c0_274, %c0_275] {strides = array<i32: 2, 2, 1>} : memref<40x20x4xf32, #tpu.memory_space<vmem>>, vector<8x8x4xf32>
    %c8_276 = arith.constant 8 : index
    %c0_277 = arith.constant 0 : index
    %c80_278 = arith.constant 80 : index
    %107 = vector.load %arg12[%c8_276, %c0_277, %c80_278] : memref<16x8x128xf32, #tpu.memory_space<vmem>>, vector<8x8x4xf32>
    tpu.vector_store %arg12[%c8_276, %c0_277, %c80_278], %106 {strides = array<i32>} : memref<16x8x128xf32, #tpu.memory_space<vmem>>, vector<8x8x4xf32>,
    %c24_279 = arith.constant 24 : index
    %c1_280 = arith.constant 1 : index
    %c0_281 = arith.constant 0 : index
    %108 = tpu.strided_load %arg11[%c24_279, %c1_280, %c0_281] {strides = array<i32: 2, 2, 1>} : memref<40x20x4xf32, #tpu.memory_space<vmem>>, vector<8x8x4xf32>
    %c8_282 = arith.constant 8 : index
    %c0_283 = arith.constant 0 : index
    %c84_284 = arith.constant 84 : index
    %109 = vector.load %arg12[%c8_282, %c0_283, %c84_284] : memref<16x8x128xf32, #tpu.memory_space<vmem>>, vector<8x8x4xf32>
    tpu.vector_store %arg12[%c8_282, %c0_283, %c84_284], %108 {strides = array<i32>} : memref<16x8x128xf32, #tpu.memory_space<vmem>>, vector<8x8x4xf32>,
    %c24_285 = arith.constant 24 : index
    %c2_286 = arith.constant 2 : index
    %c0_287 = arith.constant 0 : index
    %110 = tpu.strided_load %arg11[%c24_285, %c2_286, %c0_287] {strides = array<i32: 2, 2, 1>} : memref<40x20x4xf32, #tpu.memory_space<vmem>>, vector<8x8x4xf32>
    %c8_288 = arith.constant 8 : index
    %c0_289 = arith.constant 0 : index
    %c88_290 = arith.constant 88 : index
    %111 = vector.load %arg12[%c8_288, %c0_289, %c88_290] : memref<16x8x128xf32, #tpu.memory_space<vmem>>, vector<8x8x4xf32>
    tpu.vector_store %arg12[%c8_288, %c0_289, %c88_290], %110 {strides = array<i32>} : memref<16x8x128xf32, #tpu.memory_space<vmem>>, vector<8x8x4xf32>,
    %c24_291 = arith.constant 24 : index
    %c3_292 = arith.constant 3 : index
    %c0_293 = arith.constant 0 : index
    %112 = tpu.strided_load %arg11[%c24_291, %c3_292, %c0_293] {strides = array<i32: 2, 2, 1>} : memref<40x20x4xf32, #tpu.memory_space<vmem>>, vector<8x8x4xf32>
    %c8_294 = arith.constant 8 : index
    %c0_295 = arith.constant 0 : index
    %c92_296 = arith.constant 92 : index
    %113 = vector.load %arg12[%c8_294, %c0_295, %c92_296] : memref<16x8x128xf32, #tpu.memory_space<vmem>>, vector<8x8x4xf32>
    tpu.vector_store %arg12[%c8_294, %c0_295, %c92_296], %112 {strides = array<i32>} : memref<16x8x128xf32, #tpu.memory_space<vmem>>, vector<8x8x4xf32>,
    %c24_297 = arith.constant 24 : index
    %c4_298 = arith.constant 4 : index
    %c0_299 = arith.constant 0 : index
    %114 = tpu.strided_load %arg11[%c24_297, %c4_298, %c0_299] {strides = array<i32: 2, 2, 1>} : memref<40x20x4xf32, #tpu.memory_space<vmem>>, vector<8x8x4xf32>
    %c8_300 = arith.constant 8 : index
    %c0_301 = arith.constant 0 : index
    %c96_302 = arith.constant 96 : index
    %115 = vector.load %arg12[%c8_300, %c0_301, %c96_302] : memref<16x8x128xf32, #tpu.memory_space<vmem>>, vector<8x8x4xf32>
    tpu.vector_store %arg12[%c8_300, %c0_301, %c96_302], %114 {strides = array<i32>} : memref<16x8x128xf32, #tpu.memory_space<vmem>>, vector<8x8x4xf32>,
    %c0_303 = arith.constant 0 : index
    %c0_304 = arith.constant 0 : index
    %c0_305 = arith.constant 0 : index
    %116 = vector.load %arg12[%c0_303, %c0_304, %c0_305] : memref<16x8x128xf32, #tpu.memory_space<vmem>>, vector<16x8x128xf32>
    %117 = vector.shape_cast %116 : vector<16x8x128xf32> to vector<128x128xf32>
    %c0_306 = arith.constant 0 : index
    %c0_307 = arith.constant 0 : index
    %118 = vector.load %arg2[%c0_306, %c0_307] : memref<128x128xf32, #tpu.memory_space<vmem>>, vector<128x128xf32>
    %cst_308 = arith.constant dense<0.000000e+00> : vector<128x128xf32>
    %119 = tpu.matmul %117, %118, %cst_308 {dimension_numbers = #tpu.dot_dimension_numbers<[1], [0], [0], [1], [0, 0, 1, 1], [], []>} : vector<128x128xf32>, vector<128x128xf32>, vector<128x128xf32> -> vector<128x128xf32>
    %c0_309 = arith.constant 0 : index
    %c0_310 = arith.constant 0 : index
    %120 = vector.load %arg3[%c0_309, %c0_310] : memref<1x128xf32, #tpu.memory_space<vmem>>, vector<1x128xf32>
    %121 = vector.broadcast %120 : vector<1x128xf32> to vector<128x128xf32>
    %122 = arith.addf %119, %121 : vector<128x128xf32>
    %cst_311 = arith.constant 0.000000e+00 : f32
    %123 = vector.broadcast %cst_311 : f32 to vector<128x128xf32>
    %124 = arith.cmpf oge, %122, %123 : vector<128x128xf32>
    %cst_312 = arith.constant 1.000000e-01 : f32
    %125 = vector.broadcast %cst_312 : f32 to vector<128x128xf32>
    %126 = arith.mulf %125, %122 : vector<128x128xf32>
    %127 = arith.select %124, %122, %126 : vector<128x128xi1>, vector<128x128xf32>
    %c0_313 = arith.constant 0 : index
    %c0_314 = arith.constant 0 : index
    %128 = vector.load %arg8[%c0_313, %c0_314] : memref<128x128xf32, #tpu.memory_space<vmem>>, vector<128x128xf32>
    tpu.vector_store %arg8[%c0_313, %c0_314], %127 {strides = array<i32>} : memref<128x128xf32, #tpu.memory_space<vmem>>, vector<128x128xf32>,
    %129 = vector.extract_strided_slice %127 {offsets = [0, 0], sizes = [64, 8], strides = [1, 1]} : vector<128x128xf32> to vector<64x8xf32>
    %130 = vector.shape_cast %129 : vector<64x8xf32> to vector<8x8x8xf32>
    %131 = vector.extract_strided_slice %127 {offsets = [64, 0], sizes = [64, 8], strides = [1, 1]} : vector<128x128xf32> to vector<64x8xf32>
    %132 = vector.shape_cast %131 : vector<64x8xf32> to vector<8x8x8xf32>
    %cst_315 = arith.constant 0.000000e+00 : f32
    %133 = vector.broadcast %cst_315 : f32 to vector<20x1x8xf32>
    %c0_316 = arith.constant 0 : index
    %c0_317 = arith.constant 0 : index
    %c0_318 = arith.constant 0 : index
    %134 = vector.load %arg13[%c0_316, %c0_317, %c0_318] : memref<20x10x8xf32, #tpu.memory_space<vmem>>, vector<20x1x8xf32>
    tpu.vector_store %arg13[%c0_316, %c0_317, %c0_318], %133 {strides = array<i32>} : memref<20x10x8xf32, #tpu.memory_space<vmem>>, vector<20x1x8xf32>,
    %c0_319 = arith.constant 0 : index
    %c9 = arith.constant 9 : index
    %c0_320 = arith.constant 0 : index
    %135 = vector.load %arg13[%c0_319, %c9, %c0_320] : memref<20x10x8xf32, #tpu.memory_space<vmem>>, vector<20x1x8xf32>
    tpu.vector_store %arg13[%c0_319, %c9, %c0_320], %133 {strides = array<i32>} : memref<20x10x8xf32, #tpu.memory_space<vmem>>, vector<20x1x8xf32>,
    %cst_321 = arith.constant 0.000000e+00 : f32
    %136 = vector.broadcast %cst_321 : f32 to vector<1x10x8xf32>
    %c0_322 = arith.constant 0 : index
    %c0_323 = arith.constant 0 : index
    %c0_324 = arith.constant 0 : index
    %137 = vector.load %arg13[%c0_322, %c0_323, %c0_324] : memref<20x10x8xf32, #tpu.memory_space<vmem>>, vector<1x10x8xf32>
    tpu.vector_store %arg13[%c0_322, %c0_323, %c0_324], %136 {strides = array<i32>} : memref<20x10x8xf32, #tpu.memory_space<vmem>>, vector<1x10x8xf32>,
    %c9_325 = arith.constant 9 : index
    %c0_326 = arith.constant 0 : index
    %c0_327 = arith.constant 0 : index
    %138 = vector.load %arg13[%c9_325, %c0_326, %c0_327] : memref<20x10x8xf32, #tpu.memory_space<vmem>>, vector<1x10x8xf32>
    tpu.vector_store %arg13[%c9_325, %c0_326, %c0_327], %136 {strides = array<i32>} : memref<20x10x8xf32, #tpu.memory_space<vmem>>, vector<1x10x8xf32>,
    %c10 = arith.constant 10 : index
    %c0_328 = arith.constant 0 : index
    %c0_329 = arith.constant 0 : index
    %139 = vector.load %arg13[%c10, %c0_328, %c0_329] : memref<20x10x8xf32, #tpu.memory_space<vmem>>, vector<1x10x8xf32>
    tpu.vector_store %arg13[%c10, %c0_328, %c0_329], %136 {strides = array<i32>} : memref<20x10x8xf32, #tpu.memory_space<vmem>>, vector<1x10x8xf32>,
    %c19 = arith.constant 19 : index
    %c0_330 = arith.constant 0 : index
    %c0_331 = arith.constant 0 : index
    %140 = vector.load %arg13[%c19, %c0_330, %c0_331] : memref<20x10x8xf32, #tpu.memory_space<vmem>>, vector<1x10x8xf32>
    tpu.vector_store %arg13[%c19, %c0_330, %c0_331], %136 {strides = array<i32>} : memref<20x10x8xf32, #tpu.memory_space<vmem>>, vector<1x10x8xf32>,
    %c1_332 = arith.constant 1 : index
    %c1_333 = arith.constant 1 : index
    %c0_334 = arith.constant 0 : index
    %141 = vector.load %arg13[%c1_332, %c1_333, %c0_334] : memref<20x10x8xf32, #tpu.memory_space<vmem>>, vector<8x8x8xf32>
    tpu.vector_store %arg13[%c1_332, %c1_333, %c0_334], %130 {strides = array<i32>} : memref<20x10x8xf32, #tpu.memory_space<vmem>>, vector<8x8x8xf32>,
    %c11 = arith.constant 11 : index
    %c1_335 = arith.constant 1 : index
    %c0_336 = arith.constant 0 : index
    %142 = vector.load %arg13[%c11, %c1_335, %c0_336] : memref<20x10x8xf32, #tpu.memory_space<vmem>>, vector<8x8x8xf32>
    tpu.vector_store %arg13[%c11, %c1_335, %c0_336], %132 {strides = array<i32>} : memref<20x10x8xf32, #tpu.memory_space<vmem>>, vector<8x8x8xf32>,
    %cst_337 = arith.constant 0.000000e+00 : f32
    %143 = vector.broadcast %cst_337 : f32 to vector<8x4x56xf32>
    %c0_338 = arith.constant 0 : index
    %c0_339 = arith.constant 0 : index
    %c72_340 = arith.constant 72 : index
    %144 = vector.load %arg14[%c0_338, %c0_339, %c72_340] : memref<8x4x128xf32, #tpu.memory_space<vmem>>, vector<8x4x56xf32>
    tpu.vector_store %arg14[%c0_338, %c0_339, %c72_340], %143 {strides = array<i32>} : memref<8x4x128xf32, #tpu.memory_space<vmem>>, vector<8x4x56xf32>,
    %c0_341 = arith.constant 0 : index
    %c0_342 = arith.constant 0 : index
    %c0_343 = arith.constant 0 : index
    %145 = tpu.strided_load %arg13[%c0_341, %c0_342, %c0_343] {strides = array<i32: 2, 2, 1>} : memref<20x10x8xf32, #tpu.memory_space<vmem>>, vector<4x4x8xf32>
    %c0_344 = arith.constant 0 : index
    %c0_345 = arith.constant 0 : index
    %c0_346 = arith.constant 0 : index
    %146 = vector.load %arg14[%c0_344, %c0_345, %c0_346] : memref<8x4x128xf32, #tpu.memory_space<vmem>>, vector<4x4x8xf32>
    tpu.vector_store %arg14[%c0_344, %c0_345, %c0_346], %145 {strides = array<i32>} : memref<8x4x128xf32, #tpu.memory_space<vmem>>, vector<4x4x8xf32>,
    %c0_347 = arith.constant 0 : index
    %c1_348 = arith.constant 1 : index
    %c0_349 = arith.constant 0 : index
    %147 = tpu.strided_load %arg13[%c0_347, %c1_348, %c0_349] {strides = array<i32: 2, 2, 1>} : memref<20x10x8xf32, #tpu.memory_space<vmem>>, vector<4x4x8xf32>
    %c0_350 = arith.constant 0 : index
    %c0_351 = arith.constant 0 : index
    %c8_352 = arith.constant 8 : index
    %148 = vector.load %arg14[%c0_350, %c0_351, %c8_352] : memref<8x4x128xf32, #tpu.memory_space<vmem>>, vector<4x4x8xf32>
    tpu.vector_store %arg14[%c0_350, %c0_351, %c8_352], %147 {strides = array<i32>} : memref<8x4x128xf32, #tpu.memory_space<vmem>>, vector<4x4x8xf32>,
    %c0_353 = arith.constant 0 : index
    %c2_354 = arith.constant 2 : index
    %c0_355 = arith.constant 0 : index
    %149 = tpu.strided_load %arg13[%c0_353, %c2_354, %c0_355] {strides = array<i32: 2, 2, 1>} : memref<20x10x8xf32, #tpu.memory_space<vmem>>, vector<4x4x8xf32>
    %c0_356 = arith.constant 0 : index
    %c0_357 = arith.constant 0 : index
    %c16_358 = arith.constant 16 : index
    %150 = vector.load %arg14[%c0_356, %c0_357, %c16_358] : memref<8x4x128xf32, #tpu.memory_space<vmem>>, vector<4x4x8xf32>
    tpu.vector_store %arg14[%c0_356, %c0_357, %c16_358], %149 {strides = array<i32>} : memref<8x4x128xf32, #tpu.memory_space<vmem>>, vector<4x4x8xf32>,
    %c1_359 = arith.constant 1 : index
    %c0_360 = arith.constant 0 : index
    %c0_361 = arith.constant 0 : index
    %151 = tpu.strided_load %arg13[%c1_359, %c0_360, %c0_361] {strides = array<i32: 2, 2, 1>} : memref<20x10x8xf32, #tpu.memory_space<vmem>>, vector<4x4x8xf32>
    %c0_362 = arith.constant 0 : index
    %c0_363 = arith.constant 0 : index
    %c24_364 = arith.constant 24 : index
    %152 = vector.load %arg14[%c0_362, %c0_363, %c24_364] : memref<8x4x128xf32, #tpu.memory_space<vmem>>, vector<4x4x8xf32>
    tpu.vector_store %arg14[%c0_362, %c0_363, %c24_364], %151 {strides = array<i32>} : memref<8x4x128xf32, #tpu.memory_space<vmem>>, vector<4x4x8xf32>,
    %c1_365 = arith.constant 1 : index
    %c1_366 = arith.constant 1 : index
    %c0_367 = arith.constant 0 : index
    %153 = tpu.strided_load %arg13[%c1_365, %c1_366, %c0_367] {strides = array<i32: 2, 2, 1>} : memref<20x10x8xf32, #tpu.memory_space<vmem>>, vector<4x4x8xf32>
    %c0_368 = arith.constant 0 : index
    %c0_369 = arith.constant 0 : index
    %c32_370 = arith.constant 32 : index
    %154 = vector.load %arg14[%c0_368, %c0_369, %c32_370] : memref<8x4x128xf32, #tpu.memory_space<vmem>>, vector<4x4x8xf32>
    tpu.vector_store %arg14[%c0_368, %c0_369, %c32_370], %153 {strides = array<i32>} : memref<8x4x128xf32, #tpu.memory_space<vmem>>, vector<4x4x8xf32>,
    %c1_371 = arith.constant 1 : index
    %c2_372 = arith.constant 2 : index
    %c0_373 = arith.constant 0 : index
    %155 = tpu.strided_load %arg13[%c1_371, %c2_372, %c0_373] {strides = array<i32: 2, 2, 1>} : memref<20x10x8xf32, #tpu.memory_space<vmem>>, vector<4x4x8xf32>
    %c0_374 = arith.constant 0 : index
    %c0_375 = arith.constant 0 : index
    %c40_376 = arith.constant 40 : index
    %156 = vector.load %arg14[%c0_374, %c0_375, %c40_376] : memref<8x4x128xf32, #tpu.memory_space<vmem>>, vector<4x4x8xf32>
    tpu.vector_store %arg14[%c0_374, %c0_375, %c40_376], %155 {strides = array<i32>} : memref<8x4x128xf32, #tpu.memory_space<vmem>>, vector<4x4x8xf32>,
    %c2_377 = arith.constant 2 : index
    %c0_378 = arith.constant 0 : index
    %c0_379 = arith.constant 0 : index
    %157 = tpu.strided_load %arg13[%c2_377, %c0_378, %c0_379] {strides = array<i32: 2, 2, 1>} : memref<20x10x8xf32, #tpu.memory_space<vmem>>, vector<4x4x8xf32>
    %c0_380 = arith.constant 0 : index
    %c0_381 = arith.constant 0 : index
    %c48_382 = arith.constant 48 : index
    %158 = vector.load %arg14[%c0_380, %c0_381, %c48_382] : memref<8x4x128xf32, #tpu.memory_space<vmem>>, vector<4x4x8xf32>
    tpu.vector_store %arg14[%c0_380, %c0_381, %c48_382], %157 {strides = array<i32>} : memref<8x4x128xf32, #tpu.memory_space<vmem>>, vector<4x4x8xf32>,
    %c2_383 = arith.constant 2 : index
    %c1_384 = arith.constant 1 : index
    %c0_385 = arith.constant 0 : index
    %159 = tpu.strided_load %arg13[%c2_383, %c1_384, %c0_385] {strides = array<i32: 2, 2, 1>} : memref<20x10x8xf32, #tpu.memory_space<vmem>>, vector<4x4x8xf32>
    %c0_386 = arith.constant 0 : index
    %c0_387 = arith.constant 0 : index
    %c56_388 = arith.constant 56 : index
    %160 = vector.load %arg14[%c0_386, %c0_387, %c56_388] : memref<8x4x128xf32, #tpu.memory_space<vmem>>, vector<4x4x8xf32>
    tpu.vector_store %arg14[%c0_386, %c0_387, %c56_388], %159 {strides = array<i32>} : memref<8x4x128xf32, #tpu.memory_space<vmem>>, vector<4x4x8xf32>,
    %c2_389 = arith.constant 2 : index
    %c2_390 = arith.constant 2 : index
    %c0_391 = arith.constant 0 : index
    %161 = tpu.strided_load %arg13[%c2_389, %c2_390, %c0_391] {strides = array<i32: 2, 2, 1>} : memref<20x10x8xf32, #tpu.memory_space<vmem>>, vector<4x4x8xf32>
    %c0_392 = arith.constant 0 : index
    %c0_393 = arith.constant 0 : index
    %c64_394 = arith.constant 64 : index
    %162 = vector.load %arg14[%c0_392, %c0_393, %c64_394] : memref<8x4x128xf32, #tpu.memory_space<vmem>>, vector<4x4x8xf32>
    tpu.vector_store %arg14[%c0_392, %c0_393, %c64_394], %161 {strides = array<i32>} : memref<8x4x128xf32, #tpu.memory_space<vmem>>, vector<4x4x8xf32>,
    %c10_395 = arith.constant 10 : index
    %c0_396 = arith.constant 0 : index
    %c0_397 = arith.constant 0 : index
    %163 = tpu.strided_load %arg13[%c10_395, %c0_396, %c0_397] {strides = array<i32: 2, 2, 1>} : memref<20x10x8xf32, #tpu.memory_space<vmem>>, vector<4x4x8xf32>
    %c4_398 = arith.constant 4 : index
    %c0_399 = arith.constant 0 : index
    %c0_400 = arith.constant 0 : index
    %164 = vector.load %arg14[%c4_398, %c0_399, %c0_400] : memref<8x4x128xf32, #tpu.memory_space<vmem>>, vector<4x4x8xf32>
    tpu.vector_store %arg14[%c4_398, %c0_399, %c0_400], %163 {strides = array<i32>} : memref<8x4x128xf32, #tpu.memory_space<vmem>>, vector<4x4x8xf32>,
    %c10_401 = arith.constant 10 : index
    %c1_402 = arith.constant 1 : index
    %c0_403 = arith.constant 0 : index
    %165 = tpu.strided_load %arg13[%c10_401, %c1_402, %c0_403] {strides = array<i32: 2, 2, 1>} : memref<20x10x8xf32, #tpu.memory_space<vmem>>, vector<4x4x8xf32>
    %c4_404 = arith.constant 4 : index
    %c0_405 = arith.constant 0 : index
    %c8_406 = arith.constant 8 : index
    %166 = vector.load %arg14[%c4_404, %c0_405, %c8_406] : memref<8x4x128xf32, #tpu.memory_space<vmem>>, vector<4x4x8xf32>
    tpu.vector_store %arg14[%c4_404, %c0_405, %c8_406], %165 {strides = array<i32>} : memref<8x4x128xf32, #tpu.memory_space<vmem>>, vector<4x4x8xf32>,
    %c10_407 = arith.constant 10 : index
    %c2_408 = arith.constant 2 : index
    %c0_409 = arith.constant 0 : index
    %167 = tpu.strided_load %arg13[%c10_407, %c2_408, %c0_409] {strides = array<i32: 2, 2, 1>} : memref<20x10x8xf32, #tpu.memory_space<vmem>>, vector<4x4x8xf32>
    %c4_410 = arith.constant 4 : index
    %c0_411 = arith.constant 0 : index
    %c16_412 = arith.constant 16 : index
    %168 = vector.load %arg14[%c4_410, %c0_411, %c16_412] : memref<8x4x128xf32, #tpu.memory_space<vmem>>, vector<4x4x8xf32>
    tpu.vector_store %arg14[%c4_410, %c0_411, %c16_412], %167 {strides = array<i32>} : memref<8x4x128xf32, #tpu.memory_space<vmem>>, vector<4x4x8xf32>,
    %c11_413 = arith.constant 11 : index
    %c0_414 = arith.constant 0 : index
    %c0_415 = arith.constant 0 : index
    %169 = tpu.strided_load %arg13[%c11_413, %c0_414, %c0_415] {strides = array<i32: 2, 2, 1>} : memref<20x10x8xf32, #tpu.memory_space<vmem>>, vector<4x4x8xf32>
    %c4_416 = arith.constant 4 : index
    %c0_417 = arith.constant 0 : index
    %c24_418 = arith.constant 24 : index
    %170 = vector.load %arg14[%c4_416, %c0_417, %c24_418] : memref<8x4x128xf32, #tpu.memory_space<vmem>>, vector<4x4x8xf32>
    tpu.vector_store %arg14[%c4_416, %c0_417, %c24_418], %169 {strides = array<i32>} : memref<8x4x128xf32, #tpu.memory_space<vmem>>, vector<4x4x8xf32>,
    %c11_419 = arith.constant 11 : index
    %c1_420 = arith.constant 1 : index
    %c0_421 = arith.constant 0 : index
    %171 = tpu.strided_load %arg13[%c11_419, %c1_420, %c0_421] {strides = array<i32: 2, 2, 1>} : memref<20x10x8xf32, #tpu.memory_space<vmem>>, vector<4x4x8xf32>
    %c4_422 = arith.constant 4 : index
    %c0_423 = arith.constant 0 : index
    %c32_424 = arith.constant 32 : index
    %172 = vector.load %arg14[%c4_422, %c0_423, %c32_424] : memref<8x4x128xf32, #tpu.memory_space<vmem>>, vector<4x4x8xf32>
    tpu.vector_store %arg14[%c4_422, %c0_423, %c32_424], %171 {strides = array<i32>} : memref<8x4x128xf32, #tpu.memory_space<vmem>>, vector<4x4x8xf32>,
    %c11_425 = arith.constant 11 : index
    %c2_426 = arith.constant 2 : index
    %c0_427 = arith.constant 0 : index
    %173 = tpu.strided_load %arg13[%c11_425, %c2_426, %c0_427] {strides = array<i32: 2, 2, 1>} : memref<20x10x8xf32, #tpu.memory_space<vmem>>, vector<4x4x8xf32>
    %c4_428 = arith.constant 4 : index
    %c0_429 = arith.constant 0 : index
    %c40_430 = arith.constant 40 : index
    %174 = vector.load %arg14[%c4_428, %c0_429, %c40_430] : memref<8x4x128xf32, #tpu.memory_space<vmem>>, vector<4x4x8xf32>
    tpu.vector_store %arg14[%c4_428, %c0_429, %c40_430], %173 {strides = array<i32>} : memref<8x4x128xf32, #tpu.memory_space<vmem>>, vector<4x4x8xf32>,
    %c12_431 = arith.constant 12 : index
    %c0_432 = arith.constant 0 : index
    %c0_433 = arith.constant 0 : index
    %175 = tpu.strided_load %arg13[%c12_431, %c0_432, %c0_433] {strides = array<i32: 2, 2, 1>} : memref<20x10x8xf32, #tpu.memory_space<vmem>>, vector<4x4x8xf32>
    %c4_434 = arith.constant 4 : index
    %c0_435 = arith.constant 0 : index
    %c48_436 = arith.constant 48 : index
    %176 = vector.load %arg14[%c4_434, %c0_435, %c48_436] : memref<8x4x128xf32, #tpu.memory_space<vmem>>, vector<4x4x8xf32>
    tpu.vector_store %arg14[%c4_434, %c0_435, %c48_436], %175 {strides = array<i32>} : memref<8x4x128xf32, #tpu.memory_space<vmem>>, vector<4x4x8xf32>,
    %c12_437 = arith.constant 12 : index
    %c1_438 = arith.constant 1 : index
    %c0_439 = arith.constant 0 : index
    %177 = tpu.strided_load %arg13[%c12_437, %c1_438, %c0_439] {strides = array<i32: 2, 2, 1>} : memref<20x10x8xf32, #tpu.memory_space<vmem>>, vector<4x4x8xf32>
    %c4_440 = arith.constant 4 : index
    %c0_441 = arith.constant 0 : index
    %c56_442 = arith.constant 56 : index
    %178 = vector.load %arg14[%c4_440, %c0_441, %c56_442] : memref<8x4x128xf32, #tpu.memory_space<vmem>>, vector<4x4x8xf32>
    tpu.vector_store %arg14[%c4_440, %c0_441, %c56_442], %177 {strides = array<i32>} : memref<8x4x128xf32, #tpu.memory_space<vmem>>, vector<4x4x8xf32>,
    %c12_443 = arith.constant 12 : index
    %c2_444 = arith.constant 2 : index
    %c0_445 = arith.constant 0 : index
    %179 = tpu.strided_load %arg13[%c12_443, %c2_444, %c0_445] {strides = array<i32: 2, 2, 1>} : memref<20x10x8xf32, #tpu.memory_space<vmem>>, vector<4x4x8xf32>
    %c4_446 = arith.constant 4 : index
    %c0_447 = arith.constant 0 : index
    %c64_448 = arith.constant 64 : index
    %180 = vector.load %arg14[%c4_446, %c0_447, %c64_448] : memref<8x4x128xf32, #tpu.memory_space<vmem>>, vector<4x4x8xf32>
    tpu.vector_store %arg14[%c4_446, %c0_447, %c64_448], %179 {strides = array<i32>} : memref<8x4x128xf32, #tpu.memory_space<vmem>>, vector<4x4x8xf32>,
    %c0_449 = arith.constant 0 : index
    %c0_450 = arith.constant 0 : index
    %c0_451 = arith.constant 0 : index
    %181 = vector.load %arg14[%c0_449, %c0_450, %c0_451] : memref<8x4x128xf32, #tpu.memory_space<vmem>>, vector<8x4x128xf32>
    %182 = vector.shape_cast %181 : vector<8x4x128xf32> to vector<32x128xf32>
    %c0_452 = arith.constant 0 : index
    %c0_453 = arith.constant 0 : index
    %183 = vector.load %arg4[%c0_452, %c0_453] : memref<128x128xf32, #tpu.memory_space<vmem>>, vector<128x128xf32>
    %cst_454 = arith.constant dense<0.000000e+00> : vector<32x128xf32>
    %184 = tpu.matmul %182, %183, %cst_454 {dimension_numbers = #tpu.dot_dimension_numbers<[1], [0], [0], [1], [0, 0, 1, 1], [], []>} : vector<32x128xf32>, vector<128x128xf32>, vector<32x128xf32> -> vector<32x128xf32>
    %c0_455 = arith.constant 0 : index
    %c0_456 = arith.constant 0 : index
    %185 = vector.load %arg5[%c0_455, %c0_456] : memref<1x128xf32, #tpu.memory_space<vmem>>, vector<1x128xf32>
    %186 = vector.broadcast %185 : vector<1x128xf32> to vector<32x128xf32>
    %187 = arith.addf %184, %186 : vector<32x128xf32>
    %cst_457 = arith.constant 0.000000e+00 : f32
    %188 = vector.broadcast %cst_457 : f32 to vector<32x128xf32>
    %189 = arith.cmpf oge, %187, %188 : vector<32x128xf32>
    %cst_458 = arith.constant 1.000000e-01 : f32
    %190 = vector.broadcast %cst_458 : f32 to vector<32x128xf32>
    %191 = arith.mulf %190, %187 : vector<32x128xf32>
    %192 = arith.select %189, %187, %191 : vector<32x128xi1>, vector<32x128xf32>
    %c0_459 = arith.constant 0 : index
    %c0_460 = arith.constant 0 : index
    %193 = vector.load %arg9[%c0_459, %c0_460] : memref<32x128xf32, #tpu.memory_space<vmem>>, vector<32x128xf32>
    tpu.vector_store %arg9[%c0_459, %c0_460], %192 {strides = array<i32>} : memref<32x128xf32, #tpu.memory_space<vmem>>, vector<32x128xf32>,
    %194 = vector.extract_strided_slice %192 {offsets = [0, 0], sizes = [16, 16], strides = [1, 1]} : vector<32x128xf32> to vector<16x16xf32>
    %195 = vector.shape_cast %194 : vector<16x16xf32> to vector<4x4x16xf32>
    %196 = vector.extract_strided_slice %192 {offsets = [16, 0], sizes = [16, 16], strides = [1, 1]} : vector<32x128xf32> to vector<16x16xf32>
    %197 = vector.shape_cast %196 : vector<16x16xf32> to vector<4x4x16xf32>
    %cst_461 = arith.constant 0.000000e+00 : f32
    %198 = vector.broadcast %cst_461 : f32 to vector<12x1x16xf32>
    %c0_462 = arith.constant 0 : index
    %c0_463 = arith.constant 0 : index
    %c0_464 = arith.constant 0 : index
    %199 = vector.load %arg15[%c0_462, %c0_463, %c0_464] : memref<12x6x16xf32, #tpu.memory_space<vmem>>, vector<12x1x16xf32>
    tpu.vector_store %arg15[%c0_462, %c0_463, %c0_464], %198 {strides = array<i32>} : memref<12x6x16xf32, #tpu.memory_space<vmem>>, vector<12x1x16xf32>,
    %c0_465 = arith.constant 0 : index
    %c5 = arith.constant 5 : index
    %c0_466 = arith.constant 0 : index
    %200 = vector.load %arg15[%c0_465, %c5, %c0_466] : memref<12x6x16xf32, #tpu.memory_space<vmem>>, vector<12x1x16xf32>
    tpu.vector_store %arg15[%c0_465, %c5, %c0_466], %198 {strides = array<i32>} : memref<12x6x16xf32, #tpu.memory_space<vmem>>, vector<12x1x16xf32>,
    %cst_467 = arith.constant 0.000000e+00 : f32
    %201 = vector.broadcast %cst_467 : f32 to vector<1x6x16xf32>
    %c0_468 = arith.constant 0 : index
    %c0_469 = arith.constant 0 : index
    %c0_470 = arith.constant 0 : index
    %202 = vector.load %arg15[%c0_468, %c0_469, %c0_470] : memref<12x6x16xf32, #tpu.memory_space<vmem>>, vector<1x6x16xf32>
    tpu.vector_store %arg15[%c0_468, %c0_469, %c0_470], %201 {strides = array<i32>} : memref<12x6x16xf32, #tpu.memory_space<vmem>>, vector<1x6x16xf32>,
    %c5_471 = arith.constant 5 : index
    %c0_472 = arith.constant 0 : index
    %c0_473 = arith.constant 0 : index
    %203 = vector.load %arg15[%c5_471, %c0_472, %c0_473] : memref<12x6x16xf32, #tpu.memory_space<vmem>>, vector<1x6x16xf32>
    tpu.vector_store %arg15[%c5_471, %c0_472, %c0_473], %201 {strides = array<i32>} : memref<12x6x16xf32, #tpu.memory_space<vmem>>, vector<1x6x16xf32>,
    %c6 = arith.constant 6 : index
    %c0_474 = arith.constant 0 : index
    %c0_475 = arith.constant 0 : index
    %204 = vector.load %arg15[%c6, %c0_474, %c0_475] : memref<12x6x16xf32, #tpu.memory_space<vmem>>, vector<1x6x16xf32>
    tpu.vector_store %arg15[%c6, %c0_474, %c0_475], %201 {strides = array<i32>} : memref<12x6x16xf32, #tpu.memory_space<vmem>>, vector<1x6x16xf32>,
    %c11_476 = arith.constant 11 : index
    %c0_477 = arith.constant 0 : index
    %c0_478 = arith.constant 0 : index
    %205 = vector.load %arg15[%c11_476, %c0_477, %c0_478] : memref<12x6x16xf32, #tpu.memory_space<vmem>>, vector<1x6x16xf32>
    tpu.vector_store %arg15[%c11_476, %c0_477, %c0_478], %201 {strides = array<i32>} : memref<12x6x16xf32, #tpu.memory_space<vmem>>, vector<1x6x16xf32>,
    %c1_479 = arith.constant 1 : index
    %c1_480 = arith.constant 1 : index
    %c0_481 = arith.constant 0 : index
    %206 = vector.load %arg15[%c1_479, %c1_480, %c0_481] : memref<12x6x16xf32, #tpu.memory_space<vmem>>, vector<4x4x16xf32>
    tpu.vector_store %arg15[%c1_479, %c1_480, %c0_481], %195 {strides = array<i32>} : memref<12x6x16xf32, #tpu.memory_space<vmem>>, vector<4x4x16xf32>,
    %c7 = arith.constant 7 : index
    %c1_482 = arith.constant 1 : index
    %c0_483 = arith.constant 0 : index
    %207 = vector.load %arg15[%c7, %c1_482, %c0_483] : memref<12x6x16xf32, #tpu.memory_space<vmem>>, vector<4x4x16xf32>
    tpu.vector_store %arg15[%c7, %c1_482, %c0_483], %197 {strides = array<i32>} : memref<12x6x16xf32, #tpu.memory_space<vmem>>, vector<4x4x16xf32>,
    %cst_484 = arith.constant 0.000000e+00 : f32
    %208 = vector.broadcast %cst_484 : f32 to vector<4x2x112xf32>
    %c0_485 = arith.constant 0 : index
    %c0_486 = arith.constant 0 : index
    %c144 = arith.constant 144 : index
    %209 = vector.load %arg16[%c0_485, %c0_486, %c144] : memref<4x2x256xf32, #tpu.memory_space<vmem>>, vector<4x2x112xf32>
    tpu.vector_store %arg16[%c0_485, %c0_486, %c144], %208 {strides = array<i32>} : memref<4x2x256xf32, #tpu.memory_space<vmem>>, vector<4x2x112xf32>,
    %c0_487 = arith.constant 0 : index
    %c0_488 = arith.constant 0 : index
    %c0_489 = arith.constant 0 : index
    %210 = tpu.strided_load %arg15[%c0_487, %c0_488, %c0_489] {strides = array<i32: 2, 2, 1>} : memref<12x6x16xf32, #tpu.memory_space<vmem>>, vector<2x2x16xf32>
    %c0_490 = arith.constant 0 : index
    %c0_491 = arith.constant 0 : index
    %c0_492 = arith.constant 0 : index
    %211 = vector.load %arg16[%c0_490, %c0_491, %c0_492] : memref<4x2x256xf32, #tpu.memory_space<vmem>>, vector<2x2x16xf32>
    tpu.vector_store %arg16[%c0_490, %c0_491, %c0_492], %210 {strides = array<i32>} : memref<4x2x256xf32, #tpu.memory_space<vmem>>, vector<2x2x16xf32>,
    %c0_493 = arith.constant 0 : index
    %c1_494 = arith.constant 1 : index
    %c0_495 = arith.constant 0 : index
    %212 = tpu.strided_load %arg15[%c0_493, %c1_494, %c0_495] {strides = array<i32: 2, 2, 1>} : memref<12x6x16xf32, #tpu.memory_space<vmem>>, vector<2x2x16xf32>
    %c0_496 = arith.constant 0 : index
    %c0_497 = arith.constant 0 : index
    %c16_498 = arith.constant 16 : index
    %213 = vector.load %arg16[%c0_496, %c0_497, %c16_498] : memref<4x2x256xf32, #tpu.memory_space<vmem>>, vector<2x2x16xf32>
    tpu.vector_store %arg16[%c0_496, %c0_497, %c16_498], %212 {strides = array<i32>} : memref<4x2x256xf32, #tpu.memory_space<vmem>>, vector<2x2x16xf32>,
    %c0_499 = arith.constant 0 : index
    %c2_500 = arith.constant 2 : index
    %c0_501 = arith.constant 0 : index
    %214 = tpu.strided_load %arg15[%c0_499, %c2_500, %c0_501] {strides = array<i32: 2, 2, 1>} : memref<12x6x16xf32, #tpu.memory_space<vmem>>, vector<2x2x16xf32>
    %c0_502 = arith.constant 0 : index
    %c0_503 = arith.constant 0 : index
    %c32_504 = arith.constant 32 : index
    %215 = vector.load %arg16[%c0_502, %c0_503, %c32_504] : memref<4x2x256xf32, #tpu.memory_space<vmem>>, vector<2x2x16xf32>
    tpu.vector_store %arg16[%c0_502, %c0_503, %c32_504], %214 {strides = array<i32>} : memref<4x2x256xf32, #tpu.memory_space<vmem>>, vector<2x2x16xf32>,
    %c1_505 = arith.constant 1 : index
    %c0_506 = arith.constant 0 : index
    %c0_507 = arith.constant 0 : index
    %216 = tpu.strided_load %arg15[%c1_505, %c0_506, %c0_507] {strides = array<i32: 2, 2, 1>} : memref<12x6x16xf32, #tpu.memory_space<vmem>>, vector<2x2x16xf32>
    %c0_508 = arith.constant 0 : index
    %c0_509 = arith.constant 0 : index
    %c48_510 = arith.constant 48 : index
    %217 = vector.load %arg16[%c0_508, %c0_509, %c48_510] : memref<4x2x256xf32, #tpu.memory_space<vmem>>, vector<2x2x16xf32>
    tpu.vector_store %arg16[%c0_508, %c0_509, %c48_510], %216 {strides = array<i32>} : memref<4x2x256xf32, #tpu.memory_space<vmem>>, vector<2x2x16xf32>,
    %c1_511 = arith.constant 1 : index
    %c1_512 = arith.constant 1 : index
    %c0_513 = arith.constant 0 : index
    %218 = tpu.strided_load %arg15[%c1_511, %c1_512, %c0_513] {strides = array<i32: 2, 2, 1>} : memref<12x6x16xf32, #tpu.memory_space<vmem>>, vector<2x2x16xf32>
    %c0_514 = arith.constant 0 : index
    %c0_515 = arith.constant 0 : index
    %c64_516 = arith.constant 64 : index
    %219 = vector.load %arg16[%c0_514, %c0_515, %c64_516] : memref<4x2x256xf32, #tpu.memory_space<vmem>>, vector<2x2x16xf32>
    tpu.vector_store %arg16[%c0_514, %c0_515, %c64_516], %218 {strides = array<i32>} : memref<4x2x256xf32, #tpu.memory_space<vmem>>, vector<2x2x16xf32>,
    %c1_517 = arith.constant 1 : index
    %c2_518 = arith.constant 2 : index
    %c0_519 = arith.constant 0 : index
    %220 = tpu.strided_load %arg15[%c1_517, %c2_518, %c0_519] {strides = array<i32: 2, 2, 1>} : memref<12x6x16xf32, #tpu.memory_space<vmem>>, vector<2x2x16xf32>
    %c0_520 = arith.constant 0 : index
    %c0_521 = arith.constant 0 : index
    %c80_522 = arith.constant 80 : index
    %221 = vector.load %arg16[%c0_520, %c0_521, %c80_522] : memref<4x2x256xf32, #tpu.memory_space<vmem>>, vector<2x2x16xf32>
    tpu.vector_store %arg16[%c0_520, %c0_521, %c80_522], %220 {strides = array<i32>} : memref<4x2x256xf32, #tpu.memory_space<vmem>>, vector<2x2x16xf32>,
    %c2_523 = arith.constant 2 : index
    %c0_524 = arith.constant 0 : index
    %c0_525 = arith.constant 0 : index
    %222 = tpu.strided_load %arg15[%c2_523, %c0_524, %c0_525] {strides = array<i32: 2, 2, 1>} : memref<12x6x16xf32, #tpu.memory_space<vmem>>, vector<2x2x16xf32>
    %c0_526 = arith.constant 0 : index
    %c0_527 = arith.constant 0 : index
    %c96_528 = arith.constant 96 : index
    %223 = vector.load %arg16[%c0_526, %c0_527, %c96_528] : memref<4x2x256xf32, #tpu.memory_space<vmem>>, vector<2x2x16xf32>
    tpu.vector_store %arg16[%c0_526, %c0_527, %c96_528], %222 {strides = array<i32>} : memref<4x2x256xf32, #tpu.memory_space<vmem>>, vector<2x2x16xf32>,
    %c2_529 = arith.constant 2 : index
    %c1_530 = arith.constant 1 : index
    %c0_531 = arith.constant 0 : index
    %224 = tpu.strided_load %arg15[%c2_529, %c1_530, %c0_531] {strides = array<i32: 2, 2, 1>} : memref<12x6x16xf32, #tpu.memory_space<vmem>>, vector<2x2x16xf32>
    %c0_532 = arith.constant 0 : index
    %c0_533 = arith.constant 0 : index
    %c112 = arith.constant 112 : index
    %225 = vector.load %arg16[%c0_532, %c0_533, %c112] : memref<4x2x256xf32, #tpu.memory_space<vmem>>, vector<2x2x16xf32>
    tpu.vector_store %arg16[%c0_532, %c0_533, %c112], %224 {strides = array<i32>} : memref<4x2x256xf32, #tpu.memory_space<vmem>>, vector<2x2x16xf32>,
    %c2_534 = arith.constant 2 : index
    %c2_535 = arith.constant 2 : index
    %c0_536 = arith.constant 0 : index
    %226 = tpu.strided_load %arg15[%c2_534, %c2_535, %c0_536] {strides = array<i32: 2, 2, 1>} : memref<12x6x16xf32, #tpu.memory_space<vmem>>, vector<2x2x16xf32>
    %c0_537 = arith.constant 0 : index
    %c0_538 = arith.constant 0 : index
    %c128 = arith.constant 128 : index
    %227 = vector.load %arg16[%c0_537, %c0_538, %c128] : memref<4x2x256xf32, #tpu.memory_space<vmem>>, vector<2x2x16xf32>
    tpu.vector_store %arg16[%c0_537, %c0_538, %c128], %226 {strides = array<i32>} : memref<4x2x256xf32, #tpu.memory_space<vmem>>, vector<2x2x16xf32>,
    %c6_539 = arith.constant 6 : index
    %c0_540 = arith.constant 0 : index
    %c0_541 = arith.constant 0 : index
    %228 = tpu.strided_load %arg15[%c6_539, %c0_540, %c0_541] {strides = array<i32: 2, 2, 1>} : memref<12x6x16xf32, #tpu.memory_space<vmem>>, vector<2x2x16xf32>
    %c2_542 = arith.constant 2 : index
    %c0_543 = arith.constant 0 : index
    %c0_544 = arith.constant 0 : index
    %229 = vector.load %arg16[%c2_542, %c0_543, %c0_544] : memref<4x2x256xf32, #tpu.memory_space<vmem>>, vector<2x2x16xf32>
    tpu.vector_store %arg16[%c2_542, %c0_543, %c0_544], %228 {strides = array<i32>} : memref<4x2x256xf32, #tpu.memory_space<vmem>>, vector<2x2x16xf32>,
    %c6_545 = arith.constant 6 : index
    %c1_546 = arith.constant 1 : index
    %c0_547 = arith.constant 0 : index
    %230 = tpu.strided_load %arg15[%c6_545, %c1_546, %c0_547] {strides = array<i32: 2, 2, 1>} : memref<12x6x16xf32, #tpu.memory_space<vmem>>, vector<2x2x16xf32>
    %c2_548 = arith.constant 2 : index
    %c0_549 = arith.constant 0 : index
    %c16_550 = arith.constant 16 : index
    %231 = vector.load %arg16[%c2_548, %c0_549, %c16_550] : memref<4x2x256xf32, #tpu.memory_space<vmem>>, vector<2x2x16xf32>
    tpu.vector_store %arg16[%c2_548, %c0_549, %c16_550], %230 {strides = array<i32>} : memref<4x2x256xf32, #tpu.memory_space<vmem>>, vector<2x2x16xf32>,
    %c6_551 = arith.constant 6 : index
    %c2_552 = arith.constant 2 : index
    %c0_553 = arith.constant 0 : index
    %232 = tpu.strided_load %arg15[%c6_551, %c2_552, %c0_553] {strides = array<i32: 2, 2, 1>} : memref<12x6x16xf32, #tpu.memory_space<vmem>>, vector<2x2x16xf32>
    %c2_554 = arith.constant 2 : index
    %c0_555 = arith.constant 0 : index
    %c32_556 = arith.constant 32 : index
    %233 = vector.load %arg16[%c2_554, %c0_555, %c32_556] : memref<4x2x256xf32, #tpu.memory_space<vmem>>, vector<2x2x16xf32>
    tpu.vector_store %arg16[%c2_554, %c0_555, %c32_556], %232 {strides = array<i32>} : memref<4x2x256xf32, #tpu.memory_space<vmem>>, vector<2x2x16xf32>,
    %c7_557 = arith.constant 7 : index
    %c0_558 = arith.constant 0 : index
    %c0_559 = arith.constant 0 : index
    %234 = tpu.strided_load %arg15[%c7_557, %c0_558, %c0_559] {strides = array<i32: 2, 2, 1>} : memref<12x6x16xf32, #tpu.memory_space<vmem>>, vector<2x2x16xf32>
    %c2_560 = arith.constant 2 : index
    %c0_561 = arith.constant 0 : index
    %c48_562 = arith.constant 48 : index
    %235 = vector.load %arg16[%c2_560, %c0_561, %c48_562] : memref<4x2x256xf32, #tpu.memory_space<vmem>>, vector<2x2x16xf32>
    tpu.vector_store %arg16[%c2_560, %c0_561, %c48_562], %234 {strides = array<i32>} : memref<4x2x256xf32, #tpu.memory_space<vmem>>, vector<2x2x16xf32>,
    %c7_563 = arith.constant 7 : index
    %c1_564 = arith.constant 1 : index
    %c0_565 = arith.constant 0 : index
    %236 = tpu.strided_load %arg15[%c7_563, %c1_564, %c0_565] {strides = array<i32: 2, 2, 1>} : memref<12x6x16xf32, #tpu.memory_space<vmem>>, vector<2x2x16xf32>
    %c2_566 = arith.constant 2 : index
    %c0_567 = arith.constant 0 : index
    %c64_568 = arith.constant 64 : index
    %237 = vector.load %arg16[%c2_566, %c0_567, %c64_568] : memref<4x2x256xf32, #tpu.memory_space<vmem>>, vector<2x2x16xf32>
    tpu.vector_store %arg16[%c2_566, %c0_567, %c64_568], %236 {strides = array<i32>} : memref<4x2x256xf32, #tpu.memory_space<vmem>>, vector<2x2x16xf32>,
    %c7_569 = arith.constant 7 : index
    %c2_570 = arith.constant 2 : index
    %c0_571 = arith.constant 0 : index
    %238 = tpu.strided_load %arg15[%c7_569, %c2_570, %c0_571] {strides = array<i32: 2, 2, 1>} : memref<12x6x16xf32, #tpu.memory_space<vmem>>, vector<2x2x16xf32>
    %c2_572 = arith.constant 2 : index
    %c0_573 = arith.constant 0 : index
    %c80_574 = arith.constant 80 : index
    %239 = vector.load %arg16[%c2_572, %c0_573, %c80_574] : memref<4x2x256xf32, #tpu.memory_space<vmem>>, vector<2x2x16xf32>
    tpu.vector_store %arg16[%c2_572, %c0_573, %c80_574], %238 {strides = array<i32>} : memref<4x2x256xf32, #tpu.memory_space<vmem>>, vector<2x2x16xf32>,
    %c8_575 = arith.constant 8 : index
    %c0_576 = arith.constant 0 : index
    %c0_577 = arith.constant 0 : index
    %240 = tpu.strided_load %arg15[%c8_575, %c0_576, %c0_577] {strides = array<i32: 2, 2, 1>} : memref<12x6x16xf32, #tpu.memory_space<vmem>>, vector<2x2x16xf32>
    %c2_578 = arith.constant 2 : index
    %c0_579 = arith.constant 0 : index
    %c96_580 = arith.constant 96 : index
    %241 = vector.load %arg16[%c2_578, %c0_579, %c96_580] : memref<4x2x256xf32, #tpu.memory_space<vmem>>, vector<2x2x16xf32>
    tpu.vector_store %arg16[%c2_578, %c0_579, %c96_580], %240 {strides = array<i32>} : memref<4x2x256xf32, #tpu.memory_space<vmem>>, vector<2x2x16xf32>,
    %c8_581 = arith.constant 8 : index
    %c1_582 = arith.constant 1 : index
    %c0_583 = arith.constant 0 : index
    %242 = tpu.strided_load %arg15[%c8_581, %c1_582, %c0_583] {strides = array<i32: 2, 2, 1>} : memref<12x6x16xf32, #tpu.memory_space<vmem>>, vector<2x2x16xf32>
    %c2_584 = arith.constant 2 : index
    %c0_585 = arith.constant 0 : index
    %c112_586 = arith.constant 112 : index
    %243 = vector.load %arg16[%c2_584, %c0_585, %c112_586] : memref<4x2x256xf32, #tpu.memory_space<vmem>>, vector<2x2x16xf32>
    tpu.vector_store %arg16[%c2_584, %c0_585, %c112_586], %242 {strides = array<i32>} : memref<4x2x256xf32, #tpu.memory_space<vmem>>, vector<2x2x16xf32>,
    %c8_587 = arith.constant 8 : index
    %c2_588 = arith.constant 2 : index
    %c0_589 = arith.constant 0 : index
    %244 = tpu.strided_load %arg15[%c8_587, %c2_588, %c0_589] {strides = array<i32: 2, 2, 1>} : memref<12x6x16xf32, #tpu.memory_space<vmem>>, vector<2x2x16xf32>
    %c2_590 = arith.constant 2 : index
    %c0_591 = arith.constant 0 : index
    %c128_592 = arith.constant 128 : index
    %245 = vector.load %arg16[%c2_590, %c0_591, %c128_592] : memref<4x2x256xf32, #tpu.memory_space<vmem>>, vector<2x2x16xf32>
    tpu.vector_store %arg16[%c2_590, %c0_591, %c128_592], %244 {strides = array<i32>} : memref<4x2x256xf32, #tpu.memory_space<vmem>>, vector<2x2x16xf32>,
    %c0_593 = arith.constant 0 : index
    %c0_594 = arith.constant 0 : index
    %c0_595 = arith.constant 0 : index
    %246 = vector.load %arg16[%c0_593, %c0_594, %c0_595] : memref<4x2x256xf32, #tpu.memory_space<vmem>>, vector<4x2x256xf32>
    %247 = vector.shape_cast %246 : vector<4x2x256xf32> to vector<8x256xf32>
    %c0_596 = arith.constant 0 : index
    %c0_597 = arith.constant 0 : index
    %248 = vector.load %arg6[%c0_596, %c0_597] : memref<256x128xf32, #tpu.memory_space<vmem>>, vector<256x128xf32>
    %cst_598 = arith.constant dense<0.000000e+00> : vector<8x128xf32>
    %249 = tpu.matmul %247, %248, %cst_598 {dimension_numbers = #tpu.dot_dimension_numbers<[1], [0], [0], [1], [0, 0, 1, 1], [], []>} : vector<8x256xf32>, vector<256x128xf32>, vector<8x128xf32> -> vector<8x128xf32>
    %c0_599 = arith.constant 0 : index
    %c0_600 = arith.constant 0 : index
    %250 = vector.load %arg7[%c0_599, %c0_600] : memref<1x128xf32, #tpu.memory_space<vmem>>, vector<1x128xf32>
    %251 = vector.broadcast %250 : vector<1x128xf32> to vector<8x128xf32>
    %252 = arith.addf %249, %251 : vector<8x128xf32>
    %cst_601 = arith.constant 0.000000e+00 : f32
    %253 = vector.broadcast %cst_601 : f32 to vector<8x128xf32>
    %254 = arith.cmpf oge, %252, %253 : vector<8x128xf32>
    %cst_602 = arith.constant 1.000000e-01 : f32
    %255 = vector.broadcast %cst_602 : f32 to vector<8x128xf32>
    %256 = arith.mulf %255, %252 : vector<8x128xf32>
    %257 = arith.select %254, %252, %256 : vector<8x128xi1>, vector<8x128xf32>
    %c0_603 = arith.constant 0 : index
    %c0_604 = arith.constant 0 : index
    %258 = vector.load %arg10[%c0_603, %c0_604] : memref<8x128xf32, #tpu.memory_space<vmem>>, vector<8x128xf32>
    tpu.vector_store %arg10[%c0_603, %c0_604], %257 {strides = array<i32>} : memref<8x128xf32, #tpu.memory_space<vmem>>, vector<8x128xf32>,
    return
  }
  func.func @transform_0(%arg0: i32) -> (i32, i32, i32, i32) {
    %c0_i32 = arith.constant 0 : i32
    %c0_i32_0 = arith.constant 0 : i32
    %c0_i32_1 = arith.constant 0 : i32
    %c0_i32_2 = arith.constant 0 : i32
    %c0_i32_3 = arith.constant 0 : i32
    return %c0_i32, %c0_i32_0, %c0_i32_1, %c0_i32_2 : i32, i32, i32, i32
  }
  func.func @transform_1(%arg0: i32) -> (i32, i32) {
    %c0_i32 = arith.constant 0 : i32
    %c0_i32_0 = arith.constant 0 : i32
    %c0_i32_1 = arith.constant 0 : i32
    return %c0_i32, %c0_i32_0 : i32, i32
  }
  func.func @transform_2(%arg0: i32) -> (i32, i32) {
    %c0_i32 = arith.constant 0 : i32
    %c0_i32_0 = arith.constant 0 : i32
    %c0_i32_1 = arith.constant 0 : i32
    return %c0_i32, %c0_i32_0 : i32, i32
  }
  func.func @transform_3(%arg0: i32) -> (i32, i32) {
    %c0_i32 = arith.constant 0 : i32
    %c0_i32_0 = arith.constant 0 : i32
    %c0_i32_1 = arith.constant 0 : i32
    return %c0_i32, %c0_i32_0 : i32, i32
  }
  func.func @transform_4(%arg0: i32) -> (i32, i32) {
    %c0_i32 = arith.constant 0 : i32
    %c0_i32_0 = arith.constant 0 : i32
    %c0_i32_1 = arith.constant 0 : i32
    return %c0_i32, %c0_i32_0 : i32, i32
  }
  func.func @transform_5(%arg0: i32) -> (i32, i32) {
    %c0_i32 = arith.constant 0 : i32
    %c0_i32_0 = arith.constant 0 : i32
    %c0_i32_1 = arith.constant 0 : i32
    return %c0_i32, %c0_i32_0 : i32, i32
  }
  func.func @transform_6(%arg0: i32) -> (i32, i32) {
    %c0_i32 = arith.constant 0 : i32
    %c0_i32_0 = arith.constant 0 : i32
    %c0_i32_1 = arith.constant 0 : i32
    return %c0_i32, %c0_i32_0 : i32, i32
  }
  func.func @transform_7(%arg0: i32) -> (i32, i32) {
    %c0_i32 = arith.constant 0 : i32
    %c0_i32_0 = arith.constant 0 : i32
    %c0_i32_1 = arith.constant 0 : i32
    return %c0_i32, %c0_i32_0 : i32, i32
  }
  func.func @transform_8(%arg0: i32) -> (i32, i32) {
    %c0_i32 = arith.constant 0 : i32
    %c0_i32_0 = arith.constant 0 : i32
    %c0_i32_1 = arith.constant 0 : i32
    return %c0_i32, %c0_i32_0 : i32, i32
  }
  func.func @transform_9(%arg0: i32) -> (i32, i32) {
    %c0_i32 = arith.constant 0 : i32
    %c0_i32_0 = arith.constant 0 : i32
    %c0_i32_1 = arith.constant 0 : i32
    return %c0_i32, %c0_i32_0 : i32, i32
  }
}

</mosaic_0001>

<llo_original>
// kernel: tpu_custom_call.1
$region0: #{tpu_custom_call.1}
  #allocation0 [shape = 'u32[]', space=smem, size = 0x4, offset = 0x4, fixed_abs, tag = 'smem constant byte address 0x4 - core index']
  #allocation1 [shape = 'u32[72,128]{1,0:T(1,128)}', space=vmem, size = 0x9000, scoped, tag = 'internal scratch']
  #allocation2 [shape = 'f32[40,20,4]{2,1,0:T(8,128)}', space=vmem, size = 0x78000, scoped, tag = 'scratch operand']
  #allocation3 [shape = 'f32[16,8,128]{2,1,0:T(8,128)}', space=vmem, size = 0x10000, scoped, tag = 'scratch operand']
  #allocation4 [shape = 'f32[20,10,8]{2,1,0:T(8,128)}', space=vmem, size = 0x28000, scoped, tag = 'scratch operand']
  #allocation5 [shape = 'f32[8,4,128]{2,1,0:T(4,128)}', space=vmem, size = 0x4000, scoped, tag = 'scratch operand']
  #allocation6 [shape = 'f32[12,6,16]{2,1,0:T(8,128)}', space=vmem, size = 0xc000, scoped, tag = 'scratch operand']
  #allocation7 [shape = 'f32[4,2,256]{2,1,0:T(2,128)}', space=vmem, size = 0x2000, scoped, tag = 'scratch operand']
  %s0 = inlined_call_operand.vmem [shape: f32[2,16,16,4], index: 0, kind: input, shape index: {}]
  %s1 = inlined_call_operand.vmem [shape: f32[128,128], index: 1, kind: input, shape index: {}]
  %s2 = inlined_call_operand.vmem [shape: f32[1,128], index: 2, kind: input, shape index: {}]
  %s3 = inlined_call_operand.vmem [shape: f32[128,128], index: 3, kind: input, shape index: {}]
  %s4 = inlined_call_operand.vmem [shape: f32[1,128], index: 4, kind: input, shape index: {}]
  %s5 = inlined_call_operand.vmem [shape: f32[256,128], index: 5, kind: input, shape index: {}]
  %s6 = inlined_call_operand.vmem [shape: f32[1,128], index: 6, kind: input, shape index: {}]
  %s7 = inlined_call_operand.hbm [shape: f32[128,128], index: 7, kind: output, shape index: {0}]
  %s8 = inlined_call_operand.hbm [shape: f32[32,128], index: 8, kind: output, shape index: {1}]
  %s9 = inlined_call_operand.hbm [shape: f32[8,128], index: 9, kind: output, shape index: {2}]
  %10 = xla_tuple %s7, %s8, %s9
  %s11 = sld [smem:[#allocation0]]
  $region54: #{tpu_custom_call.1} parent=0
    _
  %s13 = ssub.s32 1, %s11
  %s14 = scalar_select 0, %s13, %s11
  $region1: #{tpu_custom_call.1} parent=0
    #allocation8 [shape = 'u8[65536]{0}', space=vmem, size = 0x10000, scoped, tag = 'output window, operand 0, single buffered']
    #allocation9 [shape = 's32[1]{0}', space=sflag, size = 0x4, scoped, tag = 'scoped memory for tpu_custom_call.1']
    #allocation10 [shape = 'u8[16384]{0}', space=vmem, size = 0x4000, scoped, tag = 'output window, operand 1, single buffered']
    #allocation11 [shape = 's32[1]{0}', space=sflag, size = 0x4, scoped, tag = 'scoped memory for tpu_custom_call.1']
    #allocation12 [shape = 'u8[4096]{0}', space=vmem, size = 0x1000, scoped, tag = 'output window, operand 2, single buffered']
    %15 = vsyncpa [#allocation9], 0
    %16 = vsyncpa [#allocation11], 0
    // Predicated region
    $region2: #{tpu_custom_call.1} parent=1 // pred_check
      _
    $region3: #{tpu_custom_call.1} parent=1 // pred_check_branch
      %18 = sbr.rel (0) target = $region5
    $region4: #{tpu_custom_call.1} parent=1 // pred_region
      _
    $region5: #{tpu_custom_call.1} parent=1 // pred_fallthru
      _
    // Predicated region
    $region6: #{tpu_custom_call.1} parent=1 // pred_check
      _
    $region7: #{tpu_custom_call.1} parent=1 // pred_check_branch
      %20 = sbr.rel (0) target = $region9
    $region8: #{tpu_custom_call.1} parent=1 // pred_region
      _
    $region9: #{tpu_custom_call.1} parent=1 // pred_fallthru
      _
    // Predicated region
    $region10: #{tpu_custom_call.1} parent=1 // pred_check
      _
    $region11: #{tpu_custom_call.1} parent=1 // pred_check_branch
      %22 = sbr.rel (0) target = $region13
    $region12: #{tpu_custom_call.1} parent=1 // pred_region
      _
    $region13: #{tpu_custom_call.1} parent=1 // pred_fallthru
      _
    // Predicated region
    $region14: #{tpu_custom_call.1} parent=1 // pred_check
      _
    $region15: #{tpu_custom_call.1} parent=1 // pred_check_branch
      %24 = sbr.rel (0) target = $region17
    $region16: #{tpu_custom_call.1} parent=1 // pred_region
      _
    $region17: #{tpu_custom_call.1} parent=1 // pred_fallthru
      _
    // Predicated region
    $region18: #{tpu_custom_call.1} parent=1 // pred_check
      _
    $region19: #{tpu_custom_call.1} parent=1 // pred_check_branch
      %26 = sbr.rel (0) target = $region21
    $region20: #{tpu_custom_call.1} parent=1 // pred_region
      _
    $region21: #{tpu_custom_call.1} parent=1 // pred_fallthru
      _
    // Predicated region
    $region22: #{tpu_custom_call.1} parent=1 // pred_check
      _
    $region23: #{tpu_custom_call.1} parent=1 // pred_check_branch
      %28 = sbr.rel (0) target = $region25
    $region24: #{tpu_custom_call.1} parent=1 // pred_region
      _
    $region25: #{tpu_custom_call.1} parent=1 // pred_fallthru
      _
    // Predicated region
    $region26: #{tpu_custom_call.1} parent=1 // pred_check
      _
    $region27: #{tpu_custom_call.1} parent=1 // pred_check_branch
      %30 = sbr.rel (0) target = $region29
    $region28: #{tpu_custom_call.1} parent=1 // pred_region
      _
    $region29: #{tpu_custom_call.1} parent=1 // pred_fallthru
      _
    %vm31 = vcmask 25600
    %32 = vst.msk [vmem:[#allocation2] sm:$0x3] %vm31, 0.0
    %33 = vst.msk [vmem:[#allocation2 + $0x18] sm:$0x3] %vm31, 0.0
    %34 = vst.msk [vmem:[#allocation2 + $0x30] sm:$0x3] %vm31, 0.0
    %35 = vst.msk [vmem:[#allocation2 + $0x48] sm:$0x3] %vm31, 0.0
    %36 = vst.msk [vmem:[#allocation2 + $0x60] sm:$0x3] %vm31, 0.0
    %37 = vst.msk [vmem:[#allocation2 + $0x78] sm:$0x3] %vm31, 0.0
    %38 = vst.msk [vmem:[#allocation2 + $0x90] sm:$0x3] %vm31, 0.0
    %39 = vst.msk [vmem:[#allocation2 + $0xa8] sm:$0x3] %vm31, 0.0
    %40 = vst.msk [vmem:[#allocation2 + $0xc0] sm:$0x3] %vm31, 0.0
    %41 = vst.msk [vmem:[#allocation2 + $0xd8] sm:$0x3] %vm31, 0.0
    %42 = vst.msk [vmem:[#allocation2 + $0xf0] sm:$0x3] %vm31, 0.0
    %43 = vst.msk [vmem:[#allocation2 + $0x108] sm:$0x3] %vm31, 0.0
    %44 = vst.msk [vmem:[#allocation2 + $0x120] sm:$0x3] %vm31, 0.0
    %45 = vst.msk [vmem:[#allocation2 + $0x138] sm:$0x3] %vm31, 0.0
    %46 = vst.msk [vmem:[#allocation2 + $0x150] sm:$0x3] %vm31, 0.0
    %47 = vst.msk [vmem:[#allocation2 + $0x168] sm:$0x3] %vm31, 0.0
    %48 = vst.msk [vmem:[#allocation2 + $0x180] sm:$0x3] %vm31, 0.0
    %49 = vst.msk [vmem:[#allocation2 + $0x198] sm:$0x3] %vm31, 0.0
    %50 = vst.msk [vmem:[#allocation2 + $0x1b0] sm:$0x3] %vm31, 0.0
    %51 = vst.msk [vmem:[#allocation2 + $0x1c8] sm:$0x3] %vm31, 0.0
    %52 = vst.msk [vmem:[#allocation2 + $0x1e0] sm:$0x3] %vm31, 0.0
    %53 = vst.msk [vmem:[#allocation2 + $0x1f8] sm:$0x3] %vm31, 0.0
    %54 = vst.msk [vmem:[#allocation2 + $0x210] sm:$0x3] %vm31, 0.0
    %55 = vst.msk [vmem:[#allocation2 + $0x228] sm:$0x3] %vm31, 0.0
    %56 = vst.msk [vmem:[#allocation2 + $0x240] sm:$0x3] %vm31, 0.0
    %57 = vst.msk [vmem:[#allocation2 + $0x258] sm:$0x3] %vm31, 0.0
    %58 = vst.msk [vmem:[#allocation2 + $0x270] sm:$0x3] %vm31, 0.0
    %59 = vst.msk [vmem:[#allocation2 + $0x288] sm:$0x3] %vm31, 0.0
    %60 = vst.msk [vmem:[#allocation2 + $0x2a0] sm:$0x3] %vm31, 0.0
    %61 = vst.msk [vmem:[#allocation2 + $0x2b8] sm:$0x3] %vm31, 0.0
    %62 = vst.msk [vmem:[#allocation2 + $0x2d0] sm:$0x3] %vm31, 0.0
    %63 = vst.msk [vmem:[#allocation2 + $0x2e8] sm:$0x3] %vm31, 0.0
    %64 = vst.msk [vmem:[#allocation2 + $0x300] sm:$0x3] %vm31, 0.0
    %65 = vst.msk [vmem:[#allocation2 + $0x318] sm:$0x3] %vm31, 0.0
    %66 = vst.msk [vmem:[#allocation2 + $0x330] sm:$0x3] %vm31, 0.0
    %67 = vst.msk [vmem:[#allocation2 + $0x348] sm:$0x3] %vm31, 0.0
    %68 = vst.msk [vmem:[#allocation2 + $0x360] sm:$0x3] %vm31, 0.0
    %69 = vst.msk [vmem:[#allocation2 + $0x378] sm:$0x3] %vm31, 0.0
    %70 = vst.msk [vmem:[#allocation2 + $0x390] sm:$0x3] %vm31, 0.0
    %71 = vst.msk [vmem:[#allocation2 + $0x3a8] sm:$0x3] %vm31, 0.0
    %72 = vst.msk [vmem:[#allocation2 + $0x12] sm:$0x3] %vm31, 0.0
    %73 = vst.msk [vmem:[#allocation2 + $0x2a] sm:$0x3] %vm31, 0.0
    %74 = vst.msk [vmem:[#allocation2 + $0x42] sm:$0x3] %vm31, 0.0
    %75 = vst.msk [vmem:[#allocation2 + $0x5a] sm:$0x3] %vm31, 0.0
    %76 = vst.msk [vmem:[#allocation2 + $0x72] sm:$0x3] %vm31, 0.0
    %77 = vst.msk [vmem:[#allocation2 + $0x8a] sm:$0x3] %vm31, 0.0
    %78 = vst.msk [vmem:[#allocation2 + $0xa2] sm:$0x3] %vm31, 0.0
    %79 = vst.msk [vmem:[#allocation2 + $0xba] sm:$0x3] %vm31, 0.0
    %80 = vst.msk [vmem:[#allocation2 + $0xd2] sm:$0x3] %vm31, 0.0
    %81 = vst.msk [vmem:[#allocation2 + $0xea] sm:$0x3] %vm31, 0.0
    %82 = vst.msk [vmem:[#allocation2 + $0x102] sm:$0x3] %vm31, 0.0
    %83 = vst.msk [vmem:[#allocation2 + $0x11a] sm:$0x3] %vm31, 0.0
    %84 = vst.msk [vmem:[#allocation2 + $0x132] sm:$0x3] %vm31, 0.0
    %85 = vst.msk [vmem:[#allocation2 + $0x14a] sm:$0x3] %vm31, 0.0
    %86 = vst.msk [vmem:[#allocation2 + $0x162] sm:$0x3] %vm31, 0.0
    %87 = vst.msk [vmem:[#allocation2 + $0x17a] sm:$0x3] %vm31, 0.0
    %88 = vst.msk [vmem:[#allocation2 + $0x192] sm:$0x3] %vm31, 0.0
    %89 = vst.msk [vmem:[#allocation2 + $0x1aa] sm:$0x3] %vm31, 0.0
    %90 = vst.msk [vmem:[#allocation2 + $0x1c2] sm:$0x3] %vm31, 0.0
    %91 = vst.msk [vmem:[#allocation2 + $0x1da] sm:$0x3] %vm31, 0.0
    %92 = vst.msk [vmem:[#allocation2 + $0x1f2] sm:$0x3] %vm31, 0.0
    %93 = vst.msk [vmem:[#allocation2 + $0x20a] sm:$0x3] %vm31, 0.0
    %94 = vst.msk [vmem:[#allocation2 + $0x222] sm:$0x3] %vm31, 0.0
    %95 = vst.msk [vmem:[#allocation2 + $0x23a] sm:$0x3] %vm31, 0.0
    %96 = vst.msk [vmem:[#allocation2 + $0x252] sm:$0x3] %vm31, 0.0
    %97 = vst.msk [vmem:[#allocation2 + $0x26a] sm:$0x3] %vm31, 0.0
    %98 = vst.msk [vmem:[#allocation2 + $0x282] sm:$0x3] %vm31, 0.0
    %99 = vst.msk [vmem:[#allocation2 + $0x29a] sm:$0x3] %vm31, 0.0
    %100 = vst.msk [vmem:[#allocation2 + $0x2b2] sm:$0x3] %vm31, 0.0
    %101 = vst.msk [vmem:[#allocation2 + $0x2ca] sm:$0x3] %vm31, 0.0
    %102 = vst.msk [vmem:[#allocation2 + $0x2e2] sm:$0x3] %vm31, 0.0
    %103 = vst.msk [vmem:[#allocation2 + $0x2fa] sm:$0x3] %vm31, 0.0
    %104 = vst.msk [vmem:[#allocation2 + $0x312] sm:$0x3] %vm31, 0.0
    %105 = vst.msk [vmem:[#allocation2 + $0x32a] sm:$0x3] %vm31, 0.0
    %106 = vst.msk [vmem:[#allocation2 + $0x342] sm:$0x3] %vm31, 0.0
    %107 = vst.msk [vmem:[#allocation2 + $0x35a] sm:$0x3] %vm31, 0.0
    %108 = vst.msk [vmem:[#allocation2 + $0x372] sm:$0x3] %vm31, 0.0
    %109 = vst.msk [vmem:[#allocation2 + $0x38a] sm:$0x3] %vm31, 0.0
    %110 = vst.msk [vmem:[#allocation2 + $0x3a2] sm:$0x3] %vm31, 0.0
    %111 = vst.msk [vmem:[#allocation2 + $0x3ba] sm:$0x3] %vm31, 0.0
    %vm112 = vcmask 31744
    %113 = vst.msk [vmem:[#allocation2] sm:$0xff] %vm112, 0.0
    %114 = vst.msk [vmem:[#allocation2 + $0x8] sm:$0xff] %vm112, 0.0
    %vm115 = vcmask 27648
    %116 = vst.msk [vmem:[#allocation2 + $0x10] sm:$0xf] %vm115, 0.0
    %117 = vst.msk [vmem:[#allocation2 + $0x18] sm:$0xff] %vm112, 0.0
    %118 = vst.msk [vmem:[#allocation2 + $0x20] sm:$0xff] %vm112, 0.0
    %119 = vst.msk [vmem:[#allocation2 + $0x28] sm:$0xf] %vm115, 0.0
    %s120 = scalar_lea.vmem [#allocation2], 432
    %121 = vst.msk [vmem:[%s120] sm:$0xff] %vm112, 0.0
    %122 = vst.msk [vmem:[%s120 + $0x8] sm:$0xff] %vm112, 0.0
    %123 = vst.msk [vmem:[%s120 + $0x10] sm:$0xf] %vm115, 0.0
    %124 = vst.msk [vmem:[%s120 + $0x18] sm:$0xff] %vm112, 0.0
    %125 = vst.msk [vmem:[%s120 + $0x20] sm:$0xff] %vm112, 0.0
    %126 = vst.msk [vmem:[%s120 + $0x28] sm:$0xf] %vm115, 0.0
    %s127 = scalar_lea.vmem [#allocation2], 480
    %128 = vst.msk [vmem:[%s127] sm:$0xff] %vm112, 0.0
    %129 = vst.msk [vmem:[%s127 + $0x8] sm:$0xff] %vm112, 0.0
    %130 = vst.msk [vmem:[%s127 + $0x10] sm:$0xf] %vm115, 0.0
    %131 = vst.msk [vmem:[%s127 + $0x18] sm:$0xff] %vm112, 0.0
    %132 = vst.msk [vmem:[%s127 + $0x20] sm:$0xff] %vm112, 0.0
    %133 = vst.msk [vmem:[%s127 + $0x28] sm:$0xf] %vm115, 0.0
    %s134 = scalar_lea.vmem [#allocation2], 912
    %135 = vst.msk [vmem:[%s134] sm:$0xff] %vm112, 0.0
    %136 = vst.msk [vmem:[%s134 + $0x8] sm:$0xff] %vm112, 0.0
    %137 = vst.msk [vmem:[%s134 + $0x10] sm:$0xf] %vm115, 0.0
    %138 = vst.msk [vmem:[%s134 + $0x18] sm:$0xff] %vm112, 0.0
    %139 = vst.msk [vmem:[%s134 + $0x20] sm:$0xff] %vm112, 0.0
    %140 = vst.msk [vmem:[%s134 + $0x28] sm:$0xf] %vm115, 0.0
    %v141 = vld [vmem:[%s0] sm:$0xff]
    %v142 = vld [vmem:[%s0 + $0x8] sm:$0xff]
    %v143 = vld [vmem:[%s0 + $0x10] sm:$0xff]
    %v144 = vld [vmem:[%s0 + $0x18] sm:$0xff]
    %v145 = vld [vmem:[%s0 + $0x20] sm:$0xff]
    %v146 = vld [vmem:[%s0 + $0x28] sm:$0xff]
    %v147 = vld [vmem:[%s0 + $0x30] sm:$0xff]
    %v148 = vld [vmem:[%s0 + $0x38] sm:$0xff]
    %v149 = vld [vmem:[%s0 + $0x40] sm:$0xff]
    %v150 = vld [vmem:[%s0 + $0x48] sm:$0xff]
    %v151 = vld [vmem:[%s0 + $0x50] sm:$0xff]
    %v152 = vld [vmem:[%s0 + $0x58] sm:$0xff]
    %v153 = vld [vmem:[%s0 + $0x60] sm:$0xff]
    %v154 = vld [vmem:[%s0 + $0x68] sm:$0xff]
    %v155 = vld [vmem:[%s0 + $0x70] sm:$0xff]
    %v156 = vld [vmem:[%s0 + $0x78] sm:$0xff]
    %v157 = vld [vmem:[%s0 + $0x80] sm:$0xff]
    %v158 = vld [vmem:[%s0 + $0x88] sm:$0xff]
    %v159 = vld [vmem:[%s0 + $0x90] sm:$0xff]
    %v160 = vld [vmem:[%s0 + $0x98] sm:$0xff]
    %v161 = vld [vmem:[%s0 + $0xa0] sm:$0xff]
    %v162 = vld [vmem:[%s0 + $0xa8] sm:$0xff]
    %v163 = vld [vmem:[%s0 + $0xb0] sm:$0xff]
    %v164 = vld [vmem:[%s0 + $0xb8] sm:$0xff]
    %v165 = vld [vmem:[%s0 + $0xc0] sm:$0xff]
    %v166 = vld [vmem:[%s0 + $0xc8] sm:$0xff]
    %v167 = vld [vmem:[%s0 + $0xd0] sm:$0xff]
    %v168 = vld [vmem:[%s0 + $0xd8] sm:$0xff]
    %v169 = vld [vmem:[%s0 + $0xe0] sm:$0xff]
    %v170 = vld [vmem:[%s0 + $0xe8] sm:$0xff]
    %v171 = vld [vmem:[%s0 + $0xf0] sm:$0xff]
    %v172 = vld [vmem:[%s0 + $0xf8] sm:$0xff]
    %s173 = scalar_lea.vmem [#allocation2], 48
    %174 = vst.msk [vmem:[%s173 + $0x2] sm:$0xff] %vm112, %v141
    %175 = vst.msk [vmem:[%s173 + $0xa] sm:$0xff] %vm112, %v142
    %176 = vst.msk [vmem:[%s173 + $0x1a] sm:$0xff] %vm112, %v143
    %177 = vst.msk [vmem:[%s173 + $0x22] sm:$0xff] %vm112, %v144
    %178 = vst.msk [vmem:[%s173 + $0x32] sm:$0xff] %vm112, %v145
    %179 = vst.msk [vmem:[%s173 + $0x3a] sm:$0xff] %vm112, %v146
    %180 = vst.msk [vmem:[%s173 + $0x4a] sm:$0xff] %vm112, %v147
    %181 = vst.msk [vmem:[%s173 + $0x52] sm:$0xff] %vm112, %v148
    %182 = vst.msk [vmem:[%s173 + $0x62] sm:$0xff] %vm112, %v149
    %183 = vst.msk [vmem:[%s173 + $0x6a] sm:$0xff] %vm112, %v150
    %184 = vst.msk [vmem:[%s173 + $0x7a] sm:$0xff] %vm112, %v151
    %185 = vst.msk [vmem:[%s173 + $0x82] sm:$0xff] %vm112, %v152
    %186 = vst.msk [vmem:[%s173 + $0x92] sm:$0xff] %vm112, %v153
    %187 = vst.msk [vmem:[%s173 + $0x9a] sm:$0xff] %vm112, %v154
    %188 = vst.msk [vmem:[%s173 + $0xaa] sm:$0xff] %vm112, %v155
    %189 = vst.msk [vmem:[%s173 + $0xb2] sm:$0xff] %vm112, %v156
    %190 = vst.msk [vmem:[%s173 + $0xc2] sm:$0xff] %vm112, %v157
    %191 = vst.msk [vmem:[%s173 + $0xca] sm:$0xff] %vm112, %v158
    %192 = vst.msk [vmem:[%s173 + $0xda] sm:$0xff] %vm112, %v159
    %193 = vst.msk [vmem:[%s173 + $0xe2] sm:$0xff] %vm112, %v160
    %194 = vst.msk [vmem:[%s173 + $0xf2] sm:$0xff] %vm112, %v161
    %195 = vst.msk [vmem:[%s173 + $0xfa] sm:$0xff] %vm112, %v162
    %196 = vst.msk [vmem:[%s173 + $0x10a] sm:$0xff] %vm112, %v163
    %197 = vst.msk [vmem:[%s173 + $0x112] sm:$0xff] %vm112, %v164
    %198 = vst.msk [vmem:[%s173 + $0x122] sm:$0xff] %vm112, %v165
    %199 = vst.msk [vmem:[%s173 + $0x12a] sm:$0xff] %vm112, %v166
    %200 = vst.msk [vmem:[%s173 + $0x13a] sm:$0xff] %vm112, %v167
    %201 = vst.msk [vmem:[%s173 + $0x142] sm:$0xff] %vm112, %v168
    %202 = vst.msk [vmem:[%s173 + $0x152] sm:$0xff] %vm112, %v169
    %203 = vst.msk [vmem:[%s173 + $0x15a] sm:$0xff] %vm112, %v170
    %204 = vst.msk [vmem:[%s173 + $0x16a] sm:$0xff] %vm112, %v171
    %205 = vst.msk [vmem:[%s173 + $0x172] sm:$0xff] %vm112, %v172
    %s206 = scalar_lea.vmem %s0, 256
    %v207 = vld [vmem:[%s206] sm:$0xff]
    %v208 = vld [vmem:[%s206 + $0x8] sm:$0xff]
    %v209 = vld [vmem:[%s206 + $0x10] sm:$0xff]
    %v210 = vld [vmem:[%s206 + $0x18] sm:$0xff]
    %v211 = vld [vmem:[%s206 + $0x20] sm:$0xff]
    %v212 = vld [vmem:[%s206 + $0x28] sm:$0xff]
    %v213 = vld [vmem:[%s206 + $0x30] sm:$0xff]
    %v214 = vld [vmem:[%s206 + $0x38] sm:$0xff]
    %v215 = vld [vmem:[%s206 + $0x40] sm:$0xff]
    %v216 = vld [vmem:[%s206 + $0x48] sm:$0xff]
    %v217 = vld [vmem:[%s206 + $0x50] sm:$0xff]
    %v218 = vld [vmem:[%s206 + $0x58] sm:$0xff]
    %v219 = vld [vmem:[%s206 + $0x60] sm:$0xff]
    %v220 = vld [vmem:[%s206 + $0x68] sm:$0xff]
    %v221 = vld [vmem:[%s206 + $0x70] sm:$0xff]
    %v222 = vld [vmem:[%s206 + $0x78] sm:$0xff]
    %v223 = vld [vmem:[%s206 + $0x80] sm:$0xff]
    %v224 = vld [vmem:[%s206 + $0x88] sm:$0xff]
    %v225 = vld [vmem:[%s206 + $0x90] sm:$0xff]
    %v226 = vld [vmem:[%s206 + $0x98] sm:$0xff]
    %v227 = vld [vmem:[%s206 + $0xa0] sm:$0xff]
    %v228 = vld [vmem:[%s206 + $0xa8] sm:$0xff]
    %v229 = vld [vmem:[%s206 + $0xb0] sm:$0xff]
    %v230 = vld [vmem:[%s206 + $0xb8] sm:$0xff]
    %v231 = vld [vmem:[%s206 + $0xc0] sm:$0xff]
    %v232 = vld [vmem:[%s206 + $0xc8] sm:$0xff]
    %v233 = vld [vmem:[%s206 + $0xd0] sm:$0xff]
    %v234 = vld [vmem:[%s206 + $0xd8] sm:$0xff]
    %v235 = vld [vmem:[%s206 + $0xe0] sm:$0xff]
    %v236 = vld [vmem:[%s206 + $0xe8] sm:$0xff]
    %v237 = vld [vmem:[%s206 + $0xf0] sm:$0xff]
    %v238 = vld [vmem:[%s206 + $0xf8] sm:$0xff]
    %s239 = scalar_lea.vmem [#allocation2], 528
    %240 = vst.msk [vmem:[%s239 + $0x2] sm:$0xff] %vm112, %v207
    %241 = vst.msk [vmem:[%s239 + $0xa] sm:$0xff] %vm112, %v208
    %242 = vst.msk [vmem:[%s239 + $0x1a] sm:$0xff] %vm112, %v209
    %243 = vst.msk [vmem:[%s239 + $0x22] sm:$0xff] %vm112, %v210
    %244 = vst.msk [vmem:[%s239 + $0x32] sm:$0xff] %vm112, %v211
    %245 = vst.msk [vmem:[%s239 + $0x3a] sm:$0xff] %vm112, %v212
    %246 = vst.msk [vmem:[%s239 + $0x4a] sm:$0xff] %vm112, %v213
    %247 = vst.msk [vmem:[%s239 + $0x52] sm:$0xff] %vm112, %v214
    %248 = vst.msk [vmem:[%s239 + $0x62] sm:$0xff] %vm112, %v215
    %249 = vst.msk [vmem:[%s239 + $0x6a] sm:$0xff] %vm112, %v216
    %250 = vst.msk [vmem:[%s239 + $0x7a] sm:$0xff] %vm112, %v217
    %251 = vst.msk [vmem:[%s239 + $0x82] sm:$0xff] %vm112, %v218
    %252 = vst.msk [vmem:[%s239 + $0x92] sm:$0xff] %vm112, %v219
    %253 = vst.msk [vmem:[%s239 + $0x9a] sm:$0xff] %vm112, %v220
    %254 = vst.msk [vmem:[%s239 + $0xaa] sm:$0xff] %vm112, %v221
    %255 = vst.msk [vmem:[%s239 + $0xb2] sm:$0xff] %vm112, %v222
    %256 = vst.msk [vmem:[%s239 + $0xc2] sm:$0xff] %vm112, %v223
    %257 = vst.msk [vmem:[%s239 + $0xca] sm:$0xff] %vm112, %v224
    %258 = vst.msk [vmem:[%s239 + $0xda] sm:$0xff] %vm112, %v225
    %259 = vst.msk [vmem:[%s239 + $0xe2] sm:$0xff] %vm112, %v226
    %260 = vst.msk [vmem:[%s239 + $0xf2] sm:$0xff] %vm112, %v227
    %261 = vst.msk [vmem:[%s239 + $0xfa] sm:$0xff] %vm112, %v228
    %262 = vst.msk [vmem:[%s239 + $0x10a] sm:$0xff] %vm112, %v229
    %263 = vst.msk [vmem:[%s239 + $0x112] sm:$0xff] %vm112, %v230
    %264 = vst.msk [vmem:[%s239 + $0x122] sm:$0xff] %vm112, %v231
    %265 = vst.msk [vmem:[%s239 + $0x12a] sm:$0xff] %vm112, %v232
    %266 = vst.msk [vmem:[%s239 + $0x13a] sm:$0xff] %vm112, %v233
    %267 = vst.msk [vmem:[%s239 + $0x142] sm:$0xff] %vm112, %v234
    %268 = vst.msk [vmem:[%s239 + $0x152] sm:$0xff] %vm112, %v235
    %269 = vst.msk [vmem:[%s239 + $0x15a] sm:$0xff] %vm112, %v236
    %270 = vst.msk [vmem:[%s239 + $0x16a] sm:$0xff] %vm112, %v237
    %271 = vst.msk [vmem:[%s239 + $0x172] sm:$0xff] %vm112, %v238
    %vm272 = vcmask 1048352
    %273 = vst.msk [vmem:[#allocation3] sm:$0xff] %vm272, 0.0
    %274 = vst.msk [vmem:[#allocation3 + $0x8] sm:$0xff] %vm272, 0.0
    %275 = vst.msk [vmem:[#allocation3 + $0x10] sm:$0xff] %vm272, 0.0
    %276 = vst.msk [vmem:[#allocation3 + $0x18] sm:$0xff] %vm272, 0.0
    %277 = vst.msk [vmem:[#allocation3 + $0x20] sm:$0xff] %vm272, 0.0
    %278 = vst.msk [vmem:[#allocation3 + $0x28] sm:$0xff] %vm272, 0.0
    %279 = vst.msk [vmem:[#allocation3 + $0x30] sm:$0xff] %vm272, 0.0
    %280 = vst.msk [vmem:[#allocation3 + $0x38] sm:$0xff] %vm272, 0.0
    %281 = vst.msk [vmem:[#allocation3 + $0x40] sm:$0xff] %vm272, 0.0
    %282 = vst.msk [vmem:[#allocation3 + $0x48] sm:$0xff] %vm272, 0.0
    %283 = vst.msk [vmem:[#allocation3 + $0x50] sm:$0xff] %vm272, 0.0
    %284 = vst.msk [vmem:[#allocation3 + $0x58] sm:$0xff] %vm272, 0.0
    %285 = vst.msk [vmem:[#allocation3 + $0x60] sm:$0xff] %vm272, 0.0
    %286 = vst.msk [vmem:[#allocation3 + $0x68] sm:$0xff] %vm272, 0.0
    %287 = vst.msk [vmem:[#allocation3 + $0x70] sm:$0xff] %vm272, 0.0
    %288 = vst.msk [vmem:[#allocation3 + $0x78] sm:$0xff] %vm272, 0.0
    %v289 = vld [vmem:[#allocation2] ss:$2 sm:$0xff]
    %s290 = scalar_lea.vmem [#allocation2], 48
    %v291 = vld [vmem:[%s290] ss:$2 sm:$0xff]
    %s292 = scalar_lea.vmem [#allocation2], 96
    %v293 = vld [vmem:[%s292] ss:$2 sm:$0xff]
    %s294 = scalar_lea.vmem [#allocation2], 144
    %v295 = vld [vmem:[%s294] ss:$2 sm:$0xff]
    %s296 = scalar_lea.vmem [#allocation2], 192
    %v297 = vld [vmem:[%s296] ss:$2 sm:$0xff]
    %s298 = scalar_lea.vmem [#allocation2], 240
    %v299 = vld [vmem:[%s298] ss:$2 sm:$0xff]
    %s300 = scalar_lea.vmem [#allocation2], 288
    %v301 = vld [vmem:[%s300] ss:$2 sm:$0xff]
    %s302 = scalar_lea.vmem [#allocation2], 336
    %v303 = vld [vmem:[%s302] ss:$2 sm:$0xff]
    %304 = vst.msk [vmem:[#allocation3] sm:$0xff] %vm112, %v289
    %305 = vst.msk [vmem:[#allocation3 + $0x8] sm:$0xff] %vm112, %v291
    %306 = vst.msk [vmem:[#allocation3 + $0x10] sm:$0xff] %vm112, %v293
    %307 = vst.msk [vmem:[#allocation3 + $0x18] sm:$0xff] %vm112, %v295
    %308 = vst.msk [vmem:[#allocation3 + $0x20] sm:$0xff] %vm112, %v297
    %309 = vst.msk [vmem:[#allocation3 + $0x28] sm:$0xff] %vm112, %v299
    %310 = vst.msk [vmem:[#allocation3 + $0x30] sm:$0xff] %vm112, %v301
    %311 = vst.msk [vmem:[#allocation3 + $0x38] sm:$0xff] %vm112, %v303
    %s312 = scalar_lea.vmem [#allocation2], 1
    %v313 = vld [vmem:[%s312] ss:$2 sm:$0xff]
    %s314 = scalar_lea.vmem [#allocation2], 49
    %v315 = vld [vmem:[%s314] ss:$2 sm:$0xff]
    %s316 = scalar_lea.vmem [#allocation2], 97
    %v317 = vld [vmem:[%s316] ss:$2 sm:$0xff]
    %s318 = scalar_lea.vmem [#allocation2], 145
    %v319 = vld [vmem:[%s318] ss:$2 sm:$0xff]
    %s320 = scalar_lea.vmem [#allocation2], 193
    %v321 = vld [vmem:[%s320] ss:$2 sm:$0xff]
    %s322 = scalar_lea.vmem [#allocation2], 241
    %v323 = vld [vmem:[%s322] ss:$2 sm:$0xff]
    %s324 = scalar_lea.vmem [#allocation2], 289
    %v325 = vld [vmem:[%s324] ss:$2 sm:$0xff]
    %s326 = scalar_lea.vmem [#allocation2], 337
    %v327 = vld [vmem:[%s326] ss:$2 sm:$0xff]
    %336 = vrot.lane.b32.xlu0 %v313, 4
    %v337 = vpop.permute.xlu0 %336
    %338 = vrot.lane.b32.xlu0 %v315, 4
    %v339 = vpop.permute.xlu0 %338
    %340 = vrot.lane.b32.xlu0 %v317, 4
    %v341 = vpop.permute.xlu0 %340
    %342 = vrot.lane.b32.xlu0 %v319, 4
    %v343 = vpop.permute.xlu0 %342
    %344 = vrot.lane.b32.xlu0 %v321, 4
    %v345 = vpop.permute.xlu0 %344
    %346 = vrot.lane.b32.xlu0 %v323, 4
    %v347 = vpop.permute.xlu0 %346
    %348 = vrot.lane.b32.xlu0 %v325, 4
    %v349 = vpop.permute.xlu0 %348
    %350 = vrot.lane.b32.xlu0 %v327, 4
    %v351 = vpop.permute.xlu0 %350
    %vm360 = vcmask 64544
    %361 = vst.msk [vmem:[#allocation3] sm:$0xff] %vm360, %v337
    %362 = vst.msk [vmem:[#allocation3 + $0x8] sm:$0xff] %vm360, %v339
    %363 = vst.msk [vmem:[#allocation3 + $0x10] sm:$0xff] %vm360, %v341
    %364 = vst.msk [vmem:[#allocation3 + $0x18] sm:$0xff] %vm360, %v343
    %365 = vst.msk [vmem:[#allocation3 + $0x20] sm:$0xff] %vm360, %v345
    %366 = vst.msk [vmem:[#allocation3 + $0x28] sm:$0xff] %vm360, %v347
    %367 = vst.msk [vmem:[#allocation3 + $0x30] sm:$0xff] %vm360, %v349
    %368 = vst.msk [vmem:[#allocation3 + $0x38] sm:$0xff] %vm360, %v351
    %s369 = scalar_lea.vmem [#allocation2], 2
    %v370 = vld [vmem:[%s369] ss:$2 sm:$0xff]
    %s371 = scalar_lea.vmem [#allocation2], 50
    %v372 = vld [vmem:[%s371] ss:$2 sm:$0xff]
    %s373 = scalar_lea.vmem [#allocation2], 98
    %v374 = vld [vmem:[%s373] ss:$2 sm:$0xff]
    %s375 = scalar_lea.vmem [#allocation2], 146
    %v376 = vld [vmem:[%s375] ss:$2 sm:$0xff]
    %s377 = scalar_lea.vmem [#allocation2], 194
    %v378 = vld [vmem:[%s377] ss:$2 sm:$0xff]
    %s379 = scalar_lea.vmem [#allocation2], 242
    %v380 = vld [vmem:[%s379] ss:$2 sm:$0xff]
    %s381 = scalar_lea.vmem [#allocation2], 290
    %v382 = vld [vmem:[%s381] ss:$2 sm:$0xff]
    %s383 = scalar_lea.vmem [#allocation2], 338
    %v384 = vld [vmem:[%s383] ss:$2 sm:$0xff]
    %393 = vrot.lane.b32.xlu0 %v370, 8
    %v394 = vpop.permute.xlu0 %393
    %395 = vrot.lane.b32.xlu0 %v372, 8
    %v396 = vpop.permute.xlu0 %395
    %397 = vrot.lane.b32.xlu0 %v374, 8
    %v398 = vpop.permute.xlu0 %397
    %399 = vrot.lane.b32.xlu0 %v376, 8
    %v400 = vpop.permute.xlu0 %399
    %401 = vrot.lane.b32.xlu0 %v378, 8
    %v402 = vpop.permute.xlu0 %401
    %403 = vrot.lane.b32.xlu0 %v380, 8
    %v404 = vpop.permute.xlu0 %403
    %405 = vrot.lane.b32.xlu0 %v382, 8
    %v406 = vpop.permute.xlu0 %405
    %407 = vrot.lane.b32.xlu0 %v384, 8
    %v408 = vpop.permute.xlu0 %407
    %vm417 = vcmask 97344
    %418 = vst.msk [vmem:[#allocation3] sm:$0xff] %vm417, %v394
    %419 = vst.msk [vmem:[#allocation3 + $0x8] sm:$0xff] %vm417, %v396
    %420 = vst.msk [vmem:[#allocation3 + $0x10] sm:$0xff] %vm417, %v398
    %421 = vst.msk [vmem:[#allocation3 + $0x18] sm:$0xff] %vm417, %v400
    %422 = vst.msk [vmem:[#allocation3 + $0x20] sm:$0xff] %vm417, %v402
    %423 = vst.msk [vmem:[#allocation3 + $0x28] sm:$0xff] %vm417, %v404
    %424 = vst.msk [vmem:[#allocation3 + $0x30] sm:$0xff] %vm417, %v406
    %425 = vst.msk [vmem:[#allocation3 + $0x38] sm:$0xff] %vm417, %v408
    %s426 = scalar_lea.vmem [#allocation2], 3
    %v427 = vld [vmem:[%s426] ss:$2 sm:$0xff]
    %s428 = scalar_lea.vmem [#allocation2], 51
    %v429 = vld [vmem:[%s428] ss:$2 sm:$0xff]
    %s430 = scalar_lea.vmem [#allocation2], 99
    %v431 = vld [vmem:[%s430] ss:$2 sm:$0xff]
    %s432 = scalar_lea.vmem [#allocation2], 147
    %v433 = vld [vmem:[%s432] ss:$2 sm:$0xff]
    %s434 = scalar_lea.vmem [#allocation2], 195
    %v435 = vld [vmem:[%s434] ss:$2 sm:$0xff]
    %s436 = scalar_lea.vmem [#allocation2], 243
    %v437 = vld [vmem:[%s436] ss:$2 sm:$0xff]
    %s438 = scalar_lea.vmem [#allocation2], 291
    %v439 = vld [vmem:[%s438] ss:$2 sm:$0xff]
    %s440 = scalar_lea.vmem [#allocation2], 339
    %v441 = vld [vmem:[%s440] ss:$2 sm:$0xff]
    %450 = vrot.lane.b32.xlu0 %v427, 12
    %v451 = vpop.permute.xlu0 %450
    %452 = vrot.lane.b32.xlu0 %v429, 12
    %v453 = vpop.permute.xlu0 %452
    %454 = vrot.lane.b32.xlu0 %v431, 12
    %v455 = vpop.permute.xlu0 %454
    %456 = vrot.lane.b32.xlu0 %v433, 12
    %v457 = vpop.permute.xlu0 %456
    %458 = vrot.lane.b32.xlu0 %v435, 12
    %v459 = vpop.permute.xlu0 %458
    %460 = vrot.lane.b32.xlu0 %v437, 12
    %v461 = vpop.permute.xlu0 %460
    %462 = vrot.lane.b32.xlu0 %v439, 12
    %v463 = vpop.permute.xlu0 %462
    %464 = vrot.lane.b32.xlu0 %v441, 12
    %v465 = vpop.permute.xlu0 %464
    %vm474 = vcmask 130144
    %475 = vst.msk [vmem:[#allocation3] sm:$0xff] %vm474, %v451
    %476 = vst.msk [vmem:[#allocation3 + $0x8] sm:$0xff] %vm474, %v453
    %477 = vst.msk [vmem:[#allocation3 + $0x10] sm:$0xff] %vm474, %v455
    %478 = vst.msk [vmem:[#allocation3 + $0x18] sm:$0xff] %vm474, %v457
    %479 = vst.msk [vmem:[#allocation3 + $0x20] sm:$0xff] %vm474, %v459
    %480 = vst.msk [vmem:[#allocation3 + $0x28] sm:$0xff] %vm474, %v461
    %481 = vst.msk [vmem:[#allocation3 + $0x30] sm:$0xff] %vm474, %v463
    %482 = vst.msk [vmem:[#allocation3 + $0x38] sm:$0xff] %vm474, %v465
    %s483 = scalar_lea.vmem [#allocation2], 4
    %v484 = vld [vmem:[%s483] ss:$2 sm:$0xff]
    %s485 = scalar_lea.vmem [#allocation2], 52
    %v486 = vld [vmem:[%s485] ss:$2 sm:$0xff]
    %s487 = scalar_lea.vmem [#allocation2], 100
    %v488 = vld [vmem:[%s487] ss:$2 sm:$0xff]
    %s489 = scalar_lea.vmem [#allocation2], 148
    %v490 = vld [vmem:[%s489] ss:$2 sm:$0xff]
    %s491 = scalar_lea.vmem [#allocation2], 196
    %v492 = vld [vmem:[%s491] ss:$2 sm:$0xff]
    %s493 = scalar_lea.vmem [#allocation2], 244
    %v494 = vld [vmem:[%s493] ss:$2 sm:$0xff]
    %s495 = scalar_lea.vmem [#allocation2], 292
    %v496 = vld [vmem:[%s495] ss:$2 sm:$0xff]
    %s497 = scalar_lea.vmem [#allocation2], 340
    %v498 = vld [vmem:[%s497] ss:$2 sm:$0xff]
    %507 = vrot.lane.b32.xlu0 %v484, 16
    %v508 = vpop.permute.xlu0 %507
    %509 = vrot.lane.b32.xlu0 %v486, 16
    %v510 = vpop.permute.xlu0 %509
    %511 = vrot.lane.b32.xlu0 %v488, 16
    %v512 = vpop.permute.xlu0 %511
    %513 = vrot.lane.b32.xlu0 %v490, 16
    %v514 = vpop.permute.xlu0 %513
    %515 = vrot.lane.b32.xlu0 %v492, 16
    %v516 = vpop.permute.xlu0 %515
    %517 = vrot.lane.b32.xlu0 %v494, 16
    %v518 = vpop.permute.xlu0 %517
    %519 = vrot.lane.b32.xlu0 %v496, 16
    %v520 = vpop.permute.xlu0 %519
    %521 = vrot.lane.b32.xlu0 %v498, 16
    %v522 = vpop.permute.xlu0 %521
    %vm531 = vcmask 162944
    %532 = vst.msk [vmem:[#allocation3] sm:$0xff] %vm531, %v508
    %533 = vst.msk [vmem:[#allocation3 + $0x8] sm:$0xff] %vm531, %v510
    %534 = vst.msk [vmem:[#allocation3 + $0x10] sm:$0xff] %vm531, %v512
    %535 = vst.msk [vmem:[#allocation3 + $0x18] sm:$0xff] %vm531, %v514
    %536 = vst.msk [vmem:[#allocation3 + $0x20] sm:$0xff] %vm531, %v516
    %537 = vst.msk [vmem:[#allocation3 + $0x28] sm:$0xff] %vm531, %v518
    %538 = vst.msk [vmem:[#allocation3 + $0x30] sm:$0xff] %vm531, %v520
    %539 = vst.msk [vmem:[#allocation3 + $0x38] sm:$0xff] %vm531, %v522
    %s540 = scalar_lea.vmem [#allocation2], 24
    %v541 = vld [vmem:[%s540] ss:$2 sm:$0xff]
    %s542 = scalar_lea.vmem %s540, 48 [#allocation2]
    %v543 = vld [vmem:[%s542] ss:$2 sm:$0xff]
    %s544 = scalar_lea.vmem %s540, 96 [#allocation2]
    %v545 = vld [vmem:[%s544] ss:$2 sm:$0xff]
    %s546 = scalar_lea.vmem %s540, 144 [#allocation2]
    %v547 = vld [vmem:[%s546] ss:$2 sm:$0xff]
    %s548 = scalar_lea.vmem %s540, 192 [#allocation2]
    %v549 = vld [vmem:[%s548] ss:$2 sm:$0xff]
    %s550 = scalar_lea.vmem %s540, 240 [#allocation2]
    %v551 = vld [vmem:[%s550] ss:$2 sm:$0xff]
    %s552 = scalar_lea.vmem %s540, 288 [#allocation2]
    %v553 = vld [vmem:[%s552] ss:$2 sm:$0xff]
    %s554 = scalar_lea.vmem %s540, 336 [#allocation2]
    %v555 = vld [vmem:[%s554] ss:$2 sm:$0xff]
    %564 = vrot.lane.b32.xlu0 %v541, 20
    %v565 = vpop.permute.xlu0 %564
    %566 = vrot.lane.b32.xlu0 %v543, 20
    %v567 = vpop.permute.xlu0 %566
    %568 = vrot.lane.b32.xlu0 %v545, 20
    %v569 = vpop.permute.xlu0 %568
    %570 = vrot.lane.b32.xlu0 %v547, 20
    %v571 = vpop.permute.xlu0 %570
    %572 = vrot.lane.b32.xlu0 %v549, 20
    %v573 = vpop.permute.xlu0 %572
    %574 = vrot.lane.b32.xlu0 %v551, 20
    %v575 = vpop.permute.xlu0 %574
    %576 = vrot.lane.b32.xlu0 %v553, 20
    %v577 = vpop.permute.xlu0 %576
    %578 = vrot.lane.b32.xlu0 %v555, 20
    %v579 = vpop.permute.xlu0 %578
    %vm588 = vcmask 195744
    %589 = vst.msk [vmem:[#allocation3] sm:$0xff] %vm588, %v565
    %590 = vst.msk [vmem:[#allocation3 + $0x8] sm:$0xff] %vm588, %v567
    %591 = vst.msk [vmem:[#allocation3 + $0x10] sm:$0xff] %vm588, %v569
    %592 = vst.msk [vmem:[#allocation3 + $0x18] sm:$0xff] %vm588, %v571
    %593 = vst.msk [vmem:[#allocation3 + $0x20] sm:$0xff] %vm588, %v573
    %594 = vst.msk [vmem:[#allocation3 + $0x28] sm:$0xff] %vm588, %v575
    %595 = vst.msk [vmem:[#allocation3 + $0x30] sm:$0xff] %vm588, %v577
    %596 = vst.msk [vmem:[#allocation3 + $0x38] sm:$0xff] %vm588, %v579
    %s597 = scalar_lea.vmem %s540, 1 [#allocation2]
    %v598 = vld [vmem:[%s597] ss:$2 sm:$0xff]
    %s599 = scalar_lea.vmem %s540, 49 [#allocation2]
    %v600 = vld [vmem:[%s599] ss:$2 sm:$0xff]
    %s601 = scalar_lea.vmem %s540, 97 [#allocation2]
    %v602 = vld [vmem:[%s601] ss:$2 sm:$0xff]
    %s603 = scalar_lea.vmem %s540, 145 [#allocation2]
    %v604 = vld [vmem:[%s603] ss:$2 sm:$0xff]
    %s605 = scalar_lea.vmem %s540, 193 [#allocation2]
    %v606 = vld [vmem:[%s605] ss:$2 sm:$0xff]
    %s607 = scalar_lea.vmem %s540, 241 [#allocation2]
    %v608 = vld [vmem:[%s607] ss:$2 sm:$0xff]
    %s609 = scalar_lea.vmem %s540, 289 [#allocation2]
    %v610 = vld [vmem:[%s609] ss:$2 sm:$0xff]
    %s611 = scalar_lea.vmem %s540, 337 [#allocation2]
    %v612 = vld [vmem:[%s611] ss:$2 sm:$0xff]
    %621 = vrot.lane.b32.xlu0 %v598, 24
    %v622 = vpop.permute.xlu0 %621
    %623 = vrot.lane.b32.xlu0 %v600, 24
    %v624 = vpop.permute.xlu0 %623
    %625 = vrot.lane.b32.xlu0 %v602, 24
    %v626 = vpop.permute.xlu0 %625
    %627 = vrot.lane.b32.xlu0 %v604, 24
    %v628 = vpop.permute.xlu0 %627
    %629 = vrot.lane.b32.xlu0 %v606, 24
    %v630 = vpop.permute.xlu0 %629
    %631 = vrot.lane.b32.xlu0 %v608, 24
    %v632 = vpop.permute.xlu0 %631
    %633 = vrot.lane.b32.xlu0 %v610, 24
    %v634 = vpop.permute.xlu0 %633
    %635 = vrot.lane.b32.xlu0 %v612, 24
    %v636 = vpop.permute.xlu0 %635
    %vm645 = vcmask 228544
    %646 = vst.msk [vmem:[#allocation3] sm:$0xff] %vm645, %v622
    %647 = vst.msk [vmem:[#allocation3 + $0x8] sm:$0xff] %vm645, %v624
    %648 = vst.msk [vmem:[#allocation3 + $0x10] sm:$0xff] %vm645, %v626
    %649 = vst.msk [vmem:[#allocation3 + $0x18] sm:$0xff] %vm645, %v628
    %650 = vst.msk [vmem:[#allocation3 + $0x20] sm:$0xff] %vm645, %v630
    %651 = vst.msk [vmem:[#allocation3 + $0x28] sm:$0xff] %vm645, %v632
    %652 = vst.msk [vmem:[#allocation3 + $0x30] sm:$0xff] %vm645, %v634
    %653 = vst.msk [vmem:[#allocation3 + $0x38] sm:$0xff] %vm645, %v636
    %s654 = scalar_lea.vmem %s540, 2 [#allocation2]
    %v655 = vld [vmem:[%s654] ss:$2 sm:$0xff]
    %s656 = scalar_lea.vmem %s540, 50 [#allocation2]
    %v657 = vld [vmem:[%s656] ss:$2 sm:$0xff]
    %s658 = scalar_lea.vmem %s540, 98 [#allocation2]
    %v659 = vld [vmem:[%s658] ss:$2 sm:$0xff]
    %s660 = scalar_lea.vmem %s540, 146 [#allocation2]
    %v661 = vld [vmem:[%s660] ss:$2 sm:$0xff]
    %s662 = scalar_lea.vmem %s540, 194 [#allocation2]
    %v663 = vld [vmem:[%s662] ss:$2 sm:$0xff]
    %s664 = scalar_lea.vmem %s540, 242 [#allocation2]
    %v665 = vld [vmem:[%s664] ss:$2 sm:$0xff]
    %s666 = scalar_lea.vmem %s540, 290 [#allocation2]
    %v667 = vld [vmem:[%s666] ss:$2 sm:$0xff]
    %s668 = scalar_lea.vmem %s540, 338 [#allocation2]
    %v669 = vld [vmem:[%s668] ss:$2 sm:$0xff]
    %678 = vrot.lane.b32.xlu0 %v655, 28
    %v679 = vpop.permute.xlu0 %678
    %680 = vrot.lane.b32.xlu0 %v657, 28
    %v681 = vpop.permute.xlu0 %680
    %682 = vrot.lane.b32.xlu0 %v659, 28
    %v683 = vpop.permute.xlu0 %682
    %684 = vrot.lane.b32.xlu0 %v661, 28
    %v685 = vpop.permute.xlu0 %684
    %686 = vrot.lane.b32.xlu0 %v663, 28
    %v687 = vpop.permute.xlu0 %686
    %688 = vrot.lane.b32.xlu0 %v665, 28
    %v689 = vpop.permute.xlu0 %688
    %690 = vrot.lane.b32.xlu0 %v667, 28
    %v691 = vpop.permute.xlu0 %690
    %692 = vrot.lane.b32.xlu0 %v669, 28
    %v693 = vpop.permute.xlu0 %692
    %vm702 = vcmask 261344
    %703 = vst.msk [vmem:[#allocation3] sm:$0xff] %vm702, %v679
    %704 = vst.msk [vmem:[#allocation3 + $0x8] sm:$0xff] %vm702, %v681
    %705 = vst.msk [vmem:[#allocation3 + $0x10] sm:$0xff] %vm702, %v683
    %706 = vst.msk [vmem:[#allocation3 + $0x18] sm:$0xff] %vm702, %v685
    %707 = vst.msk [vmem:[#allocation3 + $0x20] sm:$0xff] %vm702, %v687
    %708 = vst.msk [vmem:[#allocation3 + $0x28] sm:$0xff] %vm702, %v689
    %709 = vst.msk [vmem:[#allocation3 + $0x30] sm:$0xff] %vm702, %v691
    %710 = vst.msk [vmem:[#allocation3 + $0x38] sm:$0xff] %vm702, %v693
    %s711 = scalar_lea.vmem %s540, 3 [#allocation2]
    %v712 = vld [vmem:[%s711] ss:$2 sm:$0xff]
    %s713 = scalar_lea.vmem %s540, 51 [#allocation2]
    %v714 = vld [vmem:[%s713] ss:$2 sm:$0xff]
    %s715 = scalar_lea.vmem %s540, 99 [#allocation2]
    %v716 = vld [vmem:[%s715] ss:$2 sm:$0xff]
    %s717 = scalar_lea.vmem %s540, 147 [#allocation2]
    %v718 = vld [vmem:[%s717] ss:$2 sm:$0xff]
    %s719 = scalar_lea.vmem %s540, 195 [#allocation2]
    %v720 = vld [vmem:[%s719] ss:$2 sm:$0xff]
    %s721 = scalar_lea.vmem %s540, 243 [#allocation2]
    %v722 = vld [vmem:[%s721] ss:$2 sm:$0xff]
    %s723 = scalar_lea.vmem %s540, 291 [#allocation2]
    %v724 = vld [vmem:[%s723] ss:$2 sm:$0xff]
    %s725 = scalar_lea.vmem %s540, 339 [#allocation2]
    %v726 = vld [vmem:[%s725] ss:$2 sm:$0xff]
    %735 = vrot.lane.b32.xlu0 %v712, 32
    %v736 = vpop.permute.xlu0 %735
    %737 = vrot.lane.b32.xlu0 %v714, 32
    %v738 = vpop.permute.xlu0 %737
    %739 = vrot.lane.b32.xlu0 %v716, 32
    %v740 = vpop.permute.xlu0 %739
    %741 = vrot.lane.b32.xlu0 %v718, 32
    %v742 = vpop.permute.xlu0 %741
    %743 = vrot.lane.b32.xlu0 %v720, 32
    %v744 = vpop.permute.xlu0 %743
    %745 = vrot.lane.b32.xlu0 %v722, 32
    %v746 = vpop.permute.xlu0 %745
    %747 = vrot.lane.b32.xlu0 %v724, 32
    %v748 = vpop.permute.xlu0 %747
    %749 = vrot.lane.b32.xlu0 %v726, 32
    %v750 = vpop.permute.xlu0 %749
    %vm759 = vcmask 294144
    %760 = vst.msk [vmem:[#allocation3] sm:$0xff] %vm759, %v736
    %761 = vst.msk [vmem:[#allocation3 + $0x8] sm:$0xff] %vm759, %v738
    %762 = vst.msk [vmem:[#allocation3 + $0x10] sm:$0xff] %vm759, %v740
    %763 = vst.msk [vmem:[#allocation3 + $0x18] sm:$0xff] %vm759, %v742
    %764 = vst.msk [vmem:[#allocation3 + $0x20] sm:$0xff] %vm759, %v744
    %765 = vst.msk [vmem:[#allocation3 + $0x28] sm:$0xff] %vm759, %v746
    %766 = vst.msk [vmem:[#allocation3 + $0x30] sm:$0xff] %vm759, %v748
    %767 = vst.msk [vmem:[#allocation3 + $0x38] sm:$0xff] %vm759, %v750
    %s768 = scalar_lea.vmem %s540, 4 [#allocation2]
    %v769 = vld [vmem:[%s768] ss:$2 sm:$0xff]
    %s770 = scalar_lea.vmem %s540, 52 [#allocation2]
    %v771 = vld [vmem:[%s770] ss:$2 sm:$0xff]
    %s772 = scalar_lea.vmem %s540, 100 [#allocation2]
    %v773 = vld [vmem:[%s772] ss:$2 sm:$0xff]
    %s774 = scalar_lea.vmem %s540, 148 [#allocation2]
    %v775 = vld [vmem:[%s774] ss:$2 sm:$0xff]
    %s776 = scalar_lea.vmem %s540, 196 [#allocation2]
    %v777 = vld [vmem:[%s776] ss:$2 sm:$0xff]
    %s778 = scalar_lea.vmem %s540, 244 [#allocation2]
    %v779 = vld [vmem:[%s778] ss:$2 sm:$0xff]
    %s780 = scalar_lea.vmem %s540, 292 [#allocation2]
    %v781 = vld [vmem:[%s780] ss:$2 sm:$0xff]
    %s782 = scalar_lea.vmem %s540, 340 [#allocation2]
    %v783 = vld [vmem:[%s782] ss:$2 sm:$0xff]
    %792 = vrot.lane.b32.xlu0 %v769, 36
    %v793 = vpop.permute.xlu0 %792
    %794 = vrot.lane.b32.xlu0 %v771, 36
    %v795 = vpop.permute.xlu0 %794
    %796 = vrot.lane.b32.xlu0 %v773, 36
    %v797 = vpop.permute.xlu0 %796
    %798 = vrot.lane.b32.xlu0 %v775, 36
    %v799 = vpop.permute.xlu0 %798
    %800 = vrot.lane.b32.xlu0 %v777, 36
    %v801 = vpop.permute.xlu0 %800
    %802 = vrot.lane.b32.xlu0 %v779, 36
    %v803 = vpop.permute.xlu0 %802
    %804 = vrot.lane.b32.xlu0 %v781, 36
    %v805 = vpop.permute.xlu0 %804
    %806 = vrot.lane.b32.xlu0 %v783, 36
    %v807 = vpop.permute.xlu0 %806
    %vm816 = vcmask 326944
    %817 = vst.msk [vmem:[#allocation3] sm:$0xff] %vm816, %v793
    %818 = vst.msk [vmem:[#allocation3 + $0x8] sm:$0xff] %vm816, %v795
    %819 = vst.msk [vmem:[#allocation3 + $0x10] sm:$0xff] %vm816, %v797
    %820 = vst.msk [vmem:[#allocation3 + $0x18] sm:$0xff] %vm816, %v799
    %821 = vst.msk [vmem:[#allocation3 + $0x20] sm:$0xff] %vm816, %v801
    %822 = vst.msk [vmem:[#allocation3 + $0x28] sm:$0xff] %vm816, %v803
    %823 = vst.msk [vmem:[#allocation3 + $0x30] sm:$0xff] %vm816, %v805
    %824 = vst.msk [vmem:[#allocation3 + $0x38] sm:$0xff] %vm816, %v807
    %v825 = vld [vmem:[%s173] ss:$2 sm:$0xff]
    %s826 = scalar_lea.vmem %s173, 48 [#allocation2]
    %v827 = vld [vmem:[%s826] ss:$2 sm:$0xff]
    %s828 = scalar_lea.vmem %s173, 96 [#allocation2]
    %v829 = vld [vmem:[%s828] ss:$2 sm:$0xff]
    %s830 = scalar_lea.vmem %s173, 144 [#allocation2]
    %v831 = vld [vmem:[%s830] ss:$2 sm:$0xff]
    %s832 = scalar_lea.vmem %s173, 192 [#allocation2]
    %v833 = vld [vmem:[%s832] ss:$2 sm:$0xff]
    %s834 = scalar_lea.vmem %s173, 240 [#allocation2]
    %v835 = vld [vmem:[%s834] ss:$2 sm:$0xff]
    %s836 = scalar_lea.vmem %s173, 288 [#allocation2]
    %v837 = vld [vmem:[%s836] ss:$2 sm:$0xff]
    %s838 = scalar_lea.vmem %s173, 336 [#allocation2]
    %v839 = vld [vmem:[%s838] ss:$2 sm:$0xff]
    %848 = vrot.lane.b32.xlu0 %v825, 40
    %v849 = vpop.permute.xlu0 %848
    %850 = vrot.lane.b32.xlu0 %v827, 40
    %v851 = vpop.permute.xlu0 %850
    %852 = vrot.lane.b32.xlu0 %v829, 40
    %v853 = vpop.permute.xlu0 %852
    %854 = vrot.lane.b32.xlu0 %v831, 40
    %v855 = vpop.permute.xlu0 %854
    %856 = vrot.lane.b32.xlu0 %v833, 40
    %v857 = vpop.permute.xlu0 %856
    %858 = vrot.lane.b32.xlu0 %v835, 40
    %v859 = vpop.permute.xlu0 %858
    %860 = vrot.lane.b32.xlu0 %v837, 40
    %v861 = vpop.permute.xlu0 %860
    %862 = vrot.lane.b32.xlu0 %v839, 40
    %v863 = vpop.permute.xlu0 %862
    %vm872 = vcmask 359744
    %873 = vst.msk [vmem:[#allocation3] sm:$0xff] %vm872, %v849
    %874 = vst.msk [vmem:[#allocation3 + $0x8] sm:$0xff] %vm872, %v851
    %875 = vst.msk [vmem:[#allocation3 + $0x10] sm:$0xff] %vm872, %v853
    %876 = vst.msk [vmem:[#allocation3 + $0x18] sm:$0xff] %vm872, %v855
    %877 = vst.msk [vmem:[#allocation3 + $0x20] sm:$0xff] %vm872, %v857
    %878 = vst.msk [vmem:[#allocation3 + $0x28] sm:$0xff] %vm872, %v859
    %879 = vst.msk [vmem:[#allocation3 + $0x30] sm:$0xff] %vm872, %v861
    %880 = vst.msk [vmem:[#allocation3 + $0x38] sm:$0xff] %vm872, %v863
    %s881 = scalar_lea.vmem %s173, 1 [#allocation2]
    %v882 = vld [vmem:[%s881] ss:$2 sm:$0xff]
    %s883 = scalar_lea.vmem %s173, 49 [#allocation2]
    %v884 = vld [vmem:[%s883] ss:$2 sm:$0xff]
    %s885 = scalar_lea.vmem %s173, 97 [#allocation2]
    %v886 = vld [vmem:[%s885] ss:$2 sm:$0xff]
    %s887 = scalar_lea.vmem %s173, 145 [#allocation2]
    %v888 = vld [vmem:[%s887] ss:$2 sm:$0xff]
    %s889 = scalar_lea.vmem %s173, 193 [#allocation2]
    %v890 = vld [vmem:[%s889] ss:$2 sm:$0xff]
    %s891 = scalar_lea.vmem %s173, 241 [#allocation2]
    %v892 = vld [vmem:[%s891] ss:$2 sm:$0xff]
    %s893 = scalar_lea.vmem %s173, 289 [#allocation2]
    %v894 = vld [vmem:[%s893] ss:$2 sm:$0xff]
    %s895 = scalar_lea.vmem %s173, 337 [#allocation2]
    %v896 = vld [vmem:[%s895] ss:$2 sm:$0xff]
    %905 = vrot.lane.b32.xlu0 %v882, 44
    %v906 = vpop.permute.xlu0 %905
    %907 = vrot.lane.b32.xlu0 %v884, 44
    %v908 = vpop.permute.xlu0 %907
    %909 = vrot.lane.b32.xlu0 %v886, 44
    %v910 = vpop.permute.xlu0 %909
    %911 = vrot.lane.b32.xlu0 %v888, 44
    %v912 = vpop.permute.xlu0 %911
    %913 = vrot.lane.b32.xlu0 %v890, 44
    %v914 = vpop.permute.xlu0 %913
    %915 = vrot.lane.b32.xlu0 %v892, 44
    %v916 = vpop.permute.xlu0 %915
    %917 = vrot.lane.b32.xlu0 %v894, 44
    %v918 = vpop.permute.xlu0 %917
    %919 = vrot.lane.b32.xlu0 %v896, 44
    %v920 = vpop.permute.xlu0 %919
    %vm929 = vcmask 392544
    %930 = vst.msk [vmem:[#allocation3] sm:$0xff] %vm929, %v906
    %931 = vst.msk [vmem:[#allocation3 + $0x8] sm:$0xff] %vm929, %v908
    %932 = vst.msk [vmem:[#allocation3 + $0x10] sm:$0xff] %vm929, %v910
    %933 = vst.msk [vmem:[#allocation3 + $0x18] sm:$0xff] %vm929, %v912
    %934 = vst.msk [vmem:[#allocation3 + $0x20] sm:$0xff] %vm929, %v914
    %935 = vst.msk [vmem:[#allocation3 + $0x28] sm:$0xff] %vm929, %v916
    %936 = vst.msk [vmem:[#allocation3 + $0x30] sm:$0xff] %vm929, %v918
    %937 = vst.msk [vmem:[#allocation3 + $0x38] sm:$0xff] %vm929, %v920
    %s938 = scalar_lea.vmem %s173, 2 [#allocation2]
    %v939 = vld [vmem:[%s938] ss:$2 sm:$0xff]
    %s940 = scalar_lea.vmem %s173, 50 [#allocation2]
    %v941 = vld [vmem:[%s940] ss:$2 sm:$0xff]
    %s942 = scalar_lea.vmem %s173, 98 [#allocation2]
    %v943 = vld [vmem:[%s942] ss:$2 sm:$0xff]
    %s944 = scalar_lea.vmem %s173, 146 [#allocation2]
    %v945 = vld [vmem:[%s944] ss:$2 sm:$0xff]
    %s946 = scalar_lea.vmem %s173, 194 [#allocation2]
    %v947 = vld [vmem:[%s946] ss:$2 sm:$0xff]
    %s948 = scalar_lea.vmem %s173, 242 [#allocation2]
    %v949 = vld [vmem:[%s948] ss:$2 sm:$0xff]
    %s950 = scalar_lea.vmem %s173, 290 [#allocation2]
    %v951 = vld [vmem:[%s950] ss:$2 sm:$0xff]
    %s952 = scalar_lea.vmem %s173, 338 [#allocation2]
    %v953 = vld [vmem:[%s952] ss:$2 sm:$0xff]
    %962 = vrot.lane.b32.xlu0 %v939, 48
    %v963 = vpop.permute.xlu0 %962
    %964 = vrot.lane.b32.xlu0 %v941, 48
    %v965 = vpop.permute.xlu0 %964
    %966 = vrot.lane.b32.xlu0 %v943, 48
    %v967 = vpop.permute.xlu0 %966
    %968 = vrot.lane.b32.xlu0 %v945, 48
    %v969 = vpop.permute.xlu0 %968
    %970 = vrot.lane.b32.xlu0 %v947, 48
    %v971 = vpop.permute.xlu0 %970
    %972 = vrot.lane.b32.xlu0 %v949, 48
    %v973 = vpop.permute.xlu0 %972
    %974 = vrot.lane.b32.xlu0 %v951, 48
    %v975 = vpop.permute.xlu0 %974
    %976 = vrot.lane.b32.xlu0 %v953, 48
    %v977 = vpop.permute.xlu0 %976
    %vm986 = vcmask 425344
    %987 = vst.msk [vmem:[#allocation3] sm:$0xff] %vm986, %v963
    %988 = vst.msk [vmem:[#allocation3 + $0x8] sm:$0xff] %vm986, %v965
    %989 = vst.msk [vmem:[#allocation3 + $0x10] sm:$0xff] %vm986, %v967
    %990 = vst.msk [vmem:[#allocation3 + $0x18] sm:$0xff] %vm986, %v969
    %991 = vst.msk [vmem:[#allocation3 + $0x20] sm:$0xff] %vm986, %v971
    %992 = vst.msk [vmem:[#allocation3 + $0x28] sm:$0xff] %vm986, %v973
    %993 = vst.msk [vmem:[#allocation3 + $0x30] sm:$0xff] %vm986, %v975
    %994 = vst.msk [vmem:[#allocation3 + $0x38] sm:$0xff] %vm986, %v977
    %s995 = scalar_lea.vmem %s173, 3 [#allocation2]
    %v996 = vld [vmem:[%s995] ss:$2 sm:$0xff]
    %s997 = scalar_lea.vmem %s173, 51 [#allocation2]
    %v998 = vld [vmem:[%s997] ss:$2 sm:$0xff]
    %s999 = scalar_lea.vmem %s173, 99 [#allocation2]
    %v1000 = vld [vmem:[%s999] ss:$2 sm:$0xff]
    %s1001 = scalar_lea.vmem %s173, 147 [#allocation2]
    %v1002 = vld [vmem:[%s1001] ss:$2 sm:$0xff]
    %s1003 = scalar_lea.vmem %s173, 195 [#allocation2]
    %v1004 = vld [vmem:[%s1003] ss:$2 sm:$0xff]
    %s1005 = scalar_lea.vmem %s173, 243 [#allocation2]
    %v1006 = vld [vmem:[%s1005] ss:$2 sm:$0xff]
    %s1007 = scalar_lea.vmem %s173, 291 [#allocation2]
    %v1008 = vld [vmem:[%s1007] ss:$2 sm:$0xff]
    %s1009 = scalar_lea.vmem %s173, 339 [#allocation2]
    %v1010 = vld [vmem:[%s1009] ss:$2 sm:$0xff]
    %1019 = vrot.lane.b32.xlu0 %v996, 52
    %v1020 = vpop.permute.xlu0 %1019
    %1021 = vrot.lane.b32.xlu0 %v998, 52
    %v1022 = vpop.permute.xlu0 %1021
    %1023 = vrot.lane.b32.xlu0 %v1000, 52
    %v1024 = vpop.permute.xlu0 %1023
    %1025 = vrot.lane.b32.xlu0 %v1002, 52
    %v1026 = vpop.permute.xlu0 %1025
    %1027 = vrot.lane.b32.xlu0 %v1004, 52
    %v1028 = vpop.permute.xlu0 %1027
    %1029 = vrot.lane.b32.xlu0 %v1006, 52
    %v1030 = vpop.permute.xlu0 %1029
    %1031 = vrot.lane.b32.xlu0 %v1008, 52
    %v1032 = vpop.permute.xlu0 %1031
    %1033 = vrot.lane.b32.xlu0 %v1010, 52
    %v1034 = vpop.permute.xlu0 %1033
    %vm1043 = vcmask 458144
    %1044 = vst.msk [vmem:[#allocation3] sm:$0xff] %vm1043, %v1020
    %1045 = vst.msk [vmem:[#allocation3 + $0x8] sm:$0xff] %vm1043, %v1022
    %1046 = vst.msk [vmem:[#allocation3 + $0x10] sm:$0xff] %vm1043, %v1024
    %1047 = vst.msk [vmem:[#allocation3 + $0x18] sm:$0xff] %vm1043, %v1026
    %1048 = vst.msk [vmem:[#allocation3 + $0x20] sm:$0xff] %vm1043, %v1028
    %1049 = vst.msk [vmem:[#allocation3 + $0x28] sm:$0xff] %vm1043, %v1030
    %1050 = vst.msk [vmem:[#allocation3 + $0x30] sm:$0xff] %vm1043, %v1032
    %1051 = vst.msk [vmem:[#allocation3 + $0x38] sm:$0xff] %vm1043, %v1034
    %s1052 = scalar_lea.vmem %s173, 4 [#allocation2]
    %v1053 = vld [vmem:[%s1052] ss:$2 sm:$0xff]
    %s1054 = scalar_lea.vmem %s173, 52 [#allocation2]
    %v1055 = vld [vmem:[%s1054] ss:$2 sm:$0xff]
    %s1056 = scalar_lea.vmem %s173, 100 [#allocation2]
    %v1057 = vld [vmem:[%s1056] ss:$2 sm:$0xff]
    %s1058 = scalar_lea.vmem %s173, 148 [#allocation2]
    %v1059 = vld [vmem:[%s1058] ss:$2 sm:$0xff]
    %s1060 = scalar_lea.vmem %s173, 196 [#allocation2]
    %v1061 = vld [vmem:[%s1060] ss:$2 sm:$0xff]
    %s1062 = scalar_lea.vmem %s173, 244 [#allocation2]
    %v1063 = vld [vmem:[%s1062] ss:$2 sm:$0xff]
    %s1064 = scalar_lea.vmem %s173, 292 [#allocation2]
    %v1065 = vld [vmem:[%s1064] ss:$2 sm:$0xff]
    %s1066 = scalar_lea.vmem %s173, 340 [#allocation2]
    %v1067 = vld [vmem:[%s1066] ss:$2 sm:$0xff]
    %1076 = vrot.lane.b32.xlu0 %v1053, 56
    %v1077 = vpop.permute.xlu0 %1076
    %1078 = vrot.lane.b32.xlu0 %v1055, 56
    %v1079 = vpop.permute.xlu0 %1078
    %1080 = vrot.lane.b32.xlu0 %v1057, 56
    %v1081 = vpop.permute.xlu0 %1080
    %1082 = vrot.lane.b32.xlu0 %v1059, 56
    %v1083 = vpop.permute.xlu0 %1082
    %1084 = vrot.lane.b32.xlu0 %v1061, 56
    %v1085 = vpop.permute.xlu0 %1084
    %1086 = vrot.lane.b32.xlu0 %v1063, 56
    %v1087 = vpop.permute.xlu0 %1086
    %1088 = vrot.lane.b32.xlu0 %v1065, 56
    %v1089 = vpop.permute.xlu0 %1088
    %1090 = vrot.lane.b32.xlu0 %v1067, 56
    %v1091 = vpop.permute.xlu0 %1090
    %vm1100 = vcmask 490944
    %1101 = vst.msk [vmem:[#allocation3] sm:$0xff] %vm1100, %v1077
    %1102 = vst.msk [vmem:[#allocation3 + $0x8] sm:$0xff] %vm1100, %v1079
    %1103 = vst.msk [vmem:[#allocation3 + $0x10] sm:$0xff] %vm1100, %v1081
    %1104 = vst.msk [vmem:[#allocation3 + $0x18] sm:$0xff] %vm1100, %v1083
    %1105 = vst.msk [vmem:[#allocation3 + $0x20] sm:$0xff] %vm1100, %v1085
    %1106 = vst.msk [vmem:[#allocation3 + $0x28] sm:$0xff] %vm1100, %v1087
    %1107 = vst.msk [vmem:[#allocation3 + $0x30] sm:$0xff] %vm1100, %v1089
    %1108 = vst.msk [vmem:[#allocation3 + $0x38] sm:$0xff] %vm1100, %v1091
    %s1109 = scalar_lea.vmem [#allocation2], 72
    %v1110 = vld [vmem:[%s1109] ss:$2 sm:$0xff]
    %s1111 = scalar_lea.vmem %s1109, 48 [#allocation2]
    %v1112 = vld [vmem:[%s1111] ss:$2 sm:$0xff]
    %s1113 = scalar_lea.vmem %s1109, 96 [#allocation2]
    %v1114 = vld [vmem:[%s1113] ss:$2 sm:$0xff]
    %s1115 = scalar_lea.vmem %s1109, 144 [#allocation2]
    %v1116 = vld [vmem:[%s1115] ss:$2 sm:$0xff]
    %s1117 = scalar_lea.vmem %s1109, 192 [#allocation2]
    %v1118 = vld [vmem:[%s1117] ss:$2 sm:$0xff]
    %s1119 = scalar_lea.vmem %s1109, 240 [#allocation2]
    %v1120 = vld [vmem:[%s1119] ss:$2 sm:$0xff]
    %s1121 = scalar_lea.vmem %s1109, 288 [#allocation2]
    %v1122 = vld [vmem:[%s1121] ss:$2 sm:$0xff]
    %s1123 = scalar_lea.vmem %s1109, 336 [#allocation2]
    %v1124 = vld [vmem:[%s1123] ss:$2 sm:$0xff]
    %1133 = vrot.lane.b32.xlu0 %v1110, 60
    %v1134 = vpop.permute.xlu0 %1133
    %1135 = vrot.lane.b32.xlu0 %v1112, 60
    %v1136 = vpop.permute.xlu0 %1135
    %1137 = vrot.lane.b32.xlu0 %v1114, 60
    %v1138 = vpop.permute.xlu0 %1137
    %1139 = vrot.lane.b32.xlu0 %v1116, 60
    %v1140 = vpop.permute.xlu0 %1139
    %1141 = vrot.lane.b32.xlu0 %v1118, 60
    %v1142 = vpop.permute.xlu0 %1141
    %1143 = vrot.lane.b32.xlu0 %v1120, 60
    %v1144 = vpop.permute.xlu0 %1143
    %1145 = vrot.lane.b32.xlu0 %v1122, 60
    %v1146 = vpop.permute.xlu0 %1145
    %1147 = vrot.lane.b32.xlu0 %v1124, 60
    %v1148 = vpop.permute.xlu0 %1147
    %vm1157 = vcmask 523744
    %1158 = vst.msk [vmem:[#allocation3] sm:$0xff] %vm1157, %v1134
    %1159 = vst.msk [vmem:[#allocation3 + $0x8] sm:$0xff] %vm1157, %v1136
    %1160 = vst.msk [vmem:[#allocation3 + $0x10] sm:$0xff] %vm1157, %v1138
    %1161 = vst.msk [vmem:[#allocation3 + $0x18] sm:$0xff] %vm1157, %v1140
    %1162 = vst.msk [vmem:[#allocation3 + $0x20] sm:$0xff] %vm1157, %v1142
    %1163 = vst.msk [vmem:[#allocation3 + $0x28] sm:$0xff] %vm1157, %v1144
    %1164 = vst.msk [vmem:[#allocation3 + $0x30] sm:$0xff] %vm1157, %v1146
    %1165 = vst.msk [vmem:[#allocation3 + $0x38] sm:$0xff] %vm1157, %v1148
    %s1166 = scalar_lea.vmem %s1109, 1 [#allocation2]
    %v1167 = vld [vmem:[%s1166] ss:$2 sm:$0xff]
    %s1168 = scalar_lea.vmem %s1109, 49 [#allocation2]
    %v1169 = vld [vmem:[%s1168] ss:$2 sm:$0xff]
    %s1170 = scalar_lea.vmem %s1109, 97 [#allocation2]
    %v1171 = vld [vmem:[%s1170] ss:$2 sm:$0xff]
    %s1172 = scalar_lea.vmem %s1109, 145 [#allocation2]
    %v1173 = vld [vmem:[%s1172] ss:$2 sm:$0xff]
    %s1174 = scalar_lea.vmem %s1109, 193 [#allocation2]
    %v1175 = vld [vmem:[%s1174] ss:$2 sm:$0xff]
    %s1176 = scalar_lea.vmem %s1109, 241 [#allocation2]
    %v1177 = vld [vmem:[%s1176] ss:$2 sm:$0xff]
    %s1178 = scalar_lea.vmem %s1109, 289 [#allocation2]
    %v1179 = vld [vmem:[%s1178] ss:$2 sm:$0xff]
    %s1180 = scalar_lea.vmem %s1109, 337 [#allocation2]
    %v1181 = vld [vmem:[%s1180] ss:$2 sm:$0xff]
    %1190 = vrot.lane.b32.xlu0 %v1167, 64
    %v1191 = vpop.permute.xlu0 %1190
    %1192 = vrot.lane.b32.xlu0 %v1169, 64
    %v1193 = vpop.permute.xlu0 %1192
    %1194 = vrot.lane.b32.xlu0 %v1171, 64
    %v1195 = vpop.permute.xlu0 %1194
    %1196 = vrot.lane.b32.xlu0 %v1173, 64
    %v1197 = vpop.permute.xlu0 %1196
    %1198 = vrot.lane.b32.xlu0 %v1175, 64
    %v1199 = vpop.permute.xlu0 %1198
    %1200 = vrot.lane.b32.xlu0 %v1177, 64
    %v1201 = vpop.permute.xlu0 %1200
    %1202 = vrot.lane.b32.xlu0 %v1179, 64
    %v1203 = vpop.permute.xlu0 %1202
    %1204 = vrot.lane.b32.xlu0 %v1181, 64
    %v1205 = vpop.permute.xlu0 %1204
    %vm1214 = vcmask 556544
    %1215 = vst.msk [vmem:[#allocation3] sm:$0xff] %vm1214, %v1191
    %1216 = vst.msk [vmem:[#allocation3 + $0x8] sm:$0xff] %vm1214, %v1193
    %1217 = vst.msk [vmem:[#allocation3 + $0x10] sm:$0xff] %vm1214, %v1195
    %1218 = vst.msk [vmem:[#allocation3 + $0x18] sm:$0xff] %vm1214, %v1197
    %1219 = vst.msk [vmem:[#allocation3 + $0x20] sm:$0xff] %vm1214, %v1199
    %1220 = vst.msk [vmem:[#allocation3 + $0x28] sm:$0xff] %vm1214, %v1201
    %1221 = vst.msk [vmem:[#allocation3 + $0x30] sm:$0xff] %vm1214, %v1203
    %1222 = vst.msk [vmem:[#allocation3 + $0x38] sm:$0xff] %vm1214, %v1205
    %s1223 = scalar_lea.vmem %s1109, 2 [#allocation2]
    %v1224 = vld [vmem:[%s1223] ss:$2 sm:$0xff]
    %s1225 = scalar_lea.vmem %s1109, 50 [#allocation2]
    %v1226 = vld [vmem:[%s1225] ss:$2 sm:$0xff]
    %s1227 = scalar_lea.vmem %s1109, 98 [#allocation2]
    %v1228 = vld [vmem:[%s1227] ss:$2 sm:$0xff]
    %s1229 = scalar_lea.vmem %s1109, 146 [#allocation2]
    %v1230 = vld [vmem:[%s1229] ss:$2 sm:$0xff]
    %s1231 = scalar_lea.vmem %s1109, 194 [#allocation2]
    %v1232 = vld [vmem:[%s1231] ss:$2 sm:$0xff]
    %s1233 = scalar_lea.vmem %s1109, 242 [#allocation2]
    %v1234 = vld [vmem:[%s1233] ss:$2 sm:$0xff]
    %s1235 = scalar_lea.vmem %s1109, 290 [#allocation2]
    %v1236 = vld [vmem:[%s1235] ss:$2 sm:$0xff]
    %s1237 = scalar_lea.vmem %s1109, 338 [#allocation2]
    %v1238 = vld [vmem:[%s1237] ss:$2 sm:$0xff]
    %1247 = vrot.lane.b32.xlu0 %v1224, 68
    %v1248 = vpop.permute.xlu0 %1247
    %1249 = vrot.lane.b32.xlu0 %v1226, 68
    %v1250 = vpop.permute.xlu0 %1249
    %1251 = vrot.lane.b32.xlu0 %v1228, 68
    %v1252 = vpop.permute.xlu0 %1251
    %1253 = vrot.lane.b32.xlu0 %v1230, 68
    %v1254 = vpop.permute.xlu0 %1253
    %1255 = vrot.lane.b32.xlu0 %v1232, 68
    %v1256 = vpop.permute.xlu0 %1255
    %1257 = vrot.lane.b32.xlu0 %v1234, 68
    %v1258 = vpop.permute.xlu0 %1257
    %1259 = vrot.lane.b32.xlu0 %v1236, 68
    %v1260 = vpop.permute.xlu0 %1259
    %1261 = vrot.lane.b32.xlu0 %v1238, 68
    %v1262 = vpop.permute.xlu0 %1261
    %vm1271 = vcmask 589344
    %1272 = vst.msk [vmem:[#allocation3] sm:$0xff] %vm1271, %v1248
    %1273 = vst.msk [vmem:[#allocation3 + $0x8] sm:$0xff] %vm1271, %v1250
    %1274 = vst.msk [vmem:[#allocation3 + $0x10] sm:$0xff] %vm1271, %v1252
    %1275 = vst.msk [vmem:[#allocation3 + $0x18] sm:$0xff] %vm1271, %v1254
    %1276 = vst.msk [vmem:[#allocation3 + $0x20] sm:$0xff] %vm1271, %v1256
    %1277 = vst.msk [vmem:[#allocation3 + $0x28] sm:$0xff] %vm1271, %v1258
    %1278 = vst.msk [vmem:[#allocation3 + $0x30] sm:$0xff] %vm1271, %v1260
    %1279 = vst.msk [vmem:[#allocation3 + $0x38] sm:$0xff] %vm1271, %v1262
    %s1280 = scalar_lea.vmem %s1109, 3 [#allocation2]
    %v1281 = vld [vmem:[%s1280] ss:$2 sm:$0xff]
    %s1282 = scalar_lea.vmem %s1109, 51 [#allocation2]
    %v1283 = vld [vmem:[%s1282] ss:$2 sm:$0xff]
    %s1284 = scalar_lea.vmem %s1109, 99 [#allocation2]
    %v1285 = vld [vmem:[%s1284] ss:$2 sm:$0xff]
    %s1286 = scalar_lea.vmem %s1109, 147 [#allocation2]
    %v1287 = vld [vmem:[%s1286] ss:$2 sm:$0xff]
    %s1288 = scalar_lea.vmem %s1109, 195 [#allocation2]
    %v1289 = vld [vmem:[%s1288] ss:$2 sm:$0xff]
    %s1290 = scalar_lea.vmem %s1109, 243 [#allocation2]
    %v1291 = vld [vmem:[%s1290] ss:$2 sm:$0xff]
    %s1292 = scalar_lea.vmem %s1109, 291 [#allocation2]
    %v1293 = vld [vmem:[%s1292] ss:$2 sm:$0xff]
    %s1294 = scalar_lea.vmem %s1109, 339 [#allocation2]
    %v1295 = vld [vmem:[%s1294] ss:$2 sm:$0xff]
    %1304 = vrot.lane.b32.xlu0 %v1281, 72
    %v1305 = vpop.permute.xlu0 %1304
    %1306 = vrot.lane.b32.xlu0 %v1283, 72
    %v1307 = vpop.permute.xlu0 %1306
    %1308 = vrot.lane.b32.xlu0 %v1285, 72
    %v1309 = vpop.permute.xlu0 %1308
    %1310 = vrot.lane.b32.xlu0 %v1287, 72
    %v1311 = vpop.permute.xlu0 %1310
    %1312 = vrot.lane.b32.xlu0 %v1289, 72
    %v1313 = vpop.permute.xlu0 %1312
    %1314 = vrot.lane.b32.xlu0 %v1291, 72
    %v1315 = vpop.permute.xlu0 %1314
    %1316 = vrot.lane.b32.xlu0 %v1293, 72
    %v1317 = vpop.permute.xlu0 %1316
    %1318 = vrot.lane.b32.xlu0 %v1295, 72
    %v1319 = vpop.permute.xlu0 %1318
    %vm1328 = vcmask 622144
    %1329 = vst.msk [vmem:[#allocation3] sm:$0xff] %vm1328, %v1305
    %1330 = vst.msk [vmem:[#allocation3 + $0x8] sm:$0xff] %vm1328, %v1307
    %1331 = vst.msk [vmem:[#allocation3 + $0x10] sm:$0xff] %vm1328, %v1309
    %1332 = vst.msk [vmem:[#allocation3 + $0x18] sm:$0xff] %vm1328, %v1311
    %1333 = vst.msk [vmem:[#allocation3 + $0x20] sm:$0xff] %vm1328, %v1313
    %1334 = vst.msk [vmem:[#allocation3 + $0x28] sm:$0xff] %vm1328, %v1315
    %1335 = vst.msk [vmem:[#allocation3 + $0x30] sm:$0xff] %vm1328, %v1317
    %1336 = vst.msk [vmem:[#allocation3 + $0x38] sm:$0xff] %vm1328, %v1319
    %s1337 = scalar_lea.vmem %s1109, 4 [#allocation2]
    %v1338 = vld [vmem:[%s1337] ss:$2 sm:$0xff]
    %s1339 = scalar_lea.vmem %s1109, 52 [#allocation2]
    %v1340 = vld [vmem:[%s1339] ss:$2 sm:$0xff]
    %s1341 = scalar_lea.vmem %s1109, 100 [#allocation2]
    %v1342 = vld [vmem:[%s1341] ss:$2 sm:$0xff]
    %s1343 = scalar_lea.vmem %s1109, 148 [#allocation2]
    %v1344 = vld [vmem:[%s1343] ss:$2 sm:$0xff]
    %s1345 = scalar_lea.vmem %s1109, 196 [#allocation2]
    %v1346 = vld [vmem:[%s1345] ss:$2 sm:$0xff]
    %s1347 = scalar_lea.vmem %s1109, 244 [#allocation2]
    %v1348 = vld [vmem:[%s1347] ss:$2 sm:$0xff]
    %s1349 = scalar_lea.vmem %s1109, 292 [#allocation2]
    %v1350 = vld [vmem:[%s1349] ss:$2 sm:$0xff]
    %s1351 = scalar_lea.vmem %s1109, 340 [#allocation2]
    %v1352 = vld [vmem:[%s1351] ss:$2 sm:$0xff]
    %1361 = vrot.lane.b32.xlu0 %v1338, 76
    %v1362 = vpop.permute.xlu0 %1361
    %1363 = vrot.lane.b32.xlu0 %v1340, 76
    %v1364 = vpop.permute.xlu0 %1363
    %1365 = vrot.lane.b32.xlu0 %v1342, 76
    %v1366 = vpop.permute.xlu0 %1365
    %1367 = vrot.lane.b32.xlu0 %v1344, 76
    %v1368 = vpop.permute.xlu0 %1367
    %1369 = vrot.lane.b32.xlu0 %v1346, 76
    %v1370 = vpop.permute.xlu0 %1369
    %1371 = vrot.lane.b32.xlu0 %v1348, 76
    %v1372 = vpop.permute.xlu0 %1371
    %1373 = vrot.lane.b32.xlu0 %v1350, 76
    %v1374 = vpop.permute.xlu0 %1373
    %1375 = vrot.lane.b32.xlu0 %v1352, 76
    %v1376 = vpop.permute.xlu0 %1375
    %vm1385 = vcmask 654944
    %1386 = vst.msk [vmem:[#allocation3] sm:$0xff] %vm1385, %v1362
    %1387 = vst.msk [vmem:[#allocation3 + $0x8] sm:$0xff] %vm1385, %v1364
    %1388 = vst.msk [vmem:[#allocation3 + $0x10] sm:$0xff] %vm1385, %v1366
    %1389 = vst.msk [vmem:[#allocation3 + $0x18] sm:$0xff] %vm1385, %v1368
    %1390 = vst.msk [vmem:[#allocation3 + $0x20] sm:$0xff] %vm1385, %v1370
    %1391 = vst.msk [vmem:[#allocation3 + $0x28] sm:$0xff] %vm1385, %v1372
    %1392 = vst.msk [vmem:[#allocation3 + $0x30] sm:$0xff] %vm1385, %v1374
    %1393 = vst.msk [vmem:[#allocation3 + $0x38] sm:$0xff] %vm1385, %v1376
    %s1394 = scalar_lea.vmem [#allocation2], 96
    %v1395 = vld [vmem:[%s1394] ss:$2 sm:$0xff]
    %s1396 = scalar_lea.vmem %s1394, 48 [#allocation2]
    %v1397 = vld [vmem:[%s1396] ss:$2 sm:$0xff]
    %s1398 = scalar_lea.vmem %s1394, 96 [#allocation2]
    %v1399 = vld [vmem:[%s1398] ss:$2 sm:$0xff]
    %s1400 = scalar_lea.vmem %s1394, 144 [#allocation2]
    %v1401 = vld [vmem:[%s1400] ss:$2 sm:$0xff]
    %s1402 = scalar_lea.vmem %s1394, 192 [#allocation2]
    %v1403 = vld [vmem:[%s1402] ss:$2 sm:$0xff]
    %s1404 = scalar_lea.vmem %s1394, 240 [#allocation2]
    %v1405 = vld [vmem:[%s1404] ss:$2 sm:$0xff]
    %s1406 = scalar_lea.vmem %s1394, 288 [#allocation2]
    %v1407 = vld [vmem:[%s1406] ss:$2 sm:$0xff]
    %s1408 = scalar_lea.vmem %s1394, 336 [#allocation2]
    %v1409 = vld [vmem:[%s1408] ss:$2 sm:$0xff]
    %1418 = vrot.lane.b32.xlu0 %v1395, 80
    %v1419 = vpop.permute.xlu0 %1418
    %1420 = vrot.lane.b32.xlu0 %v1397, 80
    %v1421 = vpop.permute.xlu0 %1420
    %1422 = vrot.lane.b32.xlu0 %v1399, 80
    %v1423 = vpop.permute.xlu0 %1422
    %1424 = vrot.lane.b32.xlu0 %v1401, 80
    %v1425 = vpop.permute.xlu0 %1424
    %1426 = vrot.lane.b32.xlu0 %v1403, 80
    %v1427 = vpop.permute.xlu0 %1426
    %1428 = vrot.lane.b32.xlu0 %v1405, 80
    %v1429 = vpop.permute.xlu0 %1428
    %1430 = vrot.lane.b32.xlu0 %v1407, 80
    %v1431 = vpop.permute.xlu0 %1430
    %1432 = vrot.lane.b32.xlu0 %v1409, 80
    %v1433 = vpop.permute.xlu0 %1432
    %vm1442 = vcmask 687744
    %1443 = vst.msk [vmem:[#allocation3] sm:$0xff] %vm1442, %v1419
    %1444 = vst.msk [vmem:[#allocation3 + $0x8] sm:$0xff] %vm1442, %v1421
    %1445 = vst.msk [vmem:[#allocation3 + $0x10] sm:$0xff] %vm1442, %v1423
    %1446 = vst.msk [vmem:[#allocation3 + $0x18] sm:$0xff] %vm1442, %v1425
    %1447 = vst.msk [vmem:[#allocation3 + $0x20] sm:$0xff] %vm1442, %v1427
    %1448 = vst.msk [vmem:[#allocation3 + $0x28] sm:$0xff] %vm1442, %v1429
    %1449 = vst.msk [vmem:[#allocation3 + $0x30] sm:$0xff] %vm1442, %v1431
    %1450 = vst.msk [vmem:[#allocation3 + $0x38] sm:$0xff] %vm1442, %v1433
    %s1451 = scalar_lea.vmem %s1394, 1 [#allocation2]
    %v1452 = vld [vmem:[%s1451] ss:$2 sm:$0xff]
    %s1453 = scalar_lea.vmem %s1394, 49 [#allocation2]
    %v1454 = vld [vmem:[%s1453] ss:$2 sm:$0xff]
    %s1455 = scalar_lea.vmem %s1394, 97 [#allocation2]
    %v1456 = vld [vmem:[%s1455] ss:$2 sm:$0xff]
    %s1457 = scalar_lea.vmem %s1394, 145 [#allocation2]
    %v1458 = vld [vmem:[%s1457] ss:$2 sm:$0xff]
    %s1459 = scalar_lea.vmem %s1394, 193 [#allocation2]
    %v1460 = vld [vmem:[%s1459] ss:$2 sm:$0xff]
    %s1461 = scalar_lea.vmem %s1394, 241 [#allocation2]
    %v1462 = vld [vmem:[%s1461] ss:$2 sm:$0xff]
    %s1463 = scalar_lea.vmem %s1394, 289 [#allocation2]
    %v1464 = vld [vmem:[%s1463] ss:$2 sm:$0xff]
    %s1465 = scalar_lea.vmem %s1394, 337 [#allocation2]
    %v1466 = vld [vmem:[%s1465] ss:$2 sm:$0xff]
    %1475 = vrot.lane.b32.xlu0 %v1452, 84
    %v1476 = vpop.permute.xlu0 %1475
    %1477 = vrot.lane.b32.xlu0 %v1454, 84
    %v1478 = vpop.permute.xlu0 %1477
    %1479 = vrot.lane.b32.xlu0 %v1456, 84
    %v1480 = vpop.permute.xlu0 %1479
    %1481 = vrot.lane.b32.xlu0 %v1458, 84
    %v1482 = vpop.permute.xlu0 %1481
    %1483 = vrot.lane.b32.xlu0 %v1460, 84
    %v1484 = vpop.permute.xlu0 %1483
    %1485 = vrot.lane.b32.xlu0 %v1462, 84
    %v1486 = vpop.permute.xlu0 %1485
    %1487 = vrot.lane.b32.xlu0 %v1464, 84
    %v1488 = vpop.permute.xlu0 %1487
    %1489 = vrot.lane.b32.xlu0 %v1466, 84
    %v1490 = vpop.permute.xlu0 %1489
    %vm1499 = vcmask 720544
    %1500 = vst.msk [vmem:[#allocation3] sm:$0xff] %vm1499, %v1476
    %1501 = vst.msk [vmem:[#allocation3 + $0x8] sm:$0xff] %vm1499, %v1478
    %1502 = vst.msk [vmem:[#allocation3 + $0x10] sm:$0xff] %vm1499, %v1480
    %1503 = vst.msk [vmem:[#allocation3 + $0x18] sm:$0xff] %vm1499, %v1482
    %1504 = vst.msk [vmem:[#allocation3 + $0x20] sm:$0xff] %vm1499, %v1484
    %1505 = vst.msk [vmem:[#allocation3 + $0x28] sm:$0xff] %vm1499, %v1486
    %1506 = vst.msk [vmem:[#allocation3 + $0x30] sm:$0xff] %vm1499, %v1488
    %1507 = vst.msk [vmem:[#allocation3 + $0x38] sm:$0xff] %vm1499, %v1490
    %s1508 = scalar_lea.vmem %s1394, 2 [#allocation2]
    %v1509 = vld [vmem:[%s1508] ss:$2 sm:$0xff]
    %s1510 = scalar_lea.vmem %s1394, 50 [#allocation2]
    %v1511 = vld [vmem:[%s1510] ss:$2 sm:$0xff]
    %s1512 = scalar_lea.vmem %s1394, 98 [#allocation2]
    %v1513 = vld [vmem:[%s1512] ss:$2 sm:$0xff]
    %s1514 = scalar_lea.vmem %s1394, 146 [#allocation2]
    %v1515 = vld [vmem:[%s1514] ss:$2 sm:$0xff]
    %s1516 = scalar_lea.vmem %s1394, 194 [#allocation2]
    %v1517 = vld [vmem:[%s1516] ss:$2 sm:$0xff]
    %s1518 = scalar_lea.vmem %s1394, 242 [#allocation2]
    %v1519 = vld [vmem:[%s1518] ss:$2 sm:$0xff]
    %s1520 = scalar_lea.vmem %s1394, 290 [#allocation2]
    %v1521 = vld [vmem:[%s1520] ss:$2 sm:$0xff]
    %s1522 = scalar_lea.vmem %s1394, 338 [#allocation2]
    %v1523 = vld [vmem:[%s1522] ss:$2 sm:$0xff]
    %1532 = vrot.lane.b32.xlu0 %v1509, 88
    %v1533 = vpop.permute.xlu0 %1532
    %1534 = vrot.lane.b32.xlu0 %v1511, 88
    %v1535 = vpop.permute.xlu0 %1534
    %1536 = vrot.lane.b32.xlu0 %v1513, 88
    %v1537 = vpop.permute.xlu0 %1536
    %1538 = vrot.lane.b32.xlu0 %v1515, 88
    %v1539 = vpop.permute.xlu0 %1538
    %1540 = vrot.lane.b32.xlu0 %v1517, 88
    %v1541 = vpop.permute.xlu0 %1540
    %1542 = vrot.lane.b32.xlu0 %v1519, 88
    %v1543 = vpop.permute.xlu0 %1542
    %1544 = vrot.lane.b32.xlu0 %v1521, 88
    %v1545 = vpop.permute.xlu0 %1544
    %1546 = vrot.lane.b32.xlu0 %v1523, 88
    %v1547 = vpop.permute.xlu0 %1546
    %vm1556 = vcmask 753344
    %1557 = vst.msk [vmem:[#allocation3] sm:$0xff] %vm1556, %v1533
    %1558 = vst.msk [vmem:[#allocation3 + $0x8] sm:$0xff] %vm1556, %v1535
    %1559 = vst.msk [vmem:[#allocation3 + $0x10] sm:$0xff] %vm1556, %v1537
    %1560 = vst.msk [vmem:[#allocation3 + $0x18] sm:$0xff] %vm1556, %v1539
    %1561 = vst.msk [vmem:[#allocation3 + $0x20] sm:$0xff] %vm1556, %v1541
    %1562 = vst.msk [vmem:[#allocation3 + $0x28] sm:$0xff] %vm1556, %v1543
    %1563 = vst.msk [vmem:[#allocation3 + $0x30] sm:$0xff] %vm1556, %v1545
    %1564 = vst.msk [vmem:[#allocation3 + $0x38] sm:$0xff] %vm1556, %v1547
    %s1565 = scalar_lea.vmem %s1394, 3 [#allocation2]
    %v1566 = vld [vmem:[%s1565] ss:$2 sm:$0xff]
    %s1567 = scalar_lea.vmem %s1394, 51 [#allocation2]
    %v1568 = vld [vmem:[%s1567] ss:$2 sm:$0xff]
    %s1569 = scalar_lea.vmem %s1394, 99 [#allocation2]
    %v1570 = vld [vmem:[%s1569] ss:$2 sm:$0xff]
    %s1571 = scalar_lea.vmem %s1394, 147 [#allocation2]
    %v1572 = vld [vmem:[%s1571] ss:$2 sm:$0xff]
    %s1573 = scalar_lea.vmem %s1394, 195 [#allocation2]
    %v1574 = vld [vmem:[%s1573] ss:$2 sm:$0xff]
    %s1575 = scalar_lea.vmem %s1394, 243 [#allocation2]
    %v1576 = vld [vmem:[%s1575] ss:$2 sm:$0xff]
    %s1577 = scalar_lea.vmem %s1394, 291 [#allocation2]
    %v1578 = vld [vmem:[%s1577] ss:$2 sm:$0xff]
    %s1579 = scalar_lea.vmem %s1394, 339 [#allocation2]
    %v1580 = vld [vmem:[%s1579] ss:$2 sm:$0xff]
    %1589 = vrot.lane.b32.xlu0 %v1566, 92
    %v1590 = vpop.permute.xlu0 %1589
    %1591 = vrot.lane.b32.xlu0 %v1568, 92
    %v1592 = vpop.permute.xlu0 %1591
    %1593 = vrot.lane.b32.xlu0 %v1570, 92
    %v1594 = vpop.permute.xlu0 %1593
    %1595 = vrot.lane.b32.xlu0 %v1572, 92
    %v1596 = vpop.permute.xlu0 %1595
    %1597 = vrot.lane.b32.xlu0 %v1574, 92
    %v1598 = vpop.permute.xlu0 %1597
    %1599 = vrot.lane.b32.xlu0 %v1576, 92
    %v1600 = vpop.permute.xlu0 %1599
    %1601 = vrot.lane.b32.xlu0 %v1578, 92
    %v1602 = vpop.permute.xlu0 %1601
    %1603 = vrot.lane.b32.xlu0 %v1580, 92
    %v1604 = vpop.permute.xlu0 %1603
    %vm1613 = vcmask 786144
    %1614 = vst.msk [vmem:[#allocation3] sm:$0xff] %vm1613, %v1590
    %1615 = vst.msk [vmem:[#allocation3 + $0x8] sm:$0xff] %vm1613, %v1592
    %1616 = vst.msk [vmem:[#allocation3 + $0x10] sm:$0xff] %vm1613, %v1594
    %1617 = vst.msk [vmem:[#allocation3 + $0x18] sm:$0xff] %vm1613, %v1596
    %1618 = vst.msk [vmem:[#allocation3 + $0x20] sm:$0xff] %vm1613, %v1598
    %1619 = vst.msk [vmem:[#allocation3 + $0x28] sm:$0xff] %vm1613, %v1600
    %1620 = vst.msk [vmem:[#allocation3 + $0x30] sm:$0xff] %vm1613, %v1602
    %1621 = vst.msk [vmem:[#allocation3 + $0x38] sm:$0xff] %vm1613, %v1604
    %s1622 = scalar_lea.vmem %s1394, 4 [#allocation2]
    %v1623 = vld [vmem:[%s1622] ss:$2 sm:$0xff]
    %s1624 = scalar_lea.vmem %s1394, 52 [#allocation2]
    %v1625 = vld [vmem:[%s1624] ss:$2 sm:$0xff]
    %s1626 = scalar_lea.vmem %s1394, 100 [#allocation2]
    %v1627 = vld [vmem:[%s1626] ss:$2 sm:$0xff]
    %s1628 = scalar_lea.vmem %s1394, 148 [#allocation2]
    %v1629 = vld [vmem:[%s1628] ss:$2 sm:$0xff]
    %s1630 = scalar_lea.vmem %s1394, 196 [#allocation2]
    %v1631 = vld [vmem:[%s1630] ss:$2 sm:$0xff]
    %s1632 = scalar_lea.vmem %s1394, 244 [#allocation2]
    %v1633 = vld [vmem:[%s1632] ss:$2 sm:$0xff]
    %s1634 = scalar_lea.vmem %s1394, 292 [#allocation2]
    %v1635 = vld [vmem:[%s1634] ss:$2 sm:$0xff]
    %s1636 = scalar_lea.vmem %s1394, 340 [#allocation2]
    %v1637 = vld [vmem:[%s1636] ss:$2 sm:$0xff]
    %1646 = vrot.lane.b32.xlu0 %v1623, 96
    %v1647 = vpop.permute.xlu0 %1646
    %1648 = vrot.lane.b32.xlu0 %v1625, 96
    %v1649 = vpop.permute.xlu0 %1648
    %1650 = vrot.lane.b32.xlu0 %v1627, 96
    %v1651 = vpop.permute.xlu0 %1650
    %1652 = vrot.lane.b32.xlu0 %v1629, 96
    %v1653 = vpop.permute.xlu0 %1652
    %1654 = vrot.lane.b32.xlu0 %v1631, 96
    %v1655 = vpop.permute.xlu0 %1654
    %1656 = vrot.lane.b32.xlu0 %v1633, 96
    %v1657 = vpop.permute.xlu0 %1656
    %1658 = vrot.lane.b32.xlu0 %v1635, 96
    %v1659 = vpop.permute.xlu0 %1658
    %1660 = vrot.lane.b32.xlu0 %v1637, 96
    %v1661 = vpop.permute.xlu0 %1660
    %vm1670 = vcmask 818944
    %1671 = vst.msk [vmem:[#allocation3] sm:$0xff] %vm1670, %v1647
    %1672 = vst.msk [vmem:[#allocation3 + $0x8] sm:$0xff] %vm1670, %v1649
    %1673 = vst.msk [vmem:[#allocation3 + $0x10] sm:$0xff] %vm1670, %v1651
    %1674 = vst.msk [vmem:[#allocation3 + $0x18] sm:$0xff] %vm1670, %v1653
    %1675 = vst.msk [vmem:[#allocation3 + $0x20] sm:$0xff] %vm1670, %v1655
    %1676 = vst.msk [vmem:[#allocation3 + $0x28] sm:$0xff] %vm1670, %v1657
    %1677 = vst.msk [vmem:[#allocation3 + $0x30] sm:$0xff] %vm1670, %v1659
    %1678 = vst.msk [vmem:[#allocation3 + $0x38] sm:$0xff] %vm1670, %v1661
    %v1679 = vld [vmem:[%s127] ss:$2 sm:$0xff]
    %s1680 = scalar_lea.vmem %s127, 48 [#allocation2]
    %v1681 = vld [vmem:[%s1680] ss:$2 sm:$0xff]
    %s1682 = scalar_lea.vmem %s127, 96 [#allocation2]
    %v1683 = vld [vmem:[%s1682] ss:$2 sm:$0xff]
    %s1684 = scalar_lea.vmem %s127, 144 [#allocation2]
    %v1685 = vld [vmem:[%s1684] ss:$2 sm:$0xff]
    %s1686 = scalar_lea.vmem %s127, 192 [#allocation2]
    %v1687 = vld [vmem:[%s1686] ss:$2 sm:$0xff]
    %s1688 = scalar_lea.vmem %s127, 240 [#allocation2]
    %v1689 = vld [vmem:[%s1688] ss:$2 sm:$0xff]
    %s1690 = scalar_lea.vmem %s127, 288 [#allocation2]
    %v1691 = vld [vmem:[%s1690] ss:$2 sm:$0xff]
    %s1692 = scalar_lea.vmem %s127, 336 [#allocation2]
    %v1693 = vld [vmem:[%s1692] ss:$2 sm:$0xff]
    %s1694 = scalar_lea.vmem [#allocation3], 64
    %1695 = vst.msk [vmem:[%s1694] sm:$0xff] %vm112, %v1679
    %1696 = vst.msk [vmem:[%s1694 + $0x8] sm:$0xff] %vm112, %v1681
    %1697 = vst.msk [vmem:[%s1694 + $0x10] sm:$0xff] %vm112, %v1683
    %1698 = vst.msk [vmem:[%s1694 + $0x18] sm:$0xff] %vm112, %v1685
    %1699 = vst.msk [vmem:[%s1694 + $0x20] sm:$0xff] %vm112, %v1687
    %1700 = vst.msk [vmem:[%s1694 + $0x28] sm:$0xff] %vm112, %v1689
    %1701 = vst.msk [vmem:[%s1694 + $0x30] sm:$0xff] %vm112, %v1691
    %1702 = vst.msk [vmem:[%s1694 + $0x38] sm:$0xff] %vm112, %v1693
    %s1703 = scalar_lea.vmem %s127, 1 [#allocation2]
    %v1704 = vld [vmem:[%s1703] ss:$2 sm:$0xff]
    %s1705 = scalar_lea.vmem %s127, 49 [#allocation2]
    %v1706 = vld [vmem:[%s1705] ss:$2 sm:$0xff]
    %s1707 = scalar_lea.vmem %s127, 97 [#allocation2]
    %v1708 = vld [vmem:[%s1707] ss:$2 sm:$0xff]
    %s1709 = scalar_lea.vmem %s127, 145 [#allocation2]
    %v1710 = vld [vmem:[%s1709] ss:$2 sm:$0xff]
    %s1711 = scalar_lea.vmem %s127, 193 [#allocation2]
    %v1712 = vld [vmem:[%s1711] ss:$2 sm:$0xff]
    %s1713 = scalar_lea.vmem %s127, 241 [#allocation2]
    %v1714 = vld [vmem:[%s1713] ss:$2 sm:$0xff]
    %s1715 = scalar_lea.vmem %s127, 289 [#allocation2]
    %v1716 = vld [vmem:[%s1715] ss:$2 sm:$0xff]
    %s1717 = scalar_lea.vmem %s127, 337 [#allocation2]
    %v1718 = vld [vmem:[%s1717] ss:$2 sm:$0xff]
    %1727 = vrot.lane.b32.xlu0 %v1704, 4
    %v1728 = vpop.permute.xlu0 %1727
    %1729 = vrot.lane.b32.xlu0 %v1706, 4
    %v1730 = vpop.permute.xlu0 %1729
    %1731 = vrot.lane.b32.xlu0 %v1708, 4
    %v1732 = vpop.permute.xlu0 %1731
    %1733 = vrot.lane.b32.xlu0 %v1710, 4
    %v1734 = vpop.permute.xlu0 %1733
    %1735 = vrot.lane.b32.xlu0 %v1712, 4
    %v1736 = vpop.permute.xlu0 %1735
    %1737 = vrot.lane.b32.xlu0 %v1714, 4
    %v1738 = vpop.permute.xlu0 %1737
    %1739 = vrot.lane.b32.xlu0 %v1716, 4
    %v1740 = vpop.permute.xlu0 %1739
    %1741 = vrot.lane.b32.xlu0 %v1718, 4
    %v1742 = vpop.permute.xlu0 %1741
    %1751 = vst.msk [vmem:[%s1694] sm:$0xff] %vm360, %v1728
    %1752 = vst.msk [vmem:[%s1694 + $0x8] sm:$0xff] %vm360, %v1730
    %1753 = vst.msk [vmem:[%s1694 + $0x10] sm:$0xff] %vm360, %v1732
    %1754 = vst.msk [vmem:[%s1694 + $0x18] sm:$0xff] %vm360, %v1734
    %1755 = vst.msk [vmem:[%s1694 + $0x20] sm:$0xff] %vm360, %v1736
    %1756 = vst.msk [vmem:[%s1694 + $0x28] sm:$0xff] %vm360, %v1738
    %1757 = vst.msk [vmem:[%s1694 + $0x30] sm:$0xff] %vm360, %v1740
    %1758 = vst.msk [vmem:[%s1694 + $0x38] sm:$0xff] %vm360, %v1742
    %s1759 = scalar_lea.vmem %s127, 2 [#allocation2]
    %v1760 = vld [vmem:[%s1759] ss:$2 sm:$0xff]
    %s1761 = scalar_lea.vmem %s127, 50 [#allocation2]
    %v1762 = vld [vmem:[%s1761] ss:$2 sm:$0xff]
    %s1763 = scalar_lea.vmem %s127, 98 [#allocation2]
    %v1764 = vld [vmem:[%s1763] ss:$2 sm:$0xff]
    %s1765 = scalar_lea.vmem %s127, 146 [#allocation2]
    %v1766 = vld [vmem:[%s1765] ss:$2 sm:$0xff]
    %s1767 = scalar_lea.vmem %s127, 194 [#allocation2]
    %v1768 = vld [vmem:[%s1767] ss:$2 sm:$0xff]
    %s1769 = scalar_lea.vmem %s127, 242 [#allocation2]
    %v1770 = vld [vmem:[%s1769] ss:$2 sm:$0xff]
    %s1771 = scalar_lea.vmem %s127, 290 [#allocation2]
    %v1772 = vld [vmem:[%s1771] ss:$2 sm:$0xff]
    %s1773 = scalar_lea.vmem %s127, 338 [#allocation2]
    %v1774 = vld [vmem:[%s1773] ss:$2 sm:$0xff]
    %1783 = vrot.lane.b32.xlu0 %v1760, 8
    %v1784 = vpop.permute.xlu0 %1783
    %1785 = vrot.lane.b32.xlu0 %v1762, 8
    %v1786 = vpop.permute.xlu0 %1785
    %1787 = vrot.lane.b32.xlu0 %v1764, 8
    %v1788 = vpop.permute.xlu0 %1787
    %1789 = vrot.lane.b32.xlu0 %v1766, 8
    %v1790 = vpop.permute.xlu0 %1789
    %1791 = vrot.lane.b32.xlu0 %v1768, 8
    %v1792 = vpop.permute.xlu0 %1791
    %1793 = vrot.lane.b32.xlu0 %v1770, 8
    %v1794 = vpop.permute.xlu0 %1793
    %1795 = vrot.lane.b32.xlu0 %v1772, 8
    %v1796 = vpop.permute.xlu0 %1795
    %1797 = vrot.lane.b32.xlu0 %v1774, 8
    %v1798 = vpop.permute.xlu0 %1797
    %1807 = vst.msk [vmem:[%s1694] sm:$0xff] %vm417, %v1784
    %1808 = vst.msk [vmem:[%s1694 + $0x8] sm:$0xff] %vm417, %v1786
    %1809 = vst.msk [vmem:[%s1694 + $0x10] sm:$0xff] %vm417, %v1788
    %1810 = vst.msk [vmem:[%s1694 + $0x18] sm:$0xff] %vm417, %v1790
    %1811 = vst.msk [vmem:[%s1694 + $0x20] sm:$0xff] %vm417, %v1792
    %1812 = vst.msk [vmem:[%s1694 + $0x28] sm:$0xff] %vm417, %v1794
    %1813 = vst.msk [vmem:[%s1694 + $0x30] sm:$0xff] %vm417, %v1796
    %1814 = vst.msk [vmem:[%s1694 + $0x38] sm:$0xff] %vm417, %v1798
    %s1815 = scalar_lea.vmem %s127, 3 [#allocation2]
    %v1816 = vld [vmem:[%s1815] ss:$2 sm:$0xff]
    %s1817 = scalar_lea.vmem %s127, 51 [#allocation2]
    %v1818 = vld [vmem:[%s1817] ss:$2 sm:$0xff]
    %s1819 = scalar_lea.vmem %s127, 99 [#allocation2]
    %v1820 = vld [vmem:[%s1819] ss:$2 sm:$0xff]
    %s1821 = scalar_lea.vmem %s127, 147 [#allocation2]
    %v1822 = vld [vmem:[%s1821] ss:$2 sm:$0xff]
    %s1823 = scalar_lea.vmem %s127, 195 [#allocation2]
    %v1824 = vld [vmem:[%s1823] ss:$2 sm:$0xff]
    %s1825 = scalar_lea.vmem %s127, 243 [#allocation2]
    %v1826 = vld [vmem:[%s1825] ss:$2 sm:$0xff]
    %s1827 = scalar_lea.vmem %s127, 291 [#allocation2]
    %v1828 = vld [vmem:[%s1827] ss:$2 sm:$0xff]
    %s1829 = scalar_lea.vmem %s127, 339 [#allocation2]
    %v1830 = vld [vmem:[%s1829] ss:$2 sm:$0xff]
    %1839 = vrot.lane.b32.xlu0 %v1816, 12
    %v1840 = vpop.permute.xlu0 %1839
    %1841 = vrot.lane.b32.xlu0 %v1818, 12
    %v1842 = vpop.permute.xlu0 %1841
    %1843 = vrot.lane.b32.xlu0 %v1820, 12
    %v1844 = vpop.permute.xlu0 %1843
    %1845 = vrot.lane.b32.xlu0 %v1822, 12
    %v1846 = vpop.permute.xlu0 %1845
    %1847 = vrot.lane.b32.xlu0 %v1824, 12
    %v1848 = vpop.permute.xlu0 %1847
    %1849 = vrot.lane.b32.xlu0 %v1826, 12
    %v1850 = vpop.permute.xlu0 %1849
    %1851 = vrot.lane.b32.xlu0 %v1828, 12
    %v1852 = vpop.permute.xlu0 %1851
    %1853 = vrot.lane.b32.xlu0 %v1830, 12
    %v1854 = vpop.permute.xlu0 %1853
    %1863 = vst.msk [vmem:[%s1694] sm:$0xff] %vm474, %v1840
    %1864 = vst.msk [vmem:[%s1694 + $0x8] sm:$0xff] %vm474, %v1842
    %1865 = vst.msk [vmem:[%s1694 + $0x10] sm:$0xff] %vm474, %v1844
    %1866 = vst.msk [vmem:[%s1694 + $0x18] sm:$0xff] %vm474, %v1846
    %1867 = vst.msk [vmem:[%s1694 + $0x20] sm:$0xff] %vm474, %v1848
    %1868 = vst.msk [vmem:[%s1694 + $0x28] sm:$0xff] %vm474, %v1850
    %1869 = vst.msk [vmem:[%s1694 + $0x30] sm:$0xff] %vm474, %v1852
    %1870 = vst.msk [vmem:[%s1694 + $0x38] sm:$0xff] %vm474, %v1854
    %s1871 = scalar_lea.vmem %s127, 4 [#allocation2]
    %v1872 = vld [vmem:[%s1871] ss:$2 sm:$0xff]
    %s1873 = scalar_lea.vmem %s127, 52 [#allocation2]
    %v1874 = vld [vmem:[%s1873] ss:$2 sm:$0xff]
    %s1875 = scalar_lea.vmem %s127, 100 [#allocation2]
    %v1876 = vld [vmem:[%s1875] ss:$2 sm:$0xff]
    %s1877 = scalar_lea.vmem %s127, 148 [#allocation2]
    %v1878 = vld [vmem:[%s1877] ss:$2 sm:$0xff]
    %s1879 = scalar_lea.vmem %s127, 196 [#allocation2]
    %v1880 = vld [vmem:[%s1879] ss:$2 sm:$0xff]
    %s1881 = scalar_lea.vmem %s127, 244 [#allocation2]
    %v1882 = vld [vmem:[%s1881] ss:$2 sm:$0xff]
    %s1883 = scalar_lea.vmem %s127, 292 [#allocation2]
    %v1884 = vld [vmem:[%s1883] ss:$2 sm:$0xff]
    %s1885 = scalar_lea.vmem %s127, 340 [#allocation2]
    %v1886 = vld [vmem:[%s1885] ss:$2 sm:$0xff]
    %1895 = vrot.lane.b32.xlu0 %v1872, 16
    %v1896 = vpop.permute.xlu0 %1895
    %1897 = vrot.lane.b32.xlu0 %v1874, 16
    %v1898 = vpop.permute.xlu0 %1897
    %1899 = vrot.lane.b32.xlu0 %v1876, 16
    %v1900 = vpop.permute.xlu0 %1899
    %1901 = vrot.lane.b32.xlu0 %v1878, 16
    %v1902 = vpop.permute.xlu0 %1901
    %1903 = vrot.lane.b32.xlu0 %v1880, 16
    %v1904 = vpop.permute.xlu0 %1903
    %1905 = vrot.lane.b32.xlu0 %v1882, 16
    %v1906 = vpop.permute.xlu0 %1905
    %1907 = vrot.lane.b32.xlu0 %v1884, 16
    %v1908 = vpop.permute.xlu0 %1907
    %1909 = vrot.lane.b32.xlu0 %v1886, 16
    %v1910 = vpop.permute.xlu0 %1909
    %1919 = vst.msk [vmem:[%s1694] sm:$0xff] %vm531, %v1896
    %1920 = vst.msk [vmem:[%s1694 + $0x8] sm:$0xff] %vm531, %v1898
    %1921 = vst.msk [vmem:[%s1694 + $0x10] sm:$0xff] %vm531, %v1900
    %1922 = vst.msk [vmem:[%s1694 + $0x18] sm:$0xff] %vm531, %v1902
    %1923 = vst.msk [vmem:[%s1694 + $0x20] sm:$0xff] %vm531, %v1904
    %1924 = vst.msk [vmem:[%s1694 + $0x28] sm:$0xff] %vm531, %v1906
    %1925 = vst.msk [vmem:[%s1694 + $0x30] sm:$0xff] %vm531, %v1908
    %1926 = vst.msk [vmem:[%s1694 + $0x38] sm:$0xff] %vm531, %v1910
    %s1927 = scalar_lea.vmem [#allocation2], 504
    %v1928 = vld [vmem:[%s1927] ss:$2 sm:$0xff]
    %s1929 = scalar_lea.vmem %s1927, 48 [#allocation2]
    %v1930 = vld [vmem:[%s1929] ss:$2 sm:$0xff]
    %s1931 = scalar_lea.vmem %s1927, 96 [#allocation2]
    %v1932 = vld [vmem:[%s1931] ss:$2 sm:$0xff]
    %s1933 = scalar_lea.vmem %s1927, 144 [#allocation2]
    %v1934 = vld [vmem:[%s1933] ss:$2 sm:$0xff]
    %s1935 = scalar_lea.vmem %s1927, 192 [#allocation2]
    %v1936 = vld [vmem:[%s1935] ss:$2 sm:$0xff]
    %s1937 = scalar_lea.vmem %s1927, 240 [#allocation2]
    %v1938 = vld [vmem:[%s1937] ss:$2 sm:$0xff]
    %s1939 = scalar_lea.vmem %s1927, 288 [#allocation2]
    %v1940 = vld [vmem:[%s1939] ss:$2 sm:$0xff]
    %s1941 = scalar_lea.vmem %s1927, 336 [#allocation2]
    %v1942 = vld [vmem:[%s1941] ss:$2 sm:$0xff]
    %1951 = vrot.lane.b32.xlu0 %v1928, 20
    %v1952 = vpop.permute.xlu0 %1951
    %1953 = vrot.lane.b32.xlu0 %v1930, 20
    %v1954 = vpop.permute.xlu0 %1953
    %1955 = vrot.lane.b32.xlu0 %v1932, 20
    %v1956 = vpop.permute.xlu0 %1955
    %1957 = vrot.lane.b32.xlu0 %v1934, 20
    %v1958 = vpop.permute.xlu0 %1957
    %1959 = vrot.lane.b32.xlu0 %v1936, 20
    %v1960 = vpop.permute.xlu0 %1959
    %1961 = vrot.lane.b32.xlu0 %v1938, 20
    %v1962 = vpop.permute.xlu0 %1961
    %1963 = vrot.lane.b32.xlu0 %v1940, 20
    %v1964 = vpop.permute.xlu0 %1963
    %1965 = vrot.lane.b32.xlu0 %v1942, 20
    %v1966 = vpop.permute.xlu0 %1965
    %1975 = vst.msk [vmem:[%s1694] sm:$0xff] %vm588, %v1952
    %1976 = vst.msk [vmem:[%s1694 + $0x8] sm:$0xff] %vm588, %v1954
    %1977 = vst.msk [vmem:[%s1694 + $0x10] sm:$0xff] %vm588, %v1956
    %1978 = vst.msk [vmem:[%s1694 + $0x18] sm:$0xff] %vm588, %v1958
    %1979 = vst.msk [vmem:[%s1694 + $0x20] sm:$0xff] %vm588, %v1960
    %1980 = vst.msk [vmem:[%s1694 + $0x28] sm:$0xff] %vm588, %v1962
    %1981 = vst.msk [vmem:[%s1694 + $0x30] sm:$0xff] %vm588, %v1964
    %1982 = vst.msk [vmem:[%s1694 + $0x38] sm:$0xff] %vm588, %v1966
    %s1983 = scalar_lea.vmem %s1927, 1 [#allocation2]
    %v1984 = vld [vmem:[%s1983] ss:$2 sm:$0xff]
    %s1985 = scalar_lea.vmem %s1927, 49 [#allocation2]
    %v1986 = vld [vmem:[%s1985] ss:$2 sm:$0xff]
    %s1987 = scalar_lea.vmem %s1927, 97 [#allocation2]
    %v1988 = vld [vmem:[%s1987] ss:$2 sm:$0xff]
    %s1989 = scalar_lea.vmem %s1927, 145 [#allocation2]
    %v1990 = vld [vmem:[%s1989] ss:$2 sm:$0xff]
    %s1991 = scalar_lea.vmem %s1927, 193 [#allocation2]
    %v1992 = vld [vmem:[%s1991] ss:$2 sm:$0xff]
    %s1993 = scalar_lea.vmem %s1927, 241 [#allocation2]
    %v1994 = vld [vmem:[%s1993] ss:$2 sm:$0xff]
    %s1995 = scalar_lea.vmem %s1927, 289 [#allocation2]
    %v1996 = vld [vmem:[%s1995] ss:$2 sm:$0xff]
    %s1997 = scalar_lea.vmem %s1927, 337 [#allocation2]
    %v1998 = vld [vmem:[%s1997] ss:$2 sm:$0xff]
    %2007 = vrot.lane.b32.xlu0 %v1984, 24
    %v2008 = vpop.permute.xlu0 %2007
    %2009 = vrot.lane.b32.xlu0 %v1986, 24
    %v2010 = vpop.permute.xlu0 %2009
    %2011 = vrot.lane.b32.xlu0 %v1988, 24
    %v2012 = vpop.permute.xlu0 %2011
    %2013 = vrot.lane.b32.xlu0 %v1990, 24
    %v2014 = vpop.permute.xlu0 %2013
    %2015 = vrot.lane.b32.xlu0 %v1992, 24
    %v2016 = vpop.permute.xlu0 %2015
    %2017 = vrot.lane.b32.xlu0 %v1994, 24
    %v2018 = vpop.permute.xlu0 %2017
    %2019 = vrot.lane.b32.xlu0 %v1996, 24
    %v2020 = vpop.permute.xlu0 %2019
    %2021 = vrot.lane.b32.xlu0 %v1998, 24
    %v2022 = vpop.permute.xlu0 %2021
    %2031 = vst.msk [vmem:[%s1694] sm:$0xff] %vm645, %v2008
    %2032 = vst.msk [vmem:[%s1694 + $0x8] sm:$0xff] %vm645, %v2010
    %2033 = vst.msk [vmem:[%s1694 + $0x10] sm:$0xff] %vm645, %v2012
    %2034 = vst.msk [vmem:[%s1694 + $0x18] sm:$0xff] %vm645, %v2014
    %2035 = vst.msk [vmem:[%s1694 + $0x20] sm:$0xff] %vm645, %v2016
    %2036 = vst.msk [vmem:[%s1694 + $0x28] sm:$0xff] %vm645, %v2018
    %2037 = vst.msk [vmem:[%s1694 + $0x30] sm:$0xff] %vm645, %v2020
    %2038 = vst.msk [vmem:[%s1694 + $0x38] sm:$0xff] %vm645, %v2022
    %s2039 = scalar_lea.vmem %s1927, 2 [#allocation2]
    %v2040 = vld [vmem:[%s2039] ss:$2 sm:$0xff]
    %s2041 = scalar_lea.vmem %s1927, 50 [#allocation2]
    %v2042 = vld [vmem:[%s2041] ss:$2 sm:$0xff]
    %s2043 = scalar_lea.vmem %s1927, 98 [#allocation2]
    %v2044 = vld [vmem:[%s2043] ss:$2 sm:$0xff]
    %s2045 = scalar_lea.vmem %s1927, 146 [#allocation2]
    %v2046 = vld [vmem:[%s2045] ss:$2 sm:$0xff]
    %s2047 = scalar_lea.vmem %s1927, 194 [#allocation2]
    %v2048 = vld [vmem:[%s2047] ss:$2 sm:$0xff]
    %s2049 = scalar_lea.vmem %s1927, 242 [#allocation2]
    %v2050 = vld [vmem:[%s2049] ss:$2 sm:$0xff]
    %s2051 = scalar_lea.vmem %s1927, 290 [#allocation2]
    %v2052 = vld [vmem:[%s2051] ss:$2 sm:$0xff]
    %s2053 = scalar_lea.vmem %s1927, 338 [#allocation2]
    %v2054 = vld [vmem:[%s2053] ss:$2 sm:$0xff]
    %2063 = vrot.lane.b32.xlu0 %v2040, 28
    %v2064 = vpop.permute.xlu0 %2063
    %2065 = vrot.lane.b32.xlu0 %v2042, 28
    %v2066 = vpop.permute.xlu0 %2065
    %2067 = vrot.lane.b32.xlu0 %v2044, 28
    %v2068 = vpop.permute.xlu0 %2067
    %2069 = vrot.lane.b32.xlu0 %v2046, 28
    %v2070 = vpop.permute.xlu0 %2069
    %2071 = vrot.lane.b32.xlu0 %v2048, 28
    %v2072 = vpop.permute.xlu0 %2071
    %2073 = vrot.lane.b32.xlu0 %v2050, 28
    %v2074 = vpop.permute.xlu0 %2073
    %2075 = vrot.lane.b32.xlu0 %v2052, 28
    %v2076 = vpop.permute.xlu0 %2075
    %2077 = vrot.lane.b32.xlu0 %v2054, 28
    %v2078 = vpop.permute.xlu0 %2077
    %2087 = vst.msk [vmem:[%s1694] sm:$0xff] %vm702, %v2064
    %2088 = vst.msk [vmem:[%s1694 + $0x8] sm:$0xff] %vm702, %v2066
    %2089 = vst.msk [vmem:[%s1694 + $0x10] sm:$0xff] %vm702, %v2068
    %2090 = vst.msk [vmem:[%s1694 + $0x18] sm:$0xff] %vm702, %v2070
    %2091 = vst.msk [vmem:[%s1694 + $0x20] sm:$0xff] %vm702, %v2072
    %2092 = vst.msk [vmem:[%s1694 + $0x28] sm:$0xff] %vm702, %v2074
    %2093 = vst.msk [vmem:[%s1694 + $0x30] sm:$0xff] %vm702, %v2076
    %2094 = vst.msk [vmem:[%s1694 + $0x38] sm:$0xff] %vm702, %v2078
    %s2095 = scalar_lea.vmem %s1927, 3 [#allocation2]
    %v2096 = vld [vmem:[%s2095] ss:$2 sm:$0xff]
    %s2097 = scalar_lea.vmem %s1927, 51 [#allocation2]
    %v2098 = vld [vmem:[%s2097] ss:$2 sm:$0xff]
    %s2099 = scalar_lea.vmem %s1927, 99 [#allocation2]
    %v2100 = vld [vmem:[%s2099] ss:$2 sm:$0xff]
    %s2101 = scalar_lea.vmem %s1927, 147 [#allocation2]
    %v2102 = vld [vmem:[%s2101] ss:$2 sm:$0xff]
    %s2103 = scalar_lea.vmem %s1927, 195 [#allocation2]
    %v2104 = vld [vmem:[%s2103] ss:$2 sm:$0xff]
    %s2105 = scalar_lea.vmem %s1927, 243 [#allocation2]
    %v2106 = vld [vmem:[%s2105] ss:$2 sm:$0xff]
    %s2107 = scalar_lea.vmem %s1927, 291 [#allocation2]
    %v2108 = vld [vmem:[%s2107] ss:$2 sm:$0xff]
    %s2109 = scalar_lea.vmem %s1927, 339 [#allocation2]
    %v2110 = vld [vmem:[%s2109] ss:$2 sm:$0xff]
    %2119 = vrot.lane.b32.xlu0 %v2096, 32
    %v2120 = vpop.permute.xlu0 %2119
    %2121 = vrot.lane.b32.xlu0 %v2098, 32
    %v2122 = vpop.permute.xlu0 %2121
    %2123 = vrot.lane.b32.xlu0 %v2100, 32
    %v2124 = vpop.permute.xlu0 %2123
    %2125 = vrot.lane.b32.xlu0 %v2102, 32
    %v2126 = vpop.permute.xlu0 %2125
    %2127 = vrot.lane.b32.xlu0 %v2104, 32
    %v2128 = vpop.permute.xlu0 %2127
    %2129 = vrot.lane.b32.xlu0 %v2106, 32
    %v2130 = vpop.permute.xlu0 %2129
    %2131 = vrot.lane.b32.xlu0 %v2108, 32
    %v2132 = vpop.permute.xlu0 %2131
    %2133 = vrot.lane.b32.xlu0 %v2110, 32
    %v2134 = vpop.permute.xlu0 %2133
    %2143 = vst.msk [vmem:[%s1694] sm:$0xff] %vm759, %v2120
    %2144 = vst.msk [vmem:[%s1694 + $0x8] sm:$0xff] %vm759, %v2122
    %2145 = vst.msk [vmem:[%s1694 + $0x10] sm:$0xff] %vm759, %v2124
    %2146 = vst.msk [vmem:[%s1694 + $0x18] sm:$0xff] %vm759, %v2126
    %2147 = vst.msk [vmem:[%s1694 + $0x20] sm:$0xff] %vm759, %v2128
    %2148 = vst.msk [vmem:[%s1694 + $0x28] sm:$0xff] %vm759, %v2130
    %2149 = vst.msk [vmem:[%s1694 + $0x30] sm:$0xff] %vm759, %v2132
    %2150 = vst.msk [vmem:[%s1694 + $0x38] sm:$0xff] %vm759, %v2134
    %s2151 = scalar_lea.vmem %s1927, 4 [#allocation2]
    %v2152 = vld [vmem:[%s2151] ss:$2 sm:$0xff]
    %s2153 = scalar_lea.vmem %s1927, 52 [#allocation2]
    %v2154 = vld [vmem:[%s2153] ss:$2 sm:$0xff]
    %s2155 = scalar_lea.vmem %s1927, 100 [#allocation2]
    %v2156 = vld [vmem:[%s2155] ss:$2 sm:$0xff]
    %s2157 = scalar_lea.vmem %s1927, 148 [#allocation2]
    %v2158 = vld [vmem:[%s2157] ss:$2 sm:$0xff]
    %s2159 = scalar_lea.vmem %s1927, 196 [#allocation2]
    %v2160 = vld [vmem:[%s2159] ss:$2 sm:$0xff]
    %s2161 = scalar_lea.vmem %s1927, 244 [#allocation2]
    %v2162 = vld [vmem:[%s2161] ss:$2 sm:$0xff]
    %s2163 = scalar_lea.vmem %s1927, 292 [#allocation2]
    %v2164 = vld [vmem:[%s2163] ss:$2 sm:$0xff]
    %s2165 = scalar_lea.vmem %s1927, 340 [#allocation2]
    %v2166 = vld [vmem:[%s2165] ss:$2 sm:$0xff]
    %2175 = vrot.lane.b32.xlu0 %v2152, 36
    %v2176 = vpop.permute.xlu0 %2175
    %2177 = vrot.lane.b32.xlu0 %v2154, 36
    %v2178 = vpop.permute.xlu0 %2177
    %2179 = vrot.lane.b32.xlu0 %v2156, 36
    %v2180 = vpop.permute.xlu0 %2179
    %2181 = vrot.lane.b32.xlu0 %v2158, 36
    %v2182 = vpop.permute.xlu0 %2181
    %2183 = vrot.lane.b32.xlu0 %v2160, 36
    %v2184 = vpop.permute.xlu0 %2183
    %2185 = vrot.lane.b32.xlu0 %v2162, 36
    %v2186 = vpop.permute.xlu0 %2185
    %2187 = vrot.lane.b32.xlu0 %v2164, 36
    %v2188 = vpop.permute.xlu0 %2187
    %2189 = vrot.lane.b32.xlu0 %v2166, 36
    %v2190 = vpop.permute.xlu0 %2189
    %2199 = vst.msk [vmem:[%s1694] sm:$0xff] %vm816, %v2176
    %2200 = vst.msk [vmem:[%s1694 + $0x8] sm:$0xff] %vm816, %v2178
    %2201 = vst.msk [vmem:[%s1694 + $0x10] sm:$0xff] %vm816, %v2180
    %2202 = vst.msk [vmem:[%s1694 + $0x18] sm:$0xff] %vm816, %v2182
    %2203 = vst.msk [vmem:[%s1694 + $0x20] sm:$0xff] %vm816, %v2184
    %2204 = vst.msk [vmem:[%s1694 + $0x28] sm:$0xff] %vm816, %v2186
    %2205 = vst.msk [vmem:[%s1694 + $0x30] sm:$0xff] %vm816, %v2188
    %2206 = vst.msk [vmem:[%s1694 + $0x38] sm:$0xff] %vm816, %v2190
    %v2207 = vld [vmem:[%s239] ss:$2 sm:$0xff]
    %s2208 = scalar_lea.vmem %s239, 48 [#allocation2]
    %v2209 = vld [vmem:[%s2208] ss:$2 sm:$0xff]
    %s2210 = scalar_lea.vmem %s239, 96 [#allocation2]
    %v2211 = vld [vmem:[%s2210] ss:$2 sm:$0xff]
    %s2212 = scalar_lea.vmem %s239, 144 [#allocation2]
    %v2213 = vld [vmem:[%s2212] ss:$2 sm:$0xff]
    %s2214 = scalar_lea.vmem %s239, 192 [#allocation2]
    %v2215 = vld [vmem:[%s2214] ss:$2 sm:$0xff]
    %s2216 = scalar_lea.vmem %s239, 240 [#allocation2]
    %v2217 = vld [vmem:[%s2216] ss:$2 sm:$0xff]
    %s2218 = scalar_lea.vmem %s239, 288 [#allocation2]
    %v2219 = vld [vmem:[%s2218] ss:$2 sm:$0xff]
    %s2220 = scalar_lea.vmem %s239, 336 [#allocation2]
    %v2221 = vld [vmem:[%s2220] ss:$2 sm:$0xff]
    %2230 = vrot.lane.b32.xlu0 %v2207, 40
    %v2231 = vpop.permute.xlu0 %2230
    %2232 = vrot.lane.b32.xlu0 %v2209, 40
    %v2233 = vpop.permute.xlu0 %2232
    %2234 = vrot.lane.b32.xlu0 %v2211, 40
    %v2235 = vpop.permute.xlu0 %2234
    %2236 = vrot.lane.b32.xlu0 %v2213, 40
    %v2237 = vpop.permute.xlu0 %2236
    %2238 = vrot.lane.b32.xlu0 %v2215, 40
    %v2239 = vpop.permute.xlu0 %2238
    %2240 = vrot.lane.b32.xlu0 %v2217, 40
    %v2241 = vpop.permute.xlu0 %2240
    %2242 = vrot.lane.b32.xlu0 %v2219, 40
    %v2243 = vpop.permute.xlu0 %2242
    %2244 = vrot.lane.b32.xlu0 %v2221, 40
    %v2245 = vpop.permute.xlu0 %2244
    %2254 = vst.msk [vmem:[%s1694] sm:$0xff] %vm872, %v2231
    %2255 = vst.msk [vmem:[%s1694 + $0x8] sm:$0xff] %vm872, %v2233
    %2256 = vst.msk [vmem:[%s1694 + $0x10] sm:$0xff] %vm872, %v2235
    %2257 = vst.msk [vmem:[%s1694 + $0x18] sm:$0xff] %vm872, %v2237
    %2258 = vst.msk [vmem:[%s1694 + $0x20] sm:$0xff] %vm872, %v2239
    %2259 = vst.msk [vmem:[%s1694 + $0x28] sm:$0xff] %vm872, %v2241
    %2260 = vst.msk [vmem:[%s1694 + $0x30] sm:$0xff] %vm872, %v2243
    %2261 = vst.msk [vmem:[%s1694 + $0x38] sm:$0xff] %vm872, %v2245
    %s2262 = scalar_lea.vmem %s239, 1 [#allocation2]
    %v2263 = vld [vmem:[%s2262] ss:$2 sm:$0xff]
    %s2264 = scalar_lea.vmem %s239, 49 [#allocation2]
    %v2265 = vld [vmem:[%s2264] ss:$2 sm:$0xff]
    %s2266 = scalar_lea.vmem %s239, 97 [#allocation2]
    %v2267 = vld [vmem:[%s2266] ss:$2 sm:$0xff]
    %s2268 = scalar_lea.vmem %s239, 145 [#allocation2]
    %v2269 = vld [vmem:[%s2268] ss:$2 sm:$0xff]
    %s2270 = scalar_lea.vmem %s239, 193 [#allocation2]
    %v2271 = vld [vmem:[%s2270] ss:$2 sm:$0xff]
    %s2272 = scalar_lea.vmem %s239, 241 [#allocation2]
    %v2273 = vld [vmem:[%s2272] ss:$2 sm:$0xff]
    %s2274 = scalar_lea.vmem %s239, 289 [#allocation2]
    %v2275 = vld [vmem:[%s2274] ss:$2 sm:$0xff]
    %s2276 = scalar_lea.vmem %s239, 337 [#allocation2]
    %v2277 = vld [vmem:[%s2276] ss:$2 sm:$0xff]
    %2286 = vrot.lane.b32.xlu0 %v2263, 44
    %v2287 = vpop.permute.xlu0 %2286
    %2288 = vrot.lane.b32.xlu0 %v2265, 44
    %v2289 = vpop.permute.xlu0 %2288
    %2290 = vrot.lane.b32.xlu0 %v2267, 44
    %v2291 = vpop.permute.xlu0 %2290
    %2292 = vrot.lane.b32.xlu0 %v2269, 44
    %v2293 = vpop.permute.xlu0 %2292
    %2294 = vrot.lane.b32.xlu0 %v2271, 44
    %v2295 = vpop.permute.xlu0 %2294
    %2296 = vrot.lane.b32.xlu0 %v2273, 44
    %v2297 = vpop.permute.xlu0 %2296
    %2298 = vrot.lane.b32.xlu0 %v2275, 44
    %v2299 = vpop.permute.xlu0 %2298
    %2300 = vrot.lane.b32.xlu0 %v2277, 44
    %v2301 = vpop.permute.xlu0 %2300
    %2310 = vst.msk [vmem:[%s1694] sm:$0xff] %vm929, %v2287
    %2311 = vst.msk [vmem:[%s1694 + $0x8] sm:$0xff] %vm929, %v2289
    %2312 = vst.msk [vmem:[%s1694 + $0x10] sm:$0xff] %vm929, %v2291
    %2313 = vst.msk [vmem:[%s1694 + $0x18] sm:$0xff] %vm929, %v2293
    %2314 = vst.msk [vmem:[%s1694 + $0x20] sm:$0xff] %vm929, %v2295
    %2315 = vst.msk [vmem:[%s1694 + $0x28] sm:$0xff] %vm929, %v2297
    %2316 = vst.msk [vmem:[%s1694 + $0x30] sm:$0xff] %vm929, %v2299
    %2317 = vst.msk [vmem:[%s1694 + $0x38] sm:$0xff] %vm929, %v2301
    %s2318 = scalar_lea.vmem %s239, 2 [#allocation2]
    %v2319 = vld [vmem:[%s2318] ss:$2 sm:$0xff]
    %s2320 = scalar_lea.vmem %s239, 50 [#allocation2]
    %v2321 = vld [vmem:[%s2320] ss:$2 sm:$0xff]
    %s2322 = scalar_lea.vmem %s239, 98 [#allocation2]
    %v2323 = vld [vmem:[%s2322] ss:$2 sm:$0xff]
    %s2324 = scalar_lea.vmem %s239, 146 [#allocation2]
    %v2325 = vld [vmem:[%s2324] ss:$2 sm:$0xff]
    %s2326 = scalar_lea.vmem %s239, 194 [#allocation2]
    %v2327 = vld [vmem:[%s2326] ss:$2 sm:$0xff]
    %s2328 = scalar_lea.vmem %s239, 242 [#allocation2]
    %v2329 = vld [vmem:[%s2328] ss:$2 sm:$0xff]
    %s2330 = scalar_lea.vmem %s239, 290 [#allocation2]
    %v2331 = vld [vmem:[%s2330] ss:$2 sm:$0xff]
    %s2332 = scalar_lea.vmem %s239, 338 [#allocation2]
    %v2333 = vld [vmem:[%s2332] ss:$2 sm:$0xff]
    %2342 = vrot.lane.b32.xlu0 %v2319, 48
    %v2343 = vpop.permute.xlu0 %2342
    %2344 = vrot.lane.b32.xlu0 %v2321, 48
    %v2345 = vpop.permute.xlu0 %2344
    %2346 = vrot.lane.b32.xlu0 %v2323, 48
    %v2347 = vpop.permute.xlu0 %2346
    %2348 = vrot.lane.b32.xlu0 %v2325, 48
    %v2349 = vpop.permute.xlu0 %2348
    %2350 = vrot.lane.b32.xlu0 %v2327, 48
    %v2351 = vpop.permute.xlu0 %2350
    %2352 = vrot.lane.b32.xlu0 %v2329, 48
    %v2353 = vpop.permute.xlu0 %2352
    %2354 = vrot.lane.b32.xlu0 %v2331, 48
    %v2355 = vpop.permute.xlu0 %2354
    %2356 = vrot.lane.b32.xlu0 %v2333, 48
    %v2357 = vpop.permute.xlu0 %2356
    %2366 = vst.msk [vmem:[%s1694] sm:$0xff] %vm986, %v2343
    %2367 = vst.msk [vmem:[%s1694 + $0x8] sm:$0xff] %vm986, %v2345
    %2368 = vst.msk [vmem:[%s1694 + $0x10] sm:$0xff] %vm986, %v2347
    %2369 = vst.msk [vmem:[%s1694 + $0x18] sm:$0xff] %vm986, %v2349
    %2370 = vst.msk [vmem:[%s1694 + $0x20] sm:$0xff] %vm986, %v2351
    %2371 = vst.msk [vmem:[%s1694 + $0x28] sm:$0xff] %vm986, %v2353
    %2372 = vst.msk [vmem:[%s1694 + $0x30] sm:$0xff] %vm986, %v2355
    %2373 = vst.msk [vmem:[%s1694 + $0x38] sm:$0xff] %vm986, %v2357
    %s2374 = scalar_lea.vmem %s239, 3 [#allocation2]
    %v2375 = vld [vmem:[%s2374] ss:$2 sm:$0xff]
    %s2376 = scalar_lea.vmem %s239, 51 [#allocation2]
    %v2377 = vld [vmem:[%s2376] ss:$2 sm:$0xff]
    %s2378 = scalar_lea.vmem %s239, 99 [#allocation2]
    %v2379 = vld [vmem:[%s2378] ss:$2 sm:$0xff]
    %s2380 = scalar_lea.vmem %s239, 147 [#allocation2]
    %v2381 = vld [vmem:[%s2380] ss:$2 sm:$0xff]
    %s2382 = scalar_lea.vmem %s239, 195 [#allocation2]
    %v2383 = vld [vmem:[%s2382] ss:$2 sm:$0xff]
    %s2384 = scalar_lea.vmem %s239, 243 [#allocation2]
    %v2385 = vld [vmem:[%s2384] ss:$2 sm:$0xff]
    %s2386 = scalar_lea.vmem %s239, 291 [#allocation2]
    %v2387 = vld [vmem:[%s2386] ss:$2 sm:$0xff]
    %s2388 = scalar_lea.vmem %s239, 339 [#allocation2]
    %v2389 = vld [vmem:[%s2388] ss:$2 sm:$0xff]
    %2398 = vrot.lane.b32.xlu0 %v2375, 52
    %v2399 = vpop.permute.xlu0 %2398
    %2400 = vrot.lane.b32.xlu0 %v2377, 52
    %v2401 = vpop.permute.xlu0 %2400
    %2402 = vrot.lane.b32.xlu0 %v2379, 52
    %v2403 = vpop.permute.xlu0 %2402
    %2404 = vrot.lane.b32.xlu0 %v2381, 52
    %v2405 = vpop.permute.xlu0 %2404
    %2406 = vrot.lane.b32.xlu0 %v2383, 52
    %v2407 = vpop.permute.xlu0 %2406
    %2408 = vrot.lane.b32.xlu0 %v2385, 52
    %v2409 = vpop.permute.xlu0 %2408
    %2410 = vrot.lane.b32.xlu0 %v2387, 52
    %v2411 = vpop.permute.xlu0 %2410
    %2412 = vrot.lane.b32.xlu0 %v2389, 52
    %v2413 = vpop.permute.xlu0 %2412
    %2422 = vst.msk [vmem:[%s1694] sm:$0xff] %vm1043, %v2399
    %2423 = vst.msk [vmem:[%s1694 + $0x8] sm:$0xff] %vm1043, %v2401
    %2424 = vst.msk [vmem:[%s1694 + $0x10] sm:$0xff] %vm1043, %v2403
    %2425 = vst.msk [vmem:[%s1694 + $0x18] sm:$0xff] %vm1043, %v2405
    %2426 = vst.msk [vmem:[%s1694 + $0x20] sm:$0xff] %vm1043, %v2407
    %2427 = vst.msk [vmem:[%s1694 + $0x28] sm:$0xff] %vm1043, %v2409
    %2428 = vst.msk [vmem:[%s1694 + $0x30] sm:$0xff] %vm1043, %v2411
    %2429 = vst.msk [vmem:[%s1694 + $0x38] sm:$0xff] %vm1043, %v2413
    %s2430 = scalar_lea.vmem %s239, 4 [#allocation2]
    %v2431 = vld [vmem:[%s2430] ss:$2 sm:$0xff]
    %s2432 = scalar_lea.vmem %s239, 52 [#allocation2]
    %v2433 = vld [vmem:[%s2432] ss:$2 sm:$0xff]
    %s2434 = scalar_lea.vmem %s239, 100 [#allocation2]
    %v2435 = vld [vmem:[%s2434] ss:$2 sm:$0xff]
    %s2436 = scalar_lea.vmem %s239, 148 [#allocation2]
    %v2437 = vld [vmem:[%s2436] ss:$2 sm:$0xff]
    %s2438 = scalar_lea.vmem %s239, 196 [#allocation2]
    %v2439 = vld [vmem:[%s2438] ss:$2 sm:$0xff]
    %s2440 = scalar_lea.vmem %s239, 244 [#allocation2]
    %v2441 = vld [vmem:[%s2440] ss:$2 sm:$0xff]
    %s2442 = scalar_lea.vmem %s239, 292 [#allocation2]
    %v2443 = vld [vmem:[%s2442] ss:$2 sm:$0xff]
    %s2444 = scalar_lea.vmem %s239, 340 [#allocation2]
    %v2445 = vld [vmem:[%s2444] ss:$2 sm:$0xff]
    %2454 = vrot.lane.b32.xlu0 %v2431, 56
    %v2455 = vpop.permute.xlu0 %2454
    %2456 = vrot.lane.b32.xlu0 %v2433, 56
    %v2457 = vpop.permute.xlu0 %2456
    %2458 = vrot.lane.b32.xlu0 %v2435, 56
    %v2459 = vpop.permute.xlu0 %2458
    %2460 = vrot.lane.b32.xlu0 %v2437, 56
    %v2461 = vpop.permute.xlu0 %2460
    %2462 = vrot.lane.b32.xlu0 %v2439, 56
    %v2463 = vpop.permute.xlu0 %2462
    %2464 = vrot.lane.b32.xlu0 %v2441, 56
    %v2465 = vpop.permute.xlu0 %2464
    %2466 = vrot.lane.b32.xlu0 %v2443, 56
    %v2467 = vpop.permute.xlu0 %2466
    %2468 = vrot.lane.b32.xlu0 %v2445, 56
    %v2469 = vpop.permute.xlu0 %2468
    %2478 = vst.msk [vmem:[%s1694] sm:$0xff] %vm1100, %v2455
    %2479 = vst.msk [vmem:[%s1694 + $0x8] sm:$0xff] %vm1100, %v2457
    %2480 = vst.msk [vmem:[%s1694 + $0x10] sm:$0xff] %vm1100, %v2459
    %2481 = vst.msk [vmem:[%s1694 + $0x18] sm:$0xff] %vm1100, %v2461
    %2482 = vst.msk [vmem:[%s1694 + $0x20] sm:$0xff] %vm1100, %v2463
    %2483 = vst.msk [vmem:[%s1694 + $0x28] sm:$0xff] %vm1100, %v2465
    %2484 = vst.msk [vmem:[%s1694 + $0x30] sm:$0xff] %vm1100, %v2467
    %2485 = vst.msk [vmem:[%s1694 + $0x38] sm:$0xff] %vm1100, %v2469
    %s2486 = scalar_lea.vmem [#allocation2], 552
    %v2487 = vld [vmem:[%s2486] ss:$2 sm:$0xff]
    %s2488 = scalar_lea.vmem %s2486, 48 [#allocation2]
    %v2489 = vld [vmem:[%s2488] ss:$2 sm:$0xff]
    %s2490 = scalar_lea.vmem %s2486, 96 [#allocation2]
    %v2491 = vld [vmem:[%s2490] ss:$2 sm:$0xff]
    %s2492 = scalar_lea.vmem %s2486, 144 [#allocation2]
    %v2493 = vld [vmem:[%s2492] ss:$2 sm:$0xff]
    %s2494 = scalar_lea.vmem %s2486, 192 [#allocation2]
    %v2495 = vld [vmem:[%s2494] ss:$2 sm:$0xff]
    %s2496 = scalar_lea.vmem %s2486, 240 [#allocation2]
    %v2497 = vld [vmem:[%s2496] ss:$2 sm:$0xff]
    %s2498 = scalar_lea.vmem %s2486, 288 [#allocation2]
    %v2499 = vld [vmem:[%s2498] ss:$2 sm:$0xff]
    %s2500 = scalar_lea.vmem %s2486, 336 [#allocation2]
    %v2501 = vld [vmem:[%s2500] ss:$2 sm:$0xff]
    %2510 = vrot.lane.b32.xlu0 %v2487, 60
    %v2511 = vpop.permute.xlu0 %2510
    %2512 = vrot.lane.b32.xlu0 %v2489, 60
    %v2513 = vpop.permute.xlu0 %2512
    %2514 = vrot.lane.b32.xlu0 %v2491, 60
    %v2515 = vpop.permute.xlu0 %2514
    %2516 = vrot.lane.b32.xlu0 %v2493, 60
    %v2517 = vpop.permute.xlu0 %2516
    %2518 = vrot.lane.b32.xlu0 %v2495, 60
    %v2519 = vpop.permute.xlu0 %2518
    %2520 = vrot.lane.b32.xlu0 %v2497, 60
    %v2521 = vpop.permute.xlu0 %2520
    %2522 = vrot.lane.b32.xlu0 %v2499, 60
    %v2523 = vpop.permute.xlu0 %2522
    %2524 = vrot.lane.b32.xlu0 %v2501, 60
    %v2525 = vpop.permute.xlu0 %2524
    %2534 = vst.msk [vmem:[%s1694] sm:$0xff] %vm1157, %v2511
    %2535 = vst.msk [vmem:[%s1694 + $0x8] sm:$0xff] %vm1157, %v2513
    %2536 = vst.msk [vmem:[%s1694 + $0x10] sm:$0xff] %vm1157, %v2515
    %2537 = vst.msk [vmem:[%s1694 + $0x18] sm:$0xff] %vm1157, %v2517
    %2538 = vst.msk [vmem:[%s1694 + $0x20] sm:$0xff] %vm1157, %v2519
    %2539 = vst.msk [vmem:[%s1694 + $0x28] sm:$0xff] %vm1157, %v2521
    %2540 = vst.msk [vmem:[%s1694 + $0x30] sm:$0xff] %vm1157, %v2523
    %2541 = vst.msk [vmem:[%s1694 + $0x38] sm:$0xff] %vm1157, %v2525
    %s2542 = scalar_lea.vmem %s2486, 1 [#allocation2]
    %v2543 = vld [vmem:[%s2542] ss:$2 sm:$0xff]
    %s2544 = scalar_lea.vmem %s2486, 49 [#allocation2]
    %v2545 = vld [vmem:[%s2544] ss:$2 sm:$0xff]
    %s2546 = scalar_lea.vmem %s2486, 97 [#allocation2]
    %v2547 = vld [vmem:[%s2546] ss:$2 sm:$0xff]
    %s2548 = scalar_lea.vmem %s2486, 145 [#allocation2]
    %v2549 = vld [vmem:[%s2548] ss:$2 sm:$0xff]
    %s2550 = scalar_lea.vmem %s2486, 193 [#allocation2]
    %v2551 = vld [vmem:[%s2550] ss:$2 sm:$0xff]
    %s2552 = scalar_lea.vmem %s2486, 241 [#allocation2]
    %v2553 = vld [vmem:[%s2552] ss:$2 sm:$0xff]
    %s2554 = scalar_lea.vmem %s2486, 289 [#allocation2]
    %v2555 = vld [vmem:[%s2554] ss:$2 sm:$0xff]
    %s2556 = scalar_lea.vmem %s2486, 337 [#allocation2]
    %v2557 = vld [vmem:[%s2556] ss:$2 sm:$0xff]
    %2566 = vrot.lane.b32.xlu0 %v2543, 64
    %v2567 = vpop.permute.xlu0 %2566
    %2568 = vrot.lane.b32.xlu0 %v2545, 64
    %v2569 = vpop.permute.xlu0 %2568
    %2570 = vrot.lane.b32.xlu0 %v2547, 64
    %v2571 = vpop.permute.xlu0 %2570
    %2572 = vrot.lane.b32.xlu0 %v2549, 64
    %v2573 = vpop.permute.xlu0 %2572
    %2574 = vrot.lane.b32.xlu0 %v2551, 64
    %v2575 = vpop.permute.xlu0 %2574
    %2576 = vrot.lane.b32.xlu0 %v2553, 64
    %v2577 = vpop.permute.xlu0 %2576
    %2578 = vrot.lane.b32.xlu0 %v2555, 64
    %v2579 = vpop.permute.xlu0 %2578
    %2580 = vrot.lane.b32.xlu0 %v2557, 64
    %v2581 = vpop.permute.xlu0 %2580
    %2590 = vst.msk [vmem:[%s1694] sm:$0xff] %vm1214, %v2567
    %2591 = vst.msk [vmem:[%s1694 + $0x8] sm:$0xff] %vm1214, %v2569
    %2592 = vst.msk [vmem:[%s1694 + $0x10] sm:$0xff] %vm1214, %v2571
    %2593 = vst.msk [vmem:[%s1694 + $0x18] sm:$0xff] %vm1214, %v2573
    %2594 = vst.msk [vmem:[%s1694 + $0x20] sm:$0xff] %vm1214, %v2575
    %2595 = vst.msk [vmem:[%s1694 + $0x28] sm:$0xff] %vm1214, %v2577
    %2596 = vst.msk [vmem:[%s1694 + $0x30] sm:$0xff] %vm1214, %v2579
    %2597 = vst.msk [vmem:[%s1694 + $0x38] sm:$0xff] %vm1214, %v2581
    %s2598 = scalar_lea.vmem %s2486, 2 [#allocation2]
    %v2599 = vld [vmem:[%s2598] ss:$2 sm:$0xff]
    %s2600 = scalar_lea.vmem %s2486, 50 [#allocation2]
    %v2601 = vld [vmem:[%s2600] ss:$2 sm:$0xff]
    %s2602 = scalar_lea.vmem %s2486, 98 [#allocation2]
    %v2603 = vld [vmem:[%s2602] ss:$2 sm:$0xff]
    %s2604 = scalar_lea.vmem %s2486, 146 [#allocation2]
    %v2605 = vld [vmem:[%s2604] ss:$2 sm:$0xff]
    %s2606 = scalar_lea.vmem %s2486, 194 [#allocation2]
    %v2607 = vld [vmem:[%s2606] ss:$2 sm:$0xff]
    %s2608 = scalar_lea.vmem %s2486, 242 [#allocation2]
    %v2609 = vld [vmem:[%s2608] ss:$2 sm:$0xff]
    %s2610 = scalar_lea.vmem %s2486, 290 [#allocation2]
    %v2611 = vld [vmem:[%s2610] ss:$2 sm:$0xff]
    %s2612 = scalar_lea.vmem %s2486, 338 [#allocation2]
    %v2613 = vld [vmem:[%s2612] ss:$2 sm:$0xff]
    %2622 = vrot.lane.b32.xlu0 %v2599, 68
    %v2623 = vpop.permute.xlu0 %2622
    %2624 = vrot.lane.b32.xlu0 %v2601, 68
    %v2625 = vpop.permute.xlu0 %2624
    %2626 = vrot.lane.b32.xlu0 %v2603, 68
    %v2627 = vpop.permute.xlu0 %2626
    %2628 = vrot.lane.b32.xlu0 %v2605, 68
    %v2629 = vpop.permute.xlu0 %2628
    %2630 = vrot.lane.b32.xlu0 %v2607, 68
    %v2631 = vpop.permute.xlu0 %2630
    %2632 = vrot.lane.b32.xlu0 %v2609, 68
    %v2633 = vpop.permute.xlu0 %2632
    %2634 = vrot.lane.b32.xlu0 %v2611, 68
    %v2635 = vpop.permute.xlu0 %2634
    %2636 = vrot.lane.b32.xlu0 %v2613, 68
    %v2637 = vpop.permute.xlu0 %2636
    %2646 = vst.msk [vmem:[%s1694] sm:$0xff] %vm1271, %v2623
    %2647 = vst.msk [vmem:[%s1694 + $0x8] sm:$0xff] %vm1271, %v2625
    %2648 = vst.msk [vmem:[%s1694 + $0x10] sm:$0xff] %vm1271, %v2627
    %2649 = vst.msk [vmem:[%s1694 + $0x18] sm:$0xff] %vm1271, %v2629
    %2650 = vst.msk [vmem:[%s1694 + $0x20] sm:$0xff] %vm1271, %v2631
    %2651 = vst.msk [vmem:[%s1694 + $0x28] sm:$0xff] %vm1271, %v2633
    %2652 = vst.msk [vmem:[%s1694 + $0x30] sm:$0xff] %vm1271, %v2635
    %2653 = vst.msk [vmem:[%s1694 + $0x38] sm:$0xff] %vm1271, %v2637
    %s2654 = scalar_lea.vmem %s2486, 3 [#allocation2]
    %v2655 = vld [vmem:[%s2654] ss:$2 sm:$0xff]
    %s2656 = scalar_lea.vmem %s2486, 51 [#allocation2]
    %v2657 = vld [vmem:[%s2656] ss:$2 sm:$0xff]
    %s2658 = scalar_lea.vmem %s2486, 99 [#allocation2]
    %v2659 = vld [vmem:[%s2658] ss:$2 sm:$0xff]
    %s2660 = scalar_lea.vmem %s2486, 147 [#allocation2]
    %v2661 = vld [vmem:[%s2660] ss:$2 sm:$0xff]
    %s2662 = scalar_lea.vmem %s2486, 195 [#allocation2]
    %v2663 = vld [vmem:[%s2662] ss:$2 sm:$0xff]
    %s2664 = scalar_lea.vmem %s2486, 243 [#allocation2]
    %v2665 = vld [vmem:[%s2664] ss:$2 sm:$0xff]
    %s2666 = scalar_lea.vmem %s2486, 291 [#allocation2]
    %v2667 = vld [vmem:[%s2666] ss:$2 sm:$0xff]
    %s2668 = scalar_lea.vmem %s2486, 339 [#allocation2]
    %v2669 = vld [vmem:[%s2668] ss:$2 sm:$0xff]
    %2678 = vrot.lane.b32.xlu0 %v2655, 72
    %v2679 = vpop.permute.xlu0 %2678
    %2680 = vrot.lane.b32.xlu0 %v2657, 72
    %v2681 = vpop.permute.xlu0 %2680
    %2682 = vrot.lane.b32.xlu0 %v2659, 72
    %v2683 = vpop.permute.xlu0 %2682
    %2684 = vrot.lane.b32.xlu0 %v2661, 72
    %v2685 = vpop.permute.xlu0 %2684
    %2686 = vrot.lane.b32.xlu0 %v2663, 72
    %v2687 = vpop.permute.xlu0 %2686
    %2688 = vrot.lane.b32.xlu0 %v2665, 72
    %v2689 = vpop.permute.xlu0 %2688
    %2690 = vrot.lane.b32.xlu0 %v2667, 72
    %v2691 = vpop.permute.xlu0 %2690
    %2692 = vrot.lane.b32.xlu0 %v2669, 72
    %v2693 = vpop.permute.xlu0 %2692
    %2702 = vst.msk [vmem:[%s1694] sm:$0xff] %vm1328, %v2679
    %2703 = vst.msk [vmem:[%s1694 + $0x8] sm:$0xff] %vm1328, %v2681
    %2704 = vst.msk [vmem:[%s1694 + $0x10] sm:$0xff] %vm1328, %v2683
    %2705 = vst.msk [vmem:[%s1694 + $0x18] sm:$0xff] %vm1328, %v2685
    %2706 = vst.msk [vmem:[%s1694 + $0x20] sm:$0xff] %vm1328, %v2687
    %2707 = vst.msk [vmem:[%s1694 + $0x28] sm:$0xff] %vm1328, %v2689
    %2708 = vst.msk [vmem:[%s1694 + $0x30] sm:$0xff] %vm1328, %v2691
    %2709 = vst.msk [vmem:[%s1694 + $0x38] sm:$0xff] %vm1328, %v2693
    %s2710 = scalar_lea.vmem %s2486, 4 [#allocation2]
    %v2711 = vld [vmem:[%s2710] ss:$2 sm:$0xff]
    %s2712 = scalar_lea.vmem %s2486, 52 [#allocation2]
    %v2713 = vld [vmem:[%s2712] ss:$2 sm:$0xff]
    %s2714 = scalar_lea.vmem %s2486, 100 [#allocation2]
    %v2715 = vld [vmem:[%s2714] ss:$2 sm:$0xff]
    %s2716 = scalar_lea.vmem %s2486, 148 [#allocation2]
    %v2717 = vld [vmem:[%s2716] ss:$2 sm:$0xff]
    %s2718 = scalar_lea.vmem %s2486, 196 [#allocation2]
    %v2719 = vld [vmem:[%s2718] ss:$2 sm:$0xff]
    %s2720 = scalar_lea.vmem %s2486, 244 [#allocation2]
    %v2721 = vld [vmem:[%s2720] ss:$2 sm:$0xff]
    %s2722 = scalar_lea.vmem %s2486, 292 [#allocation2]
    %v2723 = vld [vmem:[%s2722] ss:$2 sm:$0xff]
    %s2724 = scalar_lea.vmem %s2486, 340 [#allocation2]
    %v2725 = vld [vmem:[%s2724] ss:$2 sm:$0xff]
    %2734 = vrot.lane.b32.xlu0 %v2711, 76
    %v2735 = vpop.permute.xlu0 %2734
    %2736 = vrot.lane.b32.xlu0 %v2713, 76
    %v2737 = vpop.permute.xlu0 %2736
    %2738 = vrot.lane.b32.xlu0 %v2715, 76
    %v2739 = vpop.permute.xlu0 %2738
    %2740 = vrot.lane.b32.xlu0 %v2717, 76
    %v2741 = vpop.permute.xlu0 %2740
    %2742 = vrot.lane.b32.xlu0 %v2719, 76
    %v2743 = vpop.permute.xlu0 %2742
    %2744 = vrot.lane.b32.xlu0 %v2721, 76
    %v2745 = vpop.permute.xlu0 %2744
    %2746 = vrot.lane.b32.xlu0 %v2723, 76
    %v2747 = vpop.permute.xlu0 %2746
    %2748 = vrot.lane.b32.xlu0 %v2725, 76
    %v2749 = vpop.permute.xlu0 %2748
    %2758 = vst.msk [vmem:[%s1694] sm:$0xff] %vm1385, %v2735
    %2759 = vst.msk [vmem:[%s1694 + $0x8] sm:$0xff] %vm1385, %v2737
    %2760 = vst.msk [vmem:[%s1694 + $0x10] sm:$0xff] %vm1385, %v2739
    %2761 = vst.msk [vmem:[%s1694 + $0x18] sm:$0xff] %vm1385, %v2741
    %2762 = vst.msk [vmem:[%s1694 + $0x20] sm:$0xff] %vm1385, %v2743
    %2763 = vst.msk [vmem:[%s1694 + $0x28] sm:$0xff] %vm1385, %v2745
    %2764 = vst.msk [vmem:[%s1694 + $0x30] sm:$0xff] %vm1385, %v2747
    %2765 = vst.msk [vmem:[%s1694 + $0x38] sm:$0xff] %vm1385, %v2749
    %s2766 = scalar_lea.vmem [#allocation2], 576
    %v2767 = vld [vmem:[%s2766] ss:$2 sm:$0xff]
    %s2768 = scalar_lea.vmem %s2766, 48 [#allocation2]
    %v2769 = vld [vmem:[%s2768] ss:$2 sm:$0xff]
    %s2770 = scalar_lea.vmem %s2766, 96 [#allocation2]
    %v2771 = vld [vmem:[%s2770] ss:$2 sm:$0xff]
    %s2772 = scalar_lea.vmem %s2766, 144 [#allocation2]
    %v2773 = vld [vmem:[%s2772] ss:$2 sm:$0xff]
    %s2774 = scalar_lea.vmem %s2766, 192 [#allocation2]
    %v2775 = vld [vmem:[%s2774] ss:$2 sm:$0xff]
    %s2776 = scalar_lea.vmem %s2766, 240 [#allocation2]
    %v2777 = vld [vmem:[%s2776] ss:$2 sm:$0xff]
    %s2778 = scalar_lea.vmem %s2766, 288 [#allocation2]
    %v2779 = vld [vmem:[%s2778] ss:$2 sm:$0xff]
    %s2780 = scalar_lea.vmem %s2766, 336 [#allocation2]
    %v2781 = vld [vmem:[%s2780] ss:$2 sm:$0xff]
    %2790 = vrot.lane.b32.xlu0 %v2767, 80
    %v2791 = vpop.permute.xlu0 %2790
    %2792 = vrot.lane.b32.xlu0 %v2769, 80
    %v2793 = vpop.permute.xlu0 %2792
    %2794 = vrot.lane.b32.xlu0 %v2771, 80
    %v2795 = vpop.permute.xlu0 %2794
    %2796 = vrot.lane.b32.xlu0 %v2773, 80
    %v2797 = vpop.permute.xlu0 %2796
    %2798 = vrot.lane.b32.xlu0 %v2775, 80
    %v2799 = vpop.permute.xlu0 %2798
    %2800 = vrot.lane.b32.xlu0 %v2777, 80
    %v2801 = vpop.permute.xlu0 %2800
    %2802 = vrot.lane.b32.xlu0 %v2779, 80
    %v2803 = vpop.permute.xlu0 %2802
    %2804 = vrot.lane.b32.xlu0 %v2781, 80
    %v2805 = vpop.permute.xlu0 %2804
    %2814 = vst.msk [vmem:[%s1694] sm:$0xff] %vm1442, %v2791
    %2815 = vst.msk [vmem:[%s1694 + $0x8] sm:$0xff] %vm1442, %v2793
    %2816 = vst.msk [vmem:[%s1694 + $0x10] sm:$0xff] %vm1442, %v2795
    %2817 = vst.msk [vmem:[%s1694 + $0x18] sm:$0xff] %vm1442, %v2797
    %2818 = vst.msk [vmem:[%s1694 + $0x20] sm:$0xff] %vm1442, %v2799
    %2819 = vst.msk [vmem:[%s1694 + $0x28] sm:$0xff] %vm1442, %v2801
    %2820 = vst.msk [vmem:[%s1694 + $0x30] sm:$0xff] %vm1442, %v2803
    %2821 = vst.msk [vmem:[%s1694 + $0x38] sm:$0xff] %vm1442, %v2805
    %s2822 = scalar_lea.vmem %s2766, 1 [#allocation2]
    %v2823 = vld [vmem:[%s2822] ss:$2 sm:$0xff]
    %s2824 = scalar_lea.vmem %s2766, 49 [#allocation2]
    %v2825 = vld [vmem:[%s2824] ss:$2 sm:$0xff]
    %s2826 = scalar_lea.vmem %s2766, 97 [#allocation2]
    %v2827 = vld [vmem:[%s2826] ss:$2 sm:$0xff]
    %s2828 = scalar_lea.vmem %s2766, 145 [#allocation2]
    %v2829 = vld [vmem:[%s2828] ss:$2 sm:$0xff]
    %s2830 = scalar_lea.vmem %s2766, 193 [#allocation2]
    %v2831 = vld [vmem:[%s2830] ss:$2 sm:$0xff]
    %s2832 = scalar_lea.vmem %s2766, 241 [#allocation2]
    %v2833 = vld [vmem:[%s2832] ss:$2 sm:$0xff]
    %s2834 = scalar_lea.vmem %s2766, 289 [#allocation2]
    %v2835 = vld [vmem:[%s2834] ss:$2 sm:$0xff]
    %s2836 = scalar_lea.vmem %s2766, 337 [#allocation2]
    %v2837 = vld [vmem:[%s2836] ss:$2 sm:$0xff]
    %2846 = vrot.lane.b32.xlu0 %v2823, 84
    %v2847 = vpop.permute.xlu0 %2846
    %2848 = vrot.lane.b32.xlu0 %v2825, 84
    %v2849 = vpop.permute.xlu0 %2848
    %2850 = vrot.lane.b32.xlu0 %v2827, 84
    %v2851 = vpop.permute.xlu0 %2850
    %2852 = vrot.lane.b32.xlu0 %v2829, 84
    %v2853 = vpop.permute.xlu0 %2852
    %2854 = vrot.lane.b32.xlu0 %v2831, 84
    %v2855 = vpop.permute.xlu0 %2854
    %2856 = vrot.lane.b32.xlu0 %v2833, 84
    %v2857 = vpop.permute.xlu0 %2856
    %2858 = vrot.lane.b32.xlu0 %v2835, 84
    %v2859 = vpop.permute.xlu0 %2858
    %2860 = vrot.lane.b32.xlu0 %v2837, 84
    %v2861 = vpop.permute.xlu0 %2860
    %2870 = vst.msk [vmem:[%s1694] sm:$0xff] %vm1499, %v2847
    %2871 = vst.msk [vmem:[%s1694 + $0x8] sm:$0xff] %vm1499, %v2849
    %2872 = vst.msk [vmem:[%s1694 + $0x10] sm:$0xff] %vm1499, %v2851
    %2873 = vst.msk [vmem:[%s1694 + $0x18] sm:$0xff] %vm1499, %v2853
    %2874 = vst.msk [vmem:[%s1694 + $0x20] sm:$0xff] %vm1499, %v2855
    %2875 = vst.msk [vmem:[%s1694 + $0x28] sm:$0xff] %vm1499, %v2857
    %2876 = vst.msk [vmem:[%s1694 + $0x30] sm:$0xff] %vm1499, %v2859
    %2877 = vst.msk [vmem:[%s1694 + $0x38] sm:$0xff] %vm1499, %v2861
    %s2878 = scalar_lea.vmem %s2766, 2 [#allocation2]
    %v2879 = vld [vmem:[%s2878] ss:$2 sm:$0xff]
    %s2880 = scalar_lea.vmem %s2766, 50 [#allocation2]
    %v2881 = vld [vmem:[%s2880] ss:$2 sm:$0xff]
    %s2882 = scalar_lea.vmem %s2766, 98 [#allocation2]
    %v2883 = vld [vmem:[%s2882] ss:$2 sm:$0xff]
    %s2884 = scalar_lea.vmem %s2766, 146 [#allocation2]
    %v2885 = vld [vmem:[%s2884] ss:$2 sm:$0xff]
    %s2886 = scalar_lea.vmem %s2766, 194 [#allocation2]
    %v2887 = vld [vmem:[%s2886] ss:$2 sm:$0xff]
    %s2888 = scalar_lea.vmem %s2766, 242 [#allocation2]
    %v2889 = vld [vmem:[%s2888] ss:$2 sm:$0xff]
    %s2890 = scalar_lea.vmem %s2766, 290 [#allocation2]
    %v2891 = vld [vmem:[%s2890] ss:$2 sm:$0xff]
    %s2892 = scalar_lea.vmem %s2766, 338 [#allocation2]
    %v2893 = vld [vmem:[%s2892] ss:$2 sm:$0xff]
    %2902 = vrot.lane.b32.xlu0 %v2879, 88
    %v2903 = vpop.permute.xlu0 %2902
    %2904 = vrot.lane.b32.xlu0 %v2881, 88
    %v2905 = vpop.permute.xlu0 %2904
    %2906 = vrot.lane.b32.xlu0 %v2883, 88
    %v2907 = vpop.permute.xlu0 %2906
    %2908 = vrot.lane.b32.xlu0 %v2885, 88
    %v2909 = vpop.permute.xlu0 %2908
    %2910 = vrot.lane.b32.xlu0 %v2887, 88
    %v2911 = vpop.permute.xlu0 %2910
    %2912 = vrot.lane.b32.xlu0 %v2889, 88
    %v2913 = vpop.permute.xlu0 %2912
    %2914 = vrot.lane.b32.xlu0 %v2891, 88
    %v2915 = vpop.permute.xlu0 %2914
    %2916 = vrot.lane.b32.xlu0 %v2893, 88
    %v2917 = vpop.permute.xlu0 %2916
    %2926 = vst.msk [vmem:[%s1694] sm:$0xff] %vm1556, %v2903
    %2927 = vst.msk [vmem:[%s1694 + $0x8] sm:$0xff] %vm1556, %v2905
    %2928 = vst.msk [vmem:[%s1694 + $0x10] sm:$0xff] %vm1556, %v2907
    %2929 = vst.msk [vmem:[%s1694 + $0x18] sm:$0xff] %vm1556, %v2909
    %2930 = vst.msk [vmem:[%s1694 + $0x20] sm:$0xff] %vm1556, %v2911
    %2931 = vst.msk [vmem:[%s1694 + $0x28] sm:$0xff] %vm1556, %v2913
    %2932 = vst.msk [vmem:[%s1694 + $0x30] sm:$0xff] %vm1556, %v2915
    %2933 = vst.msk [vmem:[%s1694 + $0x38] sm:$0xff] %vm1556, %v2917
    %s2934 = scalar_lea.vmem %s2766, 3 [#allocation2]
    %v2935 = vld [vmem:[%s2934] ss:$2 sm:$0xff]
    %s2936 = scalar_lea.vmem %s2766, 51 [#allocation2]
    %v2937 = vld [vmem:[%s2936] ss:$2 sm:$0xff]
    %s2938 = scalar_lea.vmem %s2766, 99 [#allocation2]
    %v2939 = vld [vmem:[%s2938] ss:$2 sm:$0xff]
    %s2940 = scalar_lea.vmem %s2766, 147 [#allocation2]
    %v2941 = vld [vmem:[%s2940] ss:$2 sm:$0xff]
    %s2942 = scalar_lea.vmem %s2766, 195 [#allocation2]
    %v2943 = vld [vmem:[%s2942] ss:$2 sm:$0xff]
    %s2944 = scalar_lea.vmem %s2766, 243 [#allocation2]
    %v2945 = vld [vmem:[%s2944] ss:$2 sm:$0xff]
    %s2946 = scalar_lea.vmem %s2766, 291 [#allocation2]
    %v2947 = vld [vmem:[%s2946] ss:$2 sm:$0xff]
    %s2948 = scalar_lea.vmem %s2766, 339 [#allocation2]
    %v2949 = vld [vmem:[%s2948] ss:$2 sm:$0xff]
    %2958 = vrot.lane.b32.xlu0 %v2935, 92
    %v2959 = vpop.permute.xlu0 %2958
    %2960 = vrot.lane.b32.xlu0 %v2937, 92
    %v2961 = vpop.permute.xlu0 %2960
    %2962 = vrot.lane.b32.xlu0 %v2939, 92
    %v2963 = vpop.permute.xlu0 %2962
    %2964 = vrot.lane.b32.xlu0 %v2941, 92
    %v2965 = vpop.permute.xlu0 %2964
    %2966 = vrot.lane.b32.xlu0 %v2943, 92
    %v2967 = vpop.permute.xlu0 %2966
    %2968 = vrot.lane.b32.xlu0 %v2945, 92
    %v2969 = vpop.permute.xlu0 %2968
    %2970 = vrot.lane.b32.xlu0 %v2947, 92
    %v2971 = vpop.permute.xlu0 %2970
    %2972 = vrot.lane.b32.xlu0 %v2949, 92
    %v2973 = vpop.permute.xlu0 %2972
    %2982 = vst.msk [vmem:[%s1694] sm:$0xff] %vm1613, %v2959
    %2983 = vst.msk [vmem:[%s1694 + $0x8] sm:$0xff] %vm1613, %v2961
    %2984 = vst.msk [vmem:[%s1694 + $0x10] sm:$0xff] %vm1613, %v2963
    %2985 = vst.msk [vmem:[%s1694 + $0x18] sm:$0xff] %vm1613, %v2965
    %2986 = vst.msk [vmem:[%s1694 + $0x20] sm:$0xff] %vm1613, %v2967
    %2987 = vst.msk [vmem:[%s1694 + $0x28] sm:$0xff] %vm1613, %v2969
    %2988 = vst.msk [vmem:[%s1694 + $0x30] sm:$0xff] %vm1613, %v2971
    %2989 = vst.msk [vmem:[%s1694 + $0x38] sm:$0xff] %vm1613, %v2973
    %s2990 = scalar_lea.vmem %s2766, 4 [#allocation2]
    %v2991 = vld [vmem:[%s2990] ss:$2 sm:$0xff]
    %s2992 = scalar_lea.vmem %s2766, 52 [#allocation2]
    %v2993 = vld [vmem:[%s2992] ss:$2 sm:$0xff]
    %s2994 = scalar_lea.vmem %s2766, 100 [#allocation2]
    %v2995 = vld [vmem:[%s2994] ss:$2 sm:$0xff]
    %s2996 = scalar_lea.vmem %s2766, 148 [#allocation2]
    %v2997 = vld [vmem:[%s2996] ss:$2 sm:$0xff]
    %s2998 = scalar_lea.vmem %s2766, 196 [#allocation2]
    %v2999 = vld [vmem:[%s2998] ss:$2 sm:$0xff]
    %s3000 = scalar_lea.vmem %s2766, 244 [#allocation2]
    %v3001 = vld [vmem:[%s3000] ss:$2 sm:$0xff]
    %s3002 = scalar_lea.vmem %s2766, 292 [#allocation2]
    %v3003 = vld [vmem:[%s3002] ss:$2 sm:$0xff]
    %s3004 = scalar_lea.vmem %s2766, 340 [#allocation2]
    %v3005 = vld [vmem:[%s3004] ss:$2 sm:$0xff]
    %3014 = vrot.lane.b32.xlu0 %v2991, 96
    %v3015 = vpop.permute.xlu0 %3014
    %3016 = vrot.lane.b32.xlu0 %v2993, 96
    %v3017 = vpop.permute.xlu0 %3016
    %3018 = vrot.lane.b32.xlu0 %v2995, 96
    %v3019 = vpop.permute.xlu0 %3018
    %3020 = vrot.lane.b32.xlu0 %v2997, 96
    %v3021 = vpop.permute.xlu0 %3020
    %3022 = vrot.lane.b32.xlu0 %v2999, 96
    %v3023 = vpop.permute.xlu0 %3022
    %3024 = vrot.lane.b32.xlu0 %v3001, 96
    %v3025 = vpop.permute.xlu0 %3024
    %3026 = vrot.lane.b32.xlu0 %v3003, 96
    %v3027 = vpop.permute.xlu0 %3026
    %3028 = vrot.lane.b32.xlu0 %v3005, 96
    %v3029 = vpop.permute.xlu0 %3028
    %3038 = vst.msk [vmem:[%s1694] sm:$0xff] %vm1670, %v3015
    %3039 = vst.msk [vmem:[%s1694 + $0x8] sm:$0xff] %vm1670, %v3017
    %3040 = vst.msk [vmem:[%s1694 + $0x10] sm:$0xff] %vm1670, %v3019
    %3041 = vst.msk [vmem:[%s1694 + $0x18] sm:$0xff] %vm1670, %v3021
    %3042 = vst.msk [vmem:[%s1694 + $0x20] sm:$0xff] %vm1670, %v3023
    %3043 = vst.msk [vmem:[%s1694 + $0x28] sm:$0xff] %vm1670, %v3025
    %3044 = vst.msk [vmem:[%s1694 + $0x30] sm:$0xff] %vm1670, %v3027
    %3045 = vst.msk [vmem:[%s1694 + $0x38] sm:$0xff] %vm1670, %v3029
    %v3046 = vld [vmem:[#allocation3] sm:$0xff]
    %v3047 = vld [vmem:[#allocation3 + $0x8] sm:$0xff]
    %v3048 = vld [vmem:[#allocation3 + $0x10] sm:$0xff]
    %v3049 = vld [vmem:[#allocation3 + $0x18] sm:$0xff]
    %v3050 = vld [vmem:[#allocation3 + $0x20] sm:$0xff]
    %v3051 = vld [vmem:[#allocation3 + $0x28] sm:$0xff]
    %v3052 = vld [vmem:[#allocation3 + $0x30] sm:$0xff]
    %v3053 = vld [vmem:[#allocation3 + $0x38] sm:$0xff]
    %v3054 = vld [vmem:[#allocation3 + $0x40] sm:$0xff]
    %v3055 = vld [vmem:[#allocation3 + $0x48] sm:$0xff]
    %v3056 = vld [vmem:[#allocation3 + $0x50] sm:$0xff]
    %v3057 = vld [vmem:[#allocation3 + $0x58] sm:$0xff]
    %v3058 = vld [vmem:[#allocation3 + $0x60] sm:$0xff]
    %v3059 = vld [vmem:[#allocation3 + $0x68] sm:$0xff]
    %v3060 = vld [vmem:[#allocation3 + $0x70] sm:$0xff]
    %v3061 = vld [vmem:[#allocation3 + $0x78] sm:$0xff]
    %v3062 = vld [vmem:[%s1] sm:$0xff]
    %v3063 = vld [vmem:[%s1 + $0x8] sm:$0xff]
    %v3064 = vld [vmem:[%s1 + $0x10] sm:$0xff]
    %v3065 = vld [vmem:[%s1 + $0x18] sm:$0xff]
    %v3066 = vld [vmem:[%s1 + $0x20] sm:$0xff]
    %v3067 = vld [vmem:[%s1 + $0x28] sm:$0xff]
    %v3068 = vld [vmem:[%s1 + $0x30] sm:$0xff]
    %v3069 = vld [vmem:[%s1 + $0x38] sm:$0xff]
    %v3070 = vld [vmem:[%s1 + $0x40] sm:$0xff]
    %v3071 = vld [vmem:[%s1 + $0x48] sm:$0xff]
    %v3072 = vld [vmem:[%s1 + $0x50] sm:$0xff]
    %v3073 = vld [vmem:[%s1 + $0x58] sm:$0xff]
    %v3074 = vld [vmem:[%s1 + $0x60] sm:$0xff]
    %v3075 = vld [vmem:[%s1 + $0x68] sm:$0xff]
    %v3076 = vld [vmem:[%s1 + $0x70] sm:$0xff]
    %v3077 = vld [vmem:[%s1 + $0x78] sm:$0xff]
    %v3078 = vld [vmem:[%s2] sm:$0x1]
    %v3080 = vperm.slane %v3078, 0
    %3082 = vmatpush.msra.mxu0 %v3077
    %3083 = vmatpush.msra.mxu0 %v3076
    %3084 = vmatpush.msra.mxu0 %v3075
    %3085 = vmatpush.msra.mxu0 %v3074
    %3086 = vmatpush.msra.mxu0 %v3073
    %3087 = vmatpush.msra.mxu0 %v3072
    %3088 = vmatpush.msra.mxu0 %v3071
    %3089 = vmatpush.msra.mxu0 %v3070
    %3090 = vmatpush.msra.mxu0 %v3069
    %3091 = vmatpush.msra.mxu0 %v3068
    %3092 = vmatpush.msra.mxu0 %v3067
    %3093 = vmatpush.msra.mxu0 %v3066
    %3094 = vmatpush.msra.mxu0 %v3065
    %3095 = vmatpush.msra.mxu0 %v3064
    %3096 = vmatpush.msra.mxu0 %v3063
    %3097 = vmatpush.msra.mxu0 %v3062
    %3098 = vmatmul.f32.gmra.mxu0 %v3046
    %v3099 = vpop.f32.mrf.mxu0
    %v3100 = vadd.f32 %v3080, %v3099
    %3101 = vmatmul.f32.gmra.mxu0 %v3047
    %v3102 = vpop.f32.mrf.mxu0
    %v3103 = vadd.f32 %v3080, %v3102
    %3104 = vmatmul.f32.gmra.mxu0 %v3048
    %v3105 = vpop.f32.mrf.mxu0
    %v3106 = vadd.f32 %v3080, %v3105
    %3107 = vmatmul.f32.gmra.mxu0 %v3049
    %v3108 = vpop.f32.mrf.mxu0
    %v3109 = vadd.f32 %v3080, %v3108
    %3110 = vmatmul.f32.gmra.mxu0 %v3050
    %v3111 = vpop.f32.mrf.mxu0
    %v3112 = vadd.f32 %v3080, %v3111
    %3113 = vmatmul.f32.gmra.mxu0 %v3051
    %v3114 = vpop.f32.mrf.mxu0
    %v3115 = vadd.f32 %v3080, %v3114
    %3116 = vmatmul.f32.gmra.mxu0 %v3052
    %v3117 = vpop.f32.mrf.mxu0
    %v3118 = vadd.f32 %v3080, %v3117
    %3119 = vmatmul.f32.gmra.mxu0 %v3053
    %v3120 = vpop.f32.mrf.mxu0
    %v3121 = vadd.f32 %v3080, %v3120
    %3122 = vmatmul.f32.gmra.mxu0 %v3054
    %v3123 = vpop.f32.mrf.mxu0
    %v3124 = vadd.f32 %v3080, %v3123
    %3125 = vmatmul.f32.gmra.mxu0 %v3055
    %v3126 = vpop.f32.mrf.mxu0
    %v3127 = vadd.f32 %v3080, %v3126
    %3128 = vmatmul.f32.gmra.mxu0 %v3056
    %v3129 = vpop.f32.mrf.mxu0
    %v3130 = vadd.f32 %v3080, %v3129
    %3131 = vmatmul.f32.gmra.mxu0 %v3057
    %v3132 = vpop.f32.mrf.mxu0
    %v3133 = vadd.f32 %v3080, %v3132
    %3134 = vmatmul.f32.gmra.mxu0 %v3058
    %v3135 = vpop.f32.mrf.mxu0
    %v3136 = vadd.f32 %v3080, %v3135
    %3137 = vmatmul.f32.gmra.mxu0 %v3059
    %v3138 = vpop.f32.mrf.mxu0
    %v3139 = vadd.f32 %v3080, %v3138
    %3140 = vmatmul.f32.gmra.mxu0 %v3060
    %v3141 = vpop.f32.mrf.mxu0
    %v3142 = vadd.f32 %v3080, %v3141
    %3143 = vmatmul.f32.gmra.mxu0 %v3061
    %v3144 = vpop.f32.mrf.mxu0
    %v3145 = vadd.f32 %v3080, %v3144
    %3146 = vdwg.mxu0
    %vm3147 = vcmp.ge.f32.partialorder %v3100, 0.0
    %vm3148 = vcmp.ge.f32.partialorder %v3103, 0.0
    %vm3149 = vcmp.ge.f32.partialorder %v3106, 0.0
    %vm3150 = vcmp.ge.f32.partialorder %v3109, 0.0
    %vm3151 = vcmp.ge.f32.partialorder %v3112, 0.0
    %vm3152 = vcmp.ge.f32.partialorder %v3115, 0.0
    %vm3153 = vcmp.ge.f32.partialorder %v3118, 0.0
    %vm3154 = vcmp.ge.f32.partialorder %v3121, 0.0
    %vm3155 = vcmp.ge.f32.partialorder %v3124, 0.0
    %vm3156 = vcmp.ge.f32.partialorder %v3127, 0.0
    %vm3157 = vcmp.ge.f32.partialorder %v3130, 0.0
    %vm3158 = vcmp.ge.f32.partialorder %v3133, 0.0
    %vm3159 = vcmp.ge.f32.partialorder %v3136, 0.0
    %vm3160 = vcmp.ge.f32.partialorder %v3139, 0.0
    %vm3161 = vcmp.ge.f32.partialorder %v3142, 0.0
    %vm3162 = vcmp.ge.f32.partialorder %v3145, 0.0
    %v3163 = vmul.f32 %v3100, 0.1
    %v3164 = vmul.f32 %v3103, 0.1
    %v3165 = vmul.f32 %v3106, 0.1
    %v3166 = vmul.f32 %v3109, 0.1
    %v3167 = vmul.f32 %v3112, 0.1
    %v3168 = vmul.f32 %v3115, 0.1
    %v3169 = vmul.f32 %v3118, 0.1
    %v3170 = vmul.f32 %v3121, 0.1
    %v3171 = vmul.f32 %v3124, 0.1
    %v3172 = vmul.f32 %v3127, 0.1
    %v3173 = vmul.f32 %v3130, 0.1
    %v3174 = vmul.f32 %v3133, 0.1
    %v3175 = vmul.f32 %v3136, 0.1
    %v3176 = vmul.f32 %v3139, 0.1
    %v3177 = vmul.f32 %v3142, 0.1
    %v3178 = vmul.f32 %v3145, 0.1
    %v3179 = vsel %vm3147, %v3100, %v3163
    %v3180 = vsel %vm3148, %v3103, %v3164
    %v3181 = vsel %vm3149, %v3106, %v3165
    %v3182 = vsel %vm3150, %v3109, %v3166
    %v3183 = vsel %vm3151, %v3112, %v3167
    %v3184 = vsel %vm3152, %v3115, %v3168
    %v3185 = vsel %vm3153, %v3118, %v3169
    %v3186 = vsel %vm3154, %v3121, %v3170
    %v3187 = vsel %vm3155, %v3124, %v3171
    %v3188 = vsel %vm3156, %v3127, %v3172
    %v3189 = vsel %vm3157, %v3130, %v3173
    %v3190 = vsel %vm3158, %v3133, %v3174
    %v3191 = vsel %vm3159, %v3136, %v3175
    %v3192 = vsel %vm3160, %v3139, %v3176
    %v3193 = vsel %vm3161, %v3142, %v3177
    %v3194 = vsel %vm3162, %v3145, %v3178
    %3195 = vst [vmem:[#allocation8] sm:$0xff] %v3179
    %3196 = vst [vmem:[#allocation8 + $0x8] sm:$0xff] %v3180
    %3197 = vst [vmem:[#allocation8 + $0x10] sm:$0xff] %v3181
    %3198 = vst [vmem:[#allocation8 + $0x18] sm:$0xff] %v3182
    %3199 = vst [vmem:[#allocation8 + $0x20] sm:$0xff] %v3183
    %3200 = vst [vmem:[#allocation8 + $0x28] sm:$0xff] %v3184
    %3201 = vst [vmem:[#allocation8 + $0x30] sm:$0xff] %v3185
    %3202 = vst [vmem:[#allocation8 + $0x38] sm:$0xff] %v3186
    %3203 = vst [vmem:[#allocation8 + $0x40] sm:$0xff] %v3187
    %3204 = vst [vmem:[#allocation8 + $0x48] sm:$0xff] %v3188
    %3205 = vst [vmem:[#allocation8 + $0x50] sm:$0xff] %v3189
    %3206 = vst [vmem:[#allocation8 + $0x58] sm:$0xff] %v3190
    %3207 = vst [vmem:[#allocation8 + $0x60] sm:$0xff] %v3191
    %3208 = vst [vmem:[#allocation8 + $0x68] sm:$0xff] %v3192
    %3209 = vst [vmem:[#allocation8 + $0x70] sm:$0xff] %v3193
    %3210 = vst [vmem:[#allocation8 + $0x78] sm:$0xff] %v3194
    %vm3211 = vcmask 57344
    %3212 = vst.msk [vmem:[#allocation4] sm:$0x1] %vm3211, 0.0
    %3213 = vst.msk [vmem:[#allocation4 + $0x10] sm:$0x1] %vm3211, 0.0
    %3214 = vst.msk [vmem:[#allocation4 + $0x20] sm:$0x1] %vm3211, 0.0
    %3215 = vst.msk [vmem:[#allocation4 + $0x30] sm:$0x1] %vm3211, 0.0
    %3216 = vst.msk [vmem:[#allocation4 + $0x40] sm:$0x1] %vm3211, 0.0
    %3217 = vst.msk [vmem:[#allocation4 + $0x50] sm:$0x1] %vm3211, 0.0
    %3218 = vst.msk [vmem:[#allocation4 + $0x60] sm:$0x1] %vm3211, 0.0
    %3219 = vst.msk [vmem:[#allocation4 + $0x70] sm:$0x1] %vm3211, 0.0
    %3220 = vst.msk [vmem:[#allocation4 + $0x80] sm:$0x1] %vm3211, 0.0
    %3221 = vst.msk [vmem:[#allocation4 + $0x90] sm:$0x1] %vm3211, 0.0
    %3222 = vst.msk [vmem:[#allocation4 + $0xa0] sm:$0x1] %vm3211, 0.0
    %3223 = vst.msk [vmem:[#allocation4 + $0xb0] sm:$0x1] %vm3211, 0.0
    %3224 = vst.msk [vmem:[#allocation4 + $0xc0] sm:$0x1] %vm3211, 0.0
    %3225 = vst.msk [vmem:[#allocation4 + $0xd0] sm:$0x1] %vm3211, 0.0
    %3226 = vst.msk [vmem:[#allocation4 + $0xe0] sm:$0x1] %vm3211, 0.0
    %3227 = vst.msk [vmem:[#allocation4 + $0xf0] sm:$0x1] %vm3211, 0.0
    %3228 = vst.msk [vmem:[#allocation4 + $0x100] sm:$0x1] %vm3211, 0.0
    %3229 = vst.msk [vmem:[#allocation4 + $0x110] sm:$0x1] %vm3211, 0.0
    %3230 = vst.msk [vmem:[#allocation4 + $0x120] sm:$0x1] %vm3211, 0.0
    %3231 = vst.msk [vmem:[#allocation4 + $0x130] sm:$0x1] %vm3211, 0.0
    %3232 = vst.msk [vmem:[#allocation4 + $0x9] sm:$0x1] %vm3211, 0.0
    %3233 = vst.msk [vmem:[#allocation4 + $0x19] sm:$0x1] %vm3211, 0.0
    %3234 = vst.msk [vmem:[#allocation4 + $0x29] sm:$0x1] %vm3211, 0.0
    %3235 = vst.msk [vmem:[#allocation4 + $0x39] sm:$0x1] %vm3211, 0.0
    %3236 = vst.msk [vmem:[#allocation4 + $0x49] sm:$0x1] %vm3211, 0.0
    %3237 = vst.msk [vmem:[#allocation4 + $0x59] sm:$0x1] %vm3211, 0.0
    %3238 = vst.msk [vmem:[#allocation4 + $0x69] sm:$0x1] %vm3211, 0.0
    %3239 = vst.msk [vmem:[#allocation4 + $0x79] sm:$0x1] %vm3211, 0.0
    %3240 = vst.msk [vmem:[#allocation4 + $0x89] sm:$0x1] %vm3211, 0.0
    %3241 = vst.msk [vmem:[#allocation4 + $0x99] sm:$0x1] %vm3211, 0.0
    %3242 = vst.msk [vmem:[#allocation4 + $0xa9] sm:$0x1] %vm3211, 0.0
    %3243 = vst.msk [vmem:[#allocation4 + $0xb9] sm:$0x1] %vm3211, 0.0
    %3244 = vst.msk [vmem:[#allocation4 + $0xc9] sm:$0x1] %vm3211, 0.0
    %3245 = vst.msk [vmem:[#allocation4 + $0xd9] sm:$0x1] %vm3211, 0.0
    %3246 = vst.msk [vmem:[#allocation4 + $0xe9] sm:$0x1] %vm3211, 0.0
    %3247 = vst.msk [vmem:[#allocation4 + $0xf9] sm:$0x1] %vm3211, 0.0
    %3248 = vst.msk [vmem:[#allocation4 + $0x109] sm:$0x1] %vm3211, 0.0
    %3249 = vst.msk [vmem:[#allocation4 + $0x119] sm:$0x1] %vm3211, 0.0
    %3250 = vst.msk [vmem:[#allocation4 + $0x129] sm:$0x1] %vm3211, 0.0
    %3251 = vst.msk [vmem:[#allocation4 + $0x139] sm:$0x1] %vm3211, 0.0
    %vm3252 = vcmask 64512
    %3253 = vst.msk [vmem:[#allocation4] sm:$0xff] %vm3252, 0.0
    %vm3254 = vcmask 58368
    %3255 = vst.msk [vmem:[#allocation4 + $0x8] sm:$0x3] %vm3254, 0.0
    %s3256 = scalar_lea.vmem [#allocation4], 144
    %3257 = vst.msk [vmem:[%s3256] sm:$0xff] %vm3252, 0.0
    %3258 = vst.msk [vmem:[%s3256 + $0x8] sm:$0x3] %vm3254, 0.0
    %s3259 = scalar_lea.vmem [#allocation4], 160
    %3260 = vst.msk [vmem:[%s3259] sm:$0xff] %vm3252, 0.0
    %3261 = vst.msk [vmem:[%s3259 + $0x8] sm:$0x3] %vm3254, 0.0
    %s3262 = scalar_lea.vmem [#allocation4], 304
    %3263 = vst.msk [vmem:[%s3262] sm:$0xff] %vm3252, 0.0
    %3264 = vst.msk [vmem:[%s3262 + $0x8] sm:$0x3] %vm3254, 0.0
    %s3265 = scalar_lea.vmem [#allocation4], 16
    %3266 = vst.msk [vmem:[%s3265 + $0x1] sm:$0xff] %vm3252, %v3179
    %3267 = vst.msk [vmem:[%s3265 + $0x11] sm:$0xff] %vm3252, %v3180
    %3268 = vst.msk [vmem:[%s3265 + $0x21] sm:$0xff] %vm3252, %v3181
    %3269 = vst.msk [vmem:[%s3265 + $0x31] sm:$0xff] %vm3252, %v3182
    %3270 = vst.msk [vmem:[%s3265 + $0x41] sm:$0xff] %vm3252, %v3183
    %3271 = vst.msk [vmem:[%s3265 + $0x51] sm:$0xff] %vm3252, %v3184
    %3272 = vst.msk [vmem:[%s3265 + $0x61] sm:$0xff] %vm3252, %v3185
    %3273 = vst.msk [vmem:[%s3265 + $0x71] sm:$0xff] %vm3252, %v3186
    %s3274 = scalar_lea.vmem [#allocation4], 176
    %3275 = vst.msk [vmem:[%s3274 + $0x1] sm:$0xff] %vm3252, %v3187
    %3276 = vst.msk [vmem:[%s3274 + $0x11] sm:$0xff] %vm3252, %v3188
    %3277 = vst.msk [vmem:[%s3274 + $0x21] sm:$0xff] %vm3252, %v3189
    %3278 = vst.msk [vmem:[%s3274 + $0x31] sm:$0xff] %vm3252, %v3190
    %3279 = vst.msk [vmem:[%s3274 + $0x41] sm:$0xff] %vm3252, %v3191
    %3280 = vst.msk [vmem:[%s3274 + $0x51] sm:$0xff] %vm3252, %v3192
    %3281 = vst.msk [vmem:[%s3274 + $0x61] sm:$0xff] %vm3252, %v3193
    %3282 = vst.msk [vmem:[%s3274 + $0x71] sm:$0xff] %vm3252, %v3194
    %vm3283 = vcmask 1044032
    %3284 = vst.msk [vmem:[#allocation5] sm:$0xf] %vm3283, 0.0
    %3285 = vst.msk [vmem:[#allocation5 + $0x4] sm:$0xf] %vm3283, 0.0
    %3286 = vst.msk [vmem:[#allocation5 + $0x8] sm:$0xf] %vm3283, 0.0
    %3287 = vst.msk [vmem:[#allocation5 + $0xc] sm:$0xf] %vm3283, 0.0
    %3288 = vst.msk [vmem:[#allocation5 + $0x10] sm:$0xf] %vm3283, 0.0
    %3289 = vst.msk [vmem:[#allocation5 + $0x14] sm:$0xf] %vm3283, 0.0
    %3290 = vst.msk [vmem:[#allocation5 + $0x18] sm:$0xf] %vm3283, 0.0
    %3291 = vst.msk [vmem:[#allocation5 + $0x1c] sm:$0xf] %vm3283, 0.0
    %v3292 = vld [vmem:[#allocation4] ss:$2 sm:$0xf]
    %s3293 = scalar_lea.vmem [#allocation4], 32
    %v3294 = vld [vmem:[%s3293] ss:$2 sm:$0xf]
    %s3295 = scalar_lea.vmem [#allocation4], 64
    %v3296 = vld [vmem:[%s3295] ss:$2 sm:$0xf]
    %s3297 = scalar_lea.vmem [#allocation4], 96
    %v3298 = vld [vmem:[%s3297] ss:$2 sm:$0xf]
    %vm3299 = vcmask 60416
    %3300 = vst.msk [vmem:[#allocation5] sm:$0xf] %vm3299, %v3292
    %3301 = vst.msk [vmem:[#allocation5 + $0x4] sm:$0xf] %vm3299, %v3294
    %3302 = vst.msk [vmem:[#allocation5 + $0x8] sm:$0xf] %vm3299, %v3296
    %3303 = vst.msk [vmem:[#allocation5 + $0xc] sm:$0xf] %vm3299, %v3298
    %s3304 = scalar_lea.vmem [#allocation4], 1
    %v3305 = vld [vmem:[%s3304] ss:$2 sm:$0xf]
    %s3306 = scalar_lea.vmem [#allocation4], 33
    %v3307 = vld [vmem:[%s3306] ss:$2 sm:$0xf]
    %s3308 = scalar_lea.vmem [#allocation4], 65
    %v3309 = vld [vmem:[%s3308] ss:$2 sm:$0xf]
    %s3310 = scalar_lea.vmem [#allocation4], 97
    %v3311 = vld [vmem:[%s3310] ss:$2 sm:$0xf]
    %3316 = vrot.lane.b32.xlu0 %v3305, 8
    %v3317 = vpop.permute.xlu0 %3316
    %3318 = vrot.lane.b32.xlu0 %v3307, 8
    %v3319 = vpop.permute.xlu0 %3318
    %3320 = vrot.lane.b32.xlu0 %v3309, 8
    %v3321 = vpop.permute.xlu0 %3320
    %3322 = vrot.lane.b32.xlu0 %v3311, 8
    %v3323 = vpop.permute.xlu0 %3322
    %vm3328 = vcmask 126016
    %3329 = vst.msk [vmem:[#allocation5] sm:$0xf] %vm3328, %v3317
    %3330 = vst.msk [vmem:[#allocation5 + $0x4] sm:$0xf] %vm3328, %v3319
    %3331 = vst.msk [vmem:[#allocation5 + $0x8] sm:$0xf] %vm3328, %v3321
    %3332 = vst.msk [vmem:[#allocation5 + $0xc] sm:$0xf] %vm3328, %v3323
    %s3333 = scalar_lea.vmem [#allocation4], 2
    %v3334 = vld [vmem:[%s3333] ss:$2 sm:$0xf]
    %s3335 = scalar_lea.vmem [#allocation4], 34
    %v3336 = vld [vmem:[%s3335] ss:$2 sm:$0xf]
    %s3337 = scalar_lea.vmem [#allocation4], 66
    %v3338 = vld [vmem:[%s3337] ss:$2 sm:$0xf]
    %s3339 = scalar_lea.vmem [#allocation4], 98
    %v3340 = vld [vmem:[%s3339] ss:$2 sm:$0xf]
    %3345 = vrot.lane.b32.xlu0 %v3334, 16
    %v3346 = vpop.permute.xlu0 %3345
    %3347 = vrot.lane.b32.xlu0 %v3336, 16
    %v3348 = vpop.permute.xlu0 %3347
    %3349 = vrot.lane.b32.xlu0 %v3338, 16
    %v3350 = vpop.permute.xlu0 %3349
    %3351 = vrot.lane.b32.xlu0 %v3340, 16
    %v3352 = vpop.permute.xlu0 %3351
    %vm3357 = vcmask 191616
    %3358 = vst.msk [vmem:[#allocation5] sm:$0xf] %vm3357, %v3346
    %3359 = vst.msk [vmem:[#allocation5 + $0x4] sm:$0xf] %vm3357, %v3348
    %3360 = vst.msk [vmem:[#allocation5 + $0x8] sm:$0xf] %vm3357, %v3350
    %3361 = vst.msk [vmem:[#allocation5 + $0xc] sm:$0xf] %vm3357, %v3352
    %v3362 = vld [vmem:[%s3265] ss:$2 sm:$0xf]
    %s3363 = scalar_lea.vmem %s3265, 32 [#allocation4]
    %v3364 = vld [vmem:[%s3363] ss:$2 sm:$0xf]
    %s3365 = scalar_lea.vmem %s3265, 64 [#allocation4]
    %v3366 = vld [vmem:[%s3365] ss:$2 sm:$0xf]
    %s3367 = scalar_lea.vmem %s3265, 96 [#allocation4]
    %v3368 = vld [vmem:[%s3367] ss:$2 sm:$0xf]
    %3373 = vrot.lane.b32.xlu0 %v3362, 24
    %v3374 = vpop.permute.xlu0 %3373
    %3375 = vrot.lane.b32.xlu0 %v3364, 24
    %v3376 = vpop.permute.xlu0 %3375
    %3377 = vrot.lane.b32.xlu0 %v3366, 24
    %v3378 = vpop.permute.xlu0 %3377
    %3379 = vrot.lane.b32.xlu0 %v3368, 24
    %v3380 = vpop.permute.xlu0 %3379
    %vm3385 = vcmask 257216
    %3386 = vst.msk [vmem:[#allocation5] sm:$0xf] %vm3385, %v3374
    %3387 = vst.msk [vmem:[#allocation5 + $0x4] sm:$0xf] %vm3385, %v3376
    %3388 = vst.msk [vmem:[#allocation5 + $0x8] sm:$0xf] %vm3385, %v3378
    %3389 = vst.msk [vmem:[#allocation5 + $0xc] sm:$0xf] %vm3385, %v3380
    %s3390 = scalar_lea.vmem %s3265, 1 [#allocation4]
    %v3391 = vld [vmem:[%s3390] ss:$2 sm:$0xf]
    %s3392 = scalar_lea.vmem %s3265, 33 [#allocation4]
    %v3393 = vld [vmem:[%s3392] ss:$2 sm:$0xf]
    %s3394 = scalar_lea.vmem %s3265, 65 [#allocation4]
    %v3395 = vld [vmem:[%s3394] ss:$2 sm:$0xf]
    %s3396 = scalar_lea.vmem %s3265, 97 [#allocation4]
    %v3397 = vld [vmem:[%s3396] ss:$2 sm:$0xf]
    %3402 = vrot.lane.b32.xlu0 %v3391, 32
    %v3403 = vpop.permute.xlu0 %3402
    %3404 = vrot.lane.b32.xlu0 %v3393, 32
    %v3405 = vpop.permute.xlu0 %3404
    %3406 = vrot.lane.b32.xlu0 %v3395, 32
    %v3407 = vpop.permute.xlu0 %3406
    %3408 = vrot.lane.b32.xlu0 %v3397, 32
    %v3409 = vpop.permute.xlu0 %3408
    %vm3414 = vcmask 322816
    %3415 = vst.msk [vmem:[#allocation5] sm:$0xf] %vm3414, %v3403
    %3416 = vst.msk [vmem:[#allocation5 + $0x4] sm:$0xf] %vm3414, %v3405
    %3417 = vst.msk [vmem:[#allocation5 + $0x8] sm:$0xf] %vm3414, %v3407
    %3418 = vst.msk [vmem:[#allocation5 + $0xc] sm:$0xf] %vm3414, %v3409
    %s3419 = scalar_lea.vmem %s3265, 2 [#allocation4]
    %v3420 = vld [vmem:[%s3419] ss:$2 sm:$0xf]
    %s3421 = scalar_lea.vmem %s3265, 34 [#allocation4]
    %v3422 = vld [vmem:[%s3421] ss:$2 sm:$0xf]
    %s3423 = scalar_lea.vmem %s3265, 66 [#allocation4]
    %v3424 = vld [vmem:[%s3423] ss:$2 sm:$0xf]
    %s3425 = scalar_lea.vmem %s3265, 98 [#allocation4]
    %v3426 = vld [vmem:[%s3425] ss:$2 sm:$0xf]
    %3431 = vrot.lane.b32.xlu0 %v3420, 40
    %v3432 = vpop.permute.xlu0 %3431
    %3433 = vrot.lane.b32.xlu0 %v3422, 40
    %v3434 = vpop.permute.xlu0 %3433
    %3435 = vrot.lane.b32.xlu0 %v3424, 40
    %v3436 = vpop.permute.xlu0 %3435
    %3437 = vrot.lane.b32.xlu0 %v3426, 40
    %v3438 = vpop.permute.xlu0 %3437
    %vm3443 = vcmask 388416
    %3444 = vst.msk [vmem:[#allocation5] sm:$0xf] %vm3443, %v3432
    %3445 = vst.msk [vmem:[#allocation5 + $0x4] sm:$0xf] %vm3443, %v3434
    %3446 = vst.msk [vmem:[#allocation5 + $0x8] sm:$0xf] %vm3443, %v3436
    %3447 = vst.msk [vmem:[#allocation5 + $0xc] sm:$0xf] %vm3443, %v3438
    %s3448 = scalar_lea.vmem [#allocation4], 32
    %v3449 = vld [vmem:[%s3448] ss:$2 sm:$0xf]
    %s3450 = scalar_lea.vmem %s3448, 32 [#allocation4]
    %v3451 = vld [vmem:[%s3450] ss:$2 sm:$0xf]
    %s3452 = scalar_lea.vmem %s3448, 64 [#allocation4]
    %v3453 = vld [vmem:[%s3452] ss:$2 sm:$0xf]
    %s3454 = scalar_lea.vmem %s3448, 96 [#allocation4]
    %v3455 = vld [vmem:[%s3454] ss:$2 sm:$0xf]
    %3460 = vrot.lane.b32.xlu0 %v3449, 48
    %v3461 = vpop.permute.xlu0 %3460
    %3462 = vrot.lane.b32.xlu0 %v3451, 48
    %v3463 = vpop.permute.xlu0 %3462
    %3464 = vrot.lane.b32.xlu0 %v3453, 48
    %v3465 = vpop.permute.xlu0 %3464
    %3466 = vrot.lane.b32.xlu0 %v3455, 48
    %v3467 = vpop.permute.xlu0 %3466
    %vm3472 = vcmask 454016
    %3473 = vst.msk [vmem:[#allocation5] sm:$0xf] %vm3472, %v3461
    %3474 = vst.msk [vmem:[#allocation5 + $0x4] sm:$0xf] %vm3472, %v3463
    %3475 = vst.msk [vmem:[#allocation5 + $0x8] sm:$0xf] %vm3472, %v3465
    %3476 = vst.msk [vmem:[#allocation5 + $0xc] sm:$0xf] %vm3472, %v3467
    %s3477 = scalar_lea.vmem %s3448, 1 [#allocation4]
    %v3478 = vld [vmem:[%s3477] ss:$2 sm:$0xf]
    %s3479 = scalar_lea.vmem %s3448, 33 [#allocation4]
    %v3480 = vld [vmem:[%s3479] ss:$2 sm:$0xf]
    %s3481 = scalar_lea.vmem %s3448, 65 [#allocation4]
    %v3482 = vld [vmem:[%s3481] ss:$2 sm:$0xf]
    %s3483 = scalar_lea.vmem %s3448, 97 [#allocation4]
    %v3484 = vld [vmem:[%s3483] ss:$2 sm:$0xf]
    %3489 = vrot.lane.b32.xlu0 %v3478, 56
    %v3490 = vpop.permute.xlu0 %3489
    %3491 = vrot.lane.b32.xlu0 %v3480, 56
    %v3492 = vpop.permute.xlu0 %3491
    %3493 = vrot.lane.b32.xlu0 %v3482, 56
    %v3494 = vpop.permute.xlu0 %3493
    %3495 = vrot.lane.b32.xlu0 %v3484, 56
    %v3496 = vpop.permute.xlu0 %3495
    %vm3501 = vcmask 519616
    %3502 = vst.msk [vmem:[#allocation5] sm:$0xf] %vm3501, %v3490
    %3503 = vst.msk [vmem:[#allocation5 + $0x4] sm:$0xf] %vm3501, %v3492
    %3504 = vst.msk [vmem:[#allocation5 + $0x8] sm:$0xf] %vm3501, %v3494
    %3505 = vst.msk [vmem:[#allocation5 + $0xc] sm:$0xf] %vm3501, %v3496
    %s3506 = scalar_lea.vmem %s3448, 2 [#allocation4]
    %v3507 = vld [vmem:[%s3506] ss:$2 sm:$0xf]
    %s3508 = scalar_lea.vmem %s3448, 34 [#allocation4]
    %v3509 = vld [vmem:[%s3508] ss:$2 sm:$0xf]
    %s3510 = scalar_lea.vmem %s3448, 66 [#allocation4]
    %v3511 = vld [vmem:[%s3510] ss:$2 sm:$0xf]
    %s3512 = scalar_lea.vmem %s3448, 98 [#allocation4]
    %v3513 = vld [vmem:[%s3512] ss:$2 sm:$0xf]
    %3518 = vrot.lane.b32.xlu0 %v3507, 64
    %v3519 = vpop.permute.xlu0 %3518
    %3520 = vrot.lane.b32.xlu0 %v3509, 64
    %v3521 = vpop.permute.xlu0 %3520
    %3522 = vrot.lane.b32.xlu0 %v3511, 64
    %v3523 = vpop.permute.xlu0 %3522
    %3524 = vrot.lane.b32.xlu0 %v3513, 64
    %v3525 = vpop.permute.xlu0 %3524
    %vm3530 = vcmask 585216
    %3531 = vst.msk [vmem:[#allocation5] sm:$0xf] %vm3530, %v3519
    %3532 = vst.msk [vmem:[#allocation5 + $0x4] sm:$0xf] %vm3530, %v3521
    %3533 = vst.msk [vmem:[#allocation5 + $0x8] sm:$0xf] %vm3530, %v3523
    %3534 = vst.msk [vmem:[#allocation5 + $0xc] sm:$0xf] %vm3530, %v3525
    %v3535 = vld [vmem:[%s3259] ss:$2 sm:$0xf]
    %s3536 = scalar_lea.vmem %s3259, 32 [#allocation4]
    %v3537 = vld [vmem:[%s3536] ss:$2 sm:$0xf]
    %s3538 = scalar_lea.vmem %s3259, 64 [#allocation4]
    %v3539 = vld [vmem:[%s3538] ss:$2 sm:$0xf]
    %s3540 = scalar_lea.vmem %s3259, 96 [#allocation4]
    %v3541 = vld [vmem:[%s3540] ss:$2 sm:$0xf]
    %s3542 = scalar_lea.vmem [#allocation5], 16
    %3543 = vst.msk [vmem:[%s3542] sm:$0xf] %vm3299, %v3535
    %3544 = vst.msk [vmem:[%s3542 + $0x4] sm:$0xf] %vm3299, %v3537
    %3545 = vst.msk [vmem:[%s3542 + $0x8] sm:$0xf] %vm3299, %v3539
    %3546 = vst.msk [vmem:[%s3542 + $0xc] sm:$0xf] %vm3299, %v3541
    %s3547 = scalar_lea.vmem %s3259, 1 [#allocation4]
    %v3548 = vld [vmem:[%s3547] ss:$2 sm:$0xf]
    %s3549 = scalar_lea.vmem %s3259, 33 [#allocation4]
    %v3550 = vld [vmem:[%s3549] ss:$2 sm:$0xf]
    %s3551 = scalar_lea.vmem %s3259, 65 [#allocation4]
    %v3552 = vld [vmem:[%s3551] ss:$2 sm:$0xf]
    %s3553 = scalar_lea.vmem %s3259, 97 [#allocation4]
    %v3554 = vld [vmem:[%s3553] ss:$2 sm:$0xf]
    %3559 = vrot.lane.b32.xlu0 %v3548, 8
    %v3560 = vpop.permute.xlu0 %3559
    %3561 = vrot.lane.b32.xlu0 %v3550, 8
    %v3562 = vpop.permute.xlu0 %3561
    %3563 = vrot.lane.b32.xlu0 %v3552, 8
    %v3564 = vpop.permute.xlu0 %3563
    %3565 = vrot.lane.b32.xlu0 %v3554, 8
    %v3566 = vpop.permute.xlu0 %3565
    %3571 = vst.msk [vmem:[%s3542] sm:$0xf] %vm3328, %v3560
    %3572 = vst.msk [vmem:[%s3542 + $0x4] sm:$0xf] %vm3328, %v3562
    %3573 = vst.msk [vmem:[%s3542 + $0x8] sm:$0xf] %vm3328, %v3564
    %3574 = vst.msk [vmem:[%s3542 + $0xc] sm:$0xf] %vm3328, %v3566
    %s3575 = scalar_lea.vmem %s3259, 2 [#allocation4]
    %v3576 = vld [vmem:[%s3575] ss:$2 sm:$0xf]
    %s3577 = scalar_lea.vmem %s3259, 34 [#allocation4]
    %v3578 = vld [vmem:[%s3577] ss:$2 sm:$0xf]
    %s3579 = scalar_lea.vmem %s3259, 66 [#allocation4]
    %v3580 = vld [vmem:[%s3579] ss:$2 sm:$0xf]
    %s3581 = scalar_lea.vmem %s3259, 98 [#allocation4]
    %v3582 = vld [vmem:[%s3581] ss:$2 sm:$0xf]
    %3587 = vrot.lane.b32.xlu0 %v3576, 16
    %v3588 = vpop.permute.xlu0 %3587
    %3589 = vrot.lane.b32.xlu0 %v3578, 16
    %v3590 = vpop.permute.xlu0 %3589
    %3591 = vrot.lane.b32.xlu0 %v3580, 16
    %v3592 = vpop.permute.xlu0 %3591
    %3593 = vrot.lane.b32.xlu0 %v3582, 16
    %v3594 = vpop.permute.xlu0 %3593
    %3599 = vst.msk [vmem:[%s3542] sm:$0xf] %vm3357, %v3588
    %3600 = vst.msk [vmem:[%s3542 + $0x4] sm:$0xf] %vm3357, %v3590
    %3601 = vst.msk [vmem:[%s3542 + $0x8] sm:$0xf] %vm3357, %v3592
    %3602 = vst.msk [vmem:[%s3542 + $0xc] sm:$0xf] %vm3357, %v3594
    %v3603 = vld [vmem:[%s3274] ss:$2 sm:$0xf]
    %s3604 = scalar_lea.vmem %s3274, 32 [#allocation4]
    %v3605 = vld [vmem:[%s3604] ss:$2 sm:$0xf]
    %s3606 = scalar_lea.vmem %s3274, 64 [#allocation4]
    %v3607 = vld [vmem:[%s3606] ss:$2 sm:$0xf]
    %s3608 = scalar_lea.vmem %s3274, 96 [#allocation4]
    %v3609 = vld [vmem:[%s3608] ss:$2 sm:$0xf]
    %3614 = vrot.lane.b32.xlu0 %v3603, 24
    %v3615 = vpop.permute.xlu0 %3614
    %3616 = vrot.lane.b32.xlu0 %v3605, 24
    %v3617 = vpop.permute.xlu0 %3616
    %3618 = vrot.lane.b32.xlu0 %v3607, 24
    %v3619 = vpop.permute.xlu0 %3618
    %3620 = vrot.lane.b32.xlu0 %v3609, 24
    %v3621 = vpop.permute.xlu0 %3620
    %3626 = vst.msk [vmem:[%s3542] sm:$0xf] %vm3385, %v3615
    %3627 = vst.msk [vmem:[%s3542 + $0x4] sm:$0xf] %vm3385, %v3617
    %3628 = vst.msk [vmem:[%s3542 + $0x8] sm:$0xf] %vm3385, %v3619
    %3629 = vst.msk [vmem:[%s3542 + $0xc] sm:$0xf] %vm3385, %v3621
    %s3630 = scalar_lea.vmem %s3274, 1 [#allocation4]
    %v3631 = vld [vmem:[%s3630] ss:$2 sm:$0xf]
    %s3632 = scalar_lea.vmem %s3274, 33 [#allocation4]
    %v3633 = vld [vmem:[%s3632] ss:$2 sm:$0xf]
    %s3634 = scalar_lea.vmem %s3274, 65 [#allocation4]
    %v3635 = vld [vmem:[%s3634] ss:$2 sm:$0xf]
    %s3636 = scalar_lea.vmem %s3274, 97 [#allocation4]
    %v3637 = vld [vmem:[%s3636] ss:$2 sm:$0xf]
    %3642 = vrot.lane.b32.xlu0 %v3631, 32
    %v3643 = vpop.permute.xlu0 %3642
    %3644 = vrot.lane.b32.xlu0 %v3633, 32
    %v3645 = vpop.permute.xlu0 %3644
    %3646 = vrot.lane.b32.xlu0 %v3635, 32
    %v3647 = vpop.permute.xlu0 %3646
    %3648 = vrot.lane.b32.xlu0 %v3637, 32
    %v3649 = vpop.permute.xlu0 %3648
    %3654 = vst.msk [vmem:[%s3542] sm:$0xf] %vm3414, %v3643
    %3655 = vst.msk [vmem:[%s3542 + $0x4] sm:$0xf] %vm3414, %v3645
    %3656 = vst.msk [vmem:[%s3542 + $0x8] sm:$0xf] %vm3414, %v3647
    %3657 = vst.msk [vmem:[%s3542 + $0xc] sm:$0xf] %vm3414, %v3649
    %s3658 = scalar_lea.vmem %s3274, 2 [#allocation4]
    %v3659 = vld [vmem:[%s3658] ss:$2 sm:$0xf]
    %s3660 = scalar_lea.vmem %s3274, 34 [#allocation4]
    %v3661 = vld [vmem:[%s3660] ss:$2 sm:$0xf]
    %s3662 = scalar_lea.vmem %s3274, 66 [#allocation4]
    %v3663 = vld [vmem:[%s3662] ss:$2 sm:$0xf]
    %s3664 = scalar_lea.vmem %s3274, 98 [#allocation4]
    %v3665 = vld [vmem:[%s3664] ss:$2 sm:$0xf]
    %3670 = vrot.lane.b32.xlu0 %v3659, 40
    %v3671 = vpop.permute.xlu0 %3670
    %3672 = vrot.lane.b32.xlu0 %v3661, 40
    %v3673 = vpop.permute.xlu0 %3672
    %3674 = vrot.lane.b32.xlu0 %v3663, 40
    %v3675 = vpop.permute.xlu0 %3674
    %3676 = vrot.lane.b32.xlu0 %v3665, 40
    %v3677 = vpop.permute.xlu0 %3676
    %3682 = vst.msk [vmem:[%s3542] sm:$0xf] %vm3443, %v3671
    %3683 = vst.msk [vmem:[%s3542 + $0x4] sm:$0xf] %vm3443, %v3673
    %3684 = vst.msk [vmem:[%s3542 + $0x8] sm:$0xf] %vm3443, %v3675
    %3685 = vst.msk [vmem:[%s3542 + $0xc] sm:$0xf] %vm3443, %v3677
    %s3686 = scalar_lea.vmem [#allocation4], 192
    %v3687 = vld [vmem:[%s3686] ss:$2 sm:$0xf]
    %s3688 = scalar_lea.vmem %s3686, 32 [#allocation4]
    %v3689 = vld [vmem:[%s3688] ss:$2 sm:$0xf]
    %s3690 = scalar_lea.vmem %s3686, 64 [#allocation4]
    %v3691 = vld [vmem:[%s3690] ss:$2 sm:$0xf]
    %s3692 = scalar_lea.vmem %s3686, 96 [#allocation4]
    %v3693 = vld [vmem:[%s3692] ss:$2 sm:$0xf]
    %3698 = vrot.lane.b32.xlu0 %v3687, 48
    %v3699 = vpop.permute.xlu0 %3698
    %3700 = vrot.lane.b32.xlu0 %v3689, 48
    %v3701 = vpop.permute.xlu0 %3700
    %3702 = vrot.lane.b32.xlu0 %v3691, 48
    %v3703 = vpop.permute.xlu0 %3702
    %3704 = vrot.lane.b32.xlu0 %v3693, 48
    %v3705 = vpop.permute.xlu0 %3704
    %3710 = vst.msk [vmem:[%s3542] sm:$0xf] %vm3472, %v3699
    %3711 = vst.msk [vmem:[%s3542 + $0x4] sm:$0xf] %vm3472, %v3701
    %3712 = vst.msk [vmem:[%s3542 + $0x8] sm:$0xf] %vm3472, %v3703
    %3713 = vst.msk [vmem:[%s3542 + $0xc] sm:$0xf] %vm3472, %v3705
    %s3714 = scalar_lea.vmem %s3686, 1 [#allocation4]
    %v3715 = vld [vmem:[%s3714] ss:$2 sm:$0xf]
    %s3716 = scalar_lea.vmem %s3686, 33 [#allocation4]
    %v3717 = vld [vmem:[%s3716] ss:$2 sm:$0xf]
    %s3718 = scalar_lea.vmem %s3686, 65 [#allocation4]
    %v3719 = vld [vmem:[%s3718] ss:$2 sm:$0xf]
    %s3720 = scalar_lea.vmem %s3686, 97 [#allocation4]
    %v3721 = vld [vmem:[%s3720] ss:$2 sm:$0xf]
    %3726 = vrot.lane.b32.xlu0 %v3715, 56
    %v3727 = vpop.permute.xlu0 %3726
    %3728 = vrot.lane.b32.xlu0 %v3717, 56
    %v3729 = vpop.permute.xlu0 %3728
    %3730 = vrot.lane.b32.xlu0 %v3719, 56
    %v3731 = vpop.permute.xlu0 %3730
    %3732 = vrot.lane.b32.xlu0 %v3721, 56
    %v3733 = vpop.permute.xlu0 %3732
    %3738 = vst.msk [vmem:[%s3542] sm:$0xf] %vm3501, %v3727
    %3739 = vst.msk [vmem:[%s3542 + $0x4] sm:$0xf] %vm3501, %v3729
    %3740 = vst.msk [vmem:[%s3542 + $0x8] sm:$0xf] %vm3501, %v3731
    %3741 = vst.msk [vmem:[%s3542 + $0xc] sm:$0xf] %vm3501, %v3733
    %s3742 = scalar_lea.vmem %s3686, 2 [#allocation4]
    %v3743 = vld [vmem:[%s3742] ss:$2 sm:$0xf]
    %s3744 = scalar_lea.vmem %s3686, 34 [#allocation4]
    %v3745 = vld [vmem:[%s3744] ss:$2 sm:$0xf]
    %s3746 = scalar_lea.vmem %s3686, 66 [#allocation4]
    %v3747 = vld [vmem:[%s3746] ss:$2 sm:$0xf]
    %s3748 = scalar_lea.vmem %s3686, 98 [#allocation4]
    %v3749 = vld [vmem:[%s3748] ss:$2 sm:$0xf]
    %3754 = vrot.lane.b32.xlu0 %v3743, 64
    %v3755 = vpop.permute.xlu0 %3754
    %3756 = vrot.lane.b32.xlu0 %v3745, 64
    %v3757 = vpop.permute.xlu0 %3756
    %3758 = vrot.lane.b32.xlu0 %v3747, 64
    %v3759 = vpop.permute.xlu0 %3758
    %3760 = vrot.lane.b32.xlu0 %v3749, 64
    %v3761 = vpop.permute.xlu0 %3760
    %3766 = vst.msk [vmem:[%s3542] sm:$0xf] %vm3530, %v3755
    %3767 = vst.msk [vmem:[%s3542 + $0x4] sm:$0xf] %vm3530, %v3757
    %3768 = vst.msk [vmem:[%s3542 + $0x8] sm:$0xf] %vm3530, %v3759
    %3769 = vst.msk [vmem:[%s3542 + $0xc] sm:$0xf] %vm3530, %v3761
    %v3770 = vld [vmem:[#allocation5] sm:$0xf]
    %v3771 = vld [vmem:[#allocation5 + $0x4] sm:$0xf]
    %v3772 = vld [vmem:[#allocation5 + $0x8] sm:$0xf]
    %v3773 = vld [vmem:[#allocation5 + $0xc] sm:$0xf]
    %v3774 = vld [vmem:[#allocation5 + $0x10] sm:$0xf]
    %v3775 = vld [vmem:[#allocation5 + $0x14] sm:$0xf]
    %v3776 = vld [vmem:[#allocation5 + $0x18] sm:$0xf]
    %v3777 = vld [vmem:[#allocation5 + $0x1c] sm:$0xf]
    %v3778 = vld [vmem:[%s3] sm:$0xff]
    %v3779 = vld [vmem:[%s3 + $0x8] sm:$0xff]
    %v3780 = vld [vmem:[%s3 + $0x10] sm:$0xff]
    %v3781 = vld [vmem:[%s3 + $0x18] sm:$0xff]
    %v3782 = vld [vmem:[%s3 + $0x20] sm:$0xff]
    %v3783 = vld [vmem:[%s3 + $0x28] sm:$0xff]
    %v3784 = vld [vmem:[%s3 + $0x30] sm:$0xff]
    %v3785 = vld [vmem:[%s3 + $0x38] sm:$0xff]
    %v3786 = vld [vmem:[%s3 + $0x40] sm:$0xff]
    %v3787 = vld [vmem:[%s3 + $0x48] sm:$0xff]
    %v3788 = vld [vmem:[%s3 + $0x50] sm:$0xff]
    %v3789 = vld [vmem:[%s3 + $0x58] sm:$0xff]
    %v3790 = vld [vmem:[%s3 + $0x60] sm:$0xff]
    %v3791 = vld [vmem:[%s3 + $0x68] sm:$0xff]
    %v3792 = vld [vmem:[%s3 + $0x70] sm:$0xff]
    %v3793 = vld [vmem:[%s3 + $0x78] sm:$0xff]
    %v3794 = vld [vmem:[%s4] sm:$0x1]
    %v3796 = vperm.slane %v3794, 0
    %3806 = vst [vmem:[#allocation1] ss:$2 sm:$0xff] %v3770
    %s3807 = scalar_lea.vmem [#allocation1], 1
    %3808 = vst [vmem:[%s3807] ss:$2 sm:$0xff] %v3771
    %s3809 = scalar_lea.vmem [#allocation1], 16
    %3810 = vst [vmem:[%s3809] ss:$2 sm:$0xff] %v3772
    %s3811 = scalar_lea.vmem [#allocation1], 17
    %3812 = vst [vmem:[%s3811] ss:$2 sm:$0xff] %v3773
    %s3813 = scalar_lea.vmem [#allocation1], 32
    %3814 = vst [vmem:[%s3813] ss:$2 sm:$0xff] %v3774
    %s3815 = scalar_lea.vmem [#allocation1], 33
    %3816 = vst [vmem:[%s3815] ss:$2 sm:$0xff] %v3775
    %s3817 = scalar_lea.vmem [#allocation1], 48
    %3818 = vst [vmem:[%s3817] ss:$2 sm:$0xff] %v3776
    %s3819 = scalar_lea.vmem [#allocation1], 49
    %3820 = vst [vmem:[%s3819] ss:$2 sm:$0xff] %v3777
    %v3821 = vld.sshfl [vmem:[#allocation1] sm:$0xff pattern:$0x75316420]
    %v3822 = vld.sshfl [vmem:[#allocation1 + $0x10] sm:$0xff pattern:$0x75316420]
    %v3823 = vld.sshfl [vmem:[#allocation1 + $0x20] sm:$0xff pattern:$0x75316420]
    %v3824 = vld.sshfl [vmem:[#allocation1 + $0x30] sm:$0xff pattern:$0x75316420]
    %3829 = vmatpush.msra.mxu0 %v3793
    %3830 = vmatpush.msra.mxu0 %v3792
    %3831 = vmatpush.msra.mxu0 %v3791
    %3832 = vmatpush.msra.mxu0 %v3790
    %3833 = vmatpush.msra.mxu0 %v3789
    %3834 = vmatpush.msra.mxu0 %v3788
    %3835 = vmatpush.msra.mxu0 %v3787
    %3836 = vmatpush.msra.mxu0 %v3786
    %3837 = vmatpush.msra.mxu0 %v3785
    %3838 = vmatpush.msra.mxu0 %v3784
    %3839 = vmatpush.msra.mxu0 %v3783
    %3840 = vmatpush.msra.mxu0 %v3782
    %3841 = vmatpush.msra.mxu0 %v3781
    %3842 = vmatpush.msra.mxu0 %v3780
    %3843 = vmatpush.msra.mxu0 %v3779
    %3844 = vmatpush.msra.mxu0 %v3778
    %3845 = vmatmul.f32.gmra.mxu0 %v3821
    %v3846 = vpop.f32.mrf.mxu0
    %v3847 = vadd.f32 %v3796, %v3846
    %3848 = vmatmul.f32.gmra.mxu0 %v3822
    %v3849 = vpop.f32.mrf.mxu0
    %v3850 = vadd.f32 %v3796, %v3849
    %3851 = vmatmul.f32.gmra.mxu0 %v3823
    %v3852 = vpop.f32.mrf.mxu0
    %v3853 = vadd.f32 %v3796, %v3852
    %3854 = vmatmul.f32.gmra.mxu0 %v3824
    %v3855 = vpop.f32.mrf.mxu0
    %v3856 = vadd.f32 %v3796, %v3855
    %3857 = vdwg.mxu0
    %vm3858 = vcmp.ge.f32.partialorder %v3847, 0.0
    %vm3859 = vcmp.ge.f32.partialorder %v3850, 0.0
    %vm3860 = vcmp.ge.f32.partialorder %v3853, 0.0
    %vm3861 = vcmp.ge.f32.partialorder %v3856, 0.0
    %v3862 = vmul.f32 %v3847, 0.1
    %v3863 = vmul.f32 %v3850, 0.1
    %v3864 = vmul.f32 %v3853, 0.1
    %v3865 = vmul.f32 %v3856, 0.1
    %v3866 = vsel %vm3858, %v3847, %v3862
    %v3867 = vsel %vm3859, %v3850, %v3863
    %v3868 = vsel %vm3860, %v3853, %v3864
    %v3869 = vsel %vm3861, %v3856, %v3865
    %3870 = vst [vmem:[#allocation10] sm:$0xff] %v3866
    %3871 = vst [vmem:[#allocation10 + $0x8] sm:$0xff] %v3867
    %3872 = vst [vmem:[#allocation10 + $0x10] sm:$0xff] %v3868
    %3873 = vst [vmem:[#allocation10 + $0x18] sm:$0xff] %v3869
    %v3876 = vrot.slane %v3866, 4
    %v3877 = vrot.slane %v3867, 4
    %v3882 = vrot.slane %v3868, 4
    %v3883 = vrot.slane %v3869, 4
    %vm3886 = vcmask 122880
    %3887 = vst.msk [vmem:[#allocation6] sm:$0x1] %vm3886, 0.0
    %3888 = vst.msk [vmem:[#allocation6 + $0x8] sm:$0x1] %vm3886, 0.0
    %3889 = vst.msk [vmem:[#allocation6 + $0x10] sm:$0x1] %vm3886, 0.0
    %3890 = vst.msk [vmem:[#allocation6 + $0x18] sm:$0x1] %vm3886, 0.0
    %3891 = vst.msk [vmem:[#allocation6 + $0x20] sm:$0x1] %vm3886, 0.0
    %3892 = vst.msk [vmem:[#allocation6 + $0x28] sm:$0x1] %vm3886, 0.0
    %3893 = vst.msk [vmem:[#allocation6 + $0x30] sm:$0x1] %vm3886, 0.0
    %3894 = vst.msk [vmem:[#allocation6 + $0x38] sm:$0x1] %vm3886, 0.0
    %3895 = vst.msk [vmem:[#allocation6 + $0x40] sm:$0x1] %vm3886, 0.0
    %3896 = vst.msk [vmem:[#allocation6 + $0x48] sm:$0x1] %vm3886, 0.0
    %3897 = vst.msk [vmem:[#allocation6 + $0x50] sm:$0x1] %vm3886, 0.0
    %3898 = vst.msk [vmem:[#allocation6 + $0x58] sm:$0x1] %vm3886, 0.0
    %3899 = vst.msk [vmem:[#allocation6 + $0x5] sm:$0x1] %vm3886, 0.0
    %3900 = vst.msk [vmem:[#allocation6 + $0xd] sm:$0x1] %vm3886, 0.0
    %3901 = vst.msk [vmem:[#allocation6 + $0x15] sm:$0x1] %vm3886, 0.0
    %3902 = vst.msk [vmem:[#allocation6 + $0x1d] sm:$0x1] %vm3886, 0.0
    %3903 = vst.msk [vmem:[#allocation6 + $0x25] sm:$0x1] %vm3886, 0.0
    %3904 = vst.msk [vmem:[#allocation6 + $0x2d] sm:$0x1] %vm3886, 0.0
    %3905 = vst.msk [vmem:[#allocation6 + $0x35] sm:$0x1] %vm3886, 0.0
    %3906 = vst.msk [vmem:[#allocation6 + $0x3d] sm:$0x1] %vm3886, 0.0
    %3907 = vst.msk [vmem:[#allocation6 + $0x45] sm:$0x1] %vm3886, 0.0
    %3908 = vst.msk [vmem:[#allocation6 + $0x4d] sm:$0x1] %vm3886, 0.0
    %3909 = vst.msk [vmem:[#allocation6 + $0x55] sm:$0x1] %vm3886, 0.0
    %3910 = vst.msk [vmem:[#allocation6 + $0x5d] sm:$0x1] %vm3886, 0.0
    %vm3911 = vcmask 128000
    %3912 = vst.msk [vmem:[#allocation6] sm:$0x3f] %vm3911, 0.0
    %s3913 = scalar_lea.vmem [#allocation6], 40
    %3914 = vst.msk [vmem:[%s3913] sm:$0x3f] %vm3911, 0.0
    %s3915 = scalar_lea.vmem [#allocation6], 48
    %3916 = vst.msk [vmem:[%s3915] sm:$0x3f] %vm3911, 0.0
    %s3917 = scalar_lea.vmem [#allocation6], 88
    %3918 = vst.msk [vmem:[%s3917] sm:$0x3f] %vm3911, 0.0
    %s3919 = scalar_lea.vmem [#allocation6], 8
    %vm3920 = vcmask 125952
    %3921 = vst.msk [vmem:[%s3919 + $0x1] sm:$0xf] %vm3920, %v3866
    %3922 = vst.msk [vmem:[%s3919 + $0x9] sm:$0xf] %vm3920, %v3876
    %3923 = vst.msk [vmem:[%s3919 + $0x11] sm:$0xf] %vm3920, %v3867
    %3924 = vst.msk [vmem:[%s3919 + $0x19] sm:$0xf] %vm3920, %v3877
    %s3925 = scalar_lea.vmem [#allocation6], 56
    %3926 = vst.msk [vmem:[%s3925 + $0x1] sm:$0xf] %vm3920, %v3868
    %3927 = vst.msk [vmem:[%s3925 + $0x9] sm:$0xf] %vm3920, %v3882
    %3928 = vst.msk [vmem:[%s3925 + $0x11] sm:$0xf] %vm3920, %v3869
    %3929 = vst.msk [vmem:[%s3925 + $0x19] sm:$0xf] %vm3920, %v3883
    %vm3930 = vcmask 1041536
    %3931 = vst.msk [vmem:[#allocation7 + $0x2] sm:$0x3] %vm3930, 0.0
    %3932 = vst.msk [vmem:[#allocation7 + $0x6] sm:$0x3] %vm3930, 0.0
    %3933 = vst.msk [vmem:[#allocation7 + $0xa] sm:$0x3] %vm3930, 0.0
    %3934 = vst.msk [vmem:[#allocation7 + $0xe] sm:$0x3] %vm3930, 0.0
    %v3935 = vld [vmem:[#allocation6] ss:$2 sm:$0x3]
    %s3936 = scalar_lea.vmem [#allocation6], 16
    %v3937 = vld [vmem:[%s3936] ss:$2 sm:$0x3]
    %vm3938 = vcmask 123904
    %3939 = vst.msk [vmem:[#allocation7] sm:$0x3] %vm3938, %v3935
    %3940 = vst.msk [vmem:[#allocation7 + $0x4] sm:$0x3] %vm3938, %v3937
    %s3941 = scalar_lea.vmem [#allocation6], 1
    %v3942 = vld [vmem:[%s3941] ss:$2 sm:$0x3]
    %s3943 = scalar_lea.vmem [#allocation6], 17
    %v3944 = vld [vmem:[%s3943] ss:$2 sm:$0x3]
    %3947 = vrot.lane.b32.xlu0 %v3942, 16
    %v3948 = vpop.permute.xlu0 %3947
    %3949 = vrot.lane.b32.xlu0 %v3944, 16
    %v3950 = vpop.permute.xlu0 %3949
    %vm3953 = vcmask 255104
    %3954 = vst.msk [vmem:[#allocation7] sm:$0x3] %vm3953, %v3948
    %3955 = vst.msk [vmem:[#allocation7 + $0x4] sm:$0x3] %vm3953, %v3950
    %s3956 = scalar_lea.vmem [#allocation6], 2
    %v3957 = vld [vmem:[%s3956] ss:$2 sm:$0x3]
    %s3958 = scalar_lea.vmem [#allocation6], 18
    %v3959 = vld [vmem:[%s3958] ss:$2 sm:$0x3]
    %3962 = vrot.lane.b32.xlu0 %v3957, 32
    %v3963 = vpop.permute.xlu0 %3962
    %3964 = vrot.lane.b32.xlu0 %v3959, 32
    %v3965 = vpop.permute.xlu0 %3964
    %vm3968 = vcmask 386304
    %3969 = vst.msk [vmem:[#allocation7] sm:$0x3] %vm3968, %v3963
    %3970 = vst.msk [vmem:[#allocation7 + $0x4] sm:$0x3] %vm3968, %v3965
    %v3971 = vld [vmem:[%s3919] ss:$2 sm:$0x3]
    %s3972 = scalar_lea.vmem %s3919, 16 [#allocation6]
    %v3973 = vld [vmem:[%s3972] ss:$2 sm:$0x3]
    %3976 = vrot.lane.b32.xlu0 %v3971, 48
    %v3977 = vpop.permute.xlu0 %3976
    %3978 = vrot.lane.b32.xlu0 %v3973, 48
    %v3979 = vpop.permute.xlu0 %3978
    %vm3982 = vcmask 517504
    %3983 = vst.msk [vmem:[#allocation7] sm:$0x3] %vm3982, %v3977
    %3984 = vst.msk [vmem:[#allocation7 + $0x4] sm:$0x3] %vm3982, %v3979
    %s3985 = scalar_lea.vmem %s3919, 1 [#allocation6]
    %v3986 = vld [vmem:[%s3985] ss:$2 sm:$0x3]
    %s3987 = scalar_lea.vmem %s3919, 17 [#allocation6]
    %v3988 = vld [vmem:[%s3987] ss:$2 sm:$0x3]
    %3991 = vrot.lane.b32.xlu0 %v3986, 64
    %v3992 = vpop.permute.xlu0 %3991
    %3993 = vrot.lane.b32.xlu0 %v3988, 64
    %v3994 = vpop.permute.xlu0 %3993
    %vm3997 = vcmask 648704
    %3998 = vst.msk [vmem:[#allocation7] sm:$0x3] %vm3997, %v3992
    %3999 = vst.msk [vmem:[#allocation7 + $0x4] sm:$0x3] %vm3997, %v3994
    %s4000 = scalar_lea.vmem %s3919, 2 [#allocation6]
    %v4001 = vld [vmem:[%s4000] ss:$2 sm:$0x3]
    %s4002 = scalar_lea.vmem %s3919, 18 [#allocation6]
    %v4003 = vld [vmem:[%s4002] ss:$2 sm:$0x3]
    %4006 = vrot.lane.b32.xlu0 %v4001, 80
    %v4007 = vpop.permute.xlu0 %4006
    %4008 = vrot.lane.b32.xlu0 %v4003, 80
    %v4009 = vpop.permute.xlu0 %4008
    %vm4012 = vcmask 779904
    %4013 = vst.msk [vmem:[#allocation7] sm:$0x3] %vm4012, %v4007
    %4014 = vst.msk [vmem:[#allocation7 + $0x4] sm:$0x3] %vm4012, %v4009
    %s4015 = scalar_lea.vmem [#allocation6], 16
    %v4016 = vld [vmem:[%s4015] ss:$2 sm:$0x3]
    %s4017 = scalar_lea.vmem %s4015, 16 [#allocation6]
    %v4018 = vld [vmem:[%s4017] ss:$2 sm:$0x3]
    %4021 = vrot.lane.b32.xlu0 %v4016, 96
    %v4022 = vpop.permute.xlu0 %4021
    %4023 = vrot.lane.b32.xlu0 %v4018, 96
    %v4024 = vpop.permute.xlu0 %4023
    %vm4027 = vcmask 911104
    %4028 = vst.msk [vmem:[#allocation7] sm:$0x3] %vm4027, %v4022
    %4029 = vst.msk [vmem:[#allocation7 + $0x4] sm:$0x3] %vm4027, %v4024
    %s4030 = scalar_lea.vmem %s4015, 1 [#allocation6]
    %v4031 = vld [vmem:[%s4030] ss:$2 sm:$0x3]
    %s4032 = scalar_lea.vmem %s4015, 17 [#allocation6]
    %v4033 = vld [vmem:[%s4032] ss:$2 sm:$0x3]
    %4036 = vrot.lane.b32.xlu0 %v4031, 112
    %v4037 = vpop.permute.xlu0 %4036
    %4038 = vrot.lane.b32.xlu0 %v4033, 112
    %v4039 = vpop.permute.xlu0 %4038
    %vm4042 = vcmask 1042304
    %4043 = vst.msk [vmem:[#allocation7] sm:$0x3] %vm4042, %v4037
    %4044 = vst.msk [vmem:[#allocation7 + $0x4] sm:$0x3] %vm4042, %v4039
    %s4045 = scalar_lea.vmem %s4015, 2 [#allocation6]
    %v4046 = vld [vmem:[%s4045] ss:$2 sm:$0x3]
    %s4047 = scalar_lea.vmem %s4015, 18 [#allocation6]
    %v4048 = vld [vmem:[%s4047] ss:$2 sm:$0x3]
    %4049 = vst.msk [vmem:[#allocation7 + $0x2] sm:$0x3] %vm3938, %v4046
    %4050 = vst.msk [vmem:[#allocation7 + $0x6] sm:$0x3] %vm3938, %v4048
    %v4051 = vld [vmem:[%s3915] ss:$2 sm:$0x3]
    %s4052 = scalar_lea.vmem %s3915, 16 [#allocation6]
    %v4053 = vld [vmem:[%s4052] ss:$2 sm:$0x3]
    %s4054 = scalar_lea.vmem [#allocation7], 8
    %4055 = vst.msk [vmem:[%s4054] sm:$0x3] %vm3938, %v4051
    %4056 = vst.msk [vmem:[%s4054 + $0x4] sm:$0x3] %vm3938, %v4053
    %s4057 = scalar_lea.vmem %s3915, 1 [#allocation6]
    %v4058 = vld [vmem:[%s4057] ss:$2 sm:$0x3]
    %s4059 = scalar_lea.vmem %s3915, 17 [#allocation6]
    %v4060 = vld [vmem:[%s4059] ss:$2 sm:$0x3]
    %4063 = vrot.lane.b32.xlu0 %v4058, 16
    %v4064 = vpop.permute.xlu0 %4063
    %4065 = vrot.lane.b32.xlu0 %v4060, 16
    %v4066 = vpop.permute.xlu0 %4065
    %4069 = vst.msk [vmem:[%s4054] sm:$0x3] %vm3953, %v4064
    %4070 = vst.msk [vmem:[%s4054 + $0x4] sm:$0x3] %vm3953, %v4066
    %s4071 = scalar_lea.vmem %s3915, 2 [#allocation6]
    %v4072 = vld [vmem:[%s4071] ss:$2 sm:$0x3]
    %s4073 = scalar_lea.vmem %s3915, 18 [#allocation6]
    %v4074 = vld [vmem:[%s4073] ss:$2 sm:$0x3]
    %4077 = vrot.lane.b32.xlu0 %v4072, 32
    %v4078 = vpop.permute.xlu0 %4077
    %4079 = vrot.lane.b32.xlu0 %v4074, 32
    %v4080 = vpop.permute.xlu0 %4079
    %4083 = vst.msk [vmem:[%s4054] sm:$0x3] %vm3968, %v4078
    %4084 = vst.msk [vmem:[%s4054 + $0x4] sm:$0x3] %vm3968, %v4080
    %v4085 = vld [vmem:[%s3925] ss:$2 sm:$0x3]
    %s4086 = scalar_lea.vmem %s3925, 16 [#allocation6]
    %v4087 = vld [vmem:[%s4086] ss:$2 sm:$0x3]
    %4090 = vrot.lane.b32.xlu0 %v4085, 48
    %v4091 = vpop.permute.xlu0 %4090
    %4092 = vrot.lane.b32.xlu0 %v4087, 48
    %v4093 = vpop.permute.xlu0 %4092
    %4096 = vst.msk [vmem:[%s4054] sm:$0x3] %vm3982, %v4091
    %4097 = vst.msk [vmem:[%s4054 + $0x4] sm:$0x3] %vm3982, %v4093
    %s4098 = scalar_lea.vmem %s3925, 1 [#allocation6]
    %v4099 = vld [vmem:[%s4098] ss:$2 sm:$0x3]
    %s4100 = scalar_lea.vmem %s3925, 17 [#allocation6]
    %v4101 = vld [vmem:[%s4100] ss:$2 sm:$0x3]
    %4104 = vrot.lane.b32.xlu0 %v4099, 64
    %v4105 = vpop.permute.xlu0 %4104
    %4106 = vrot.lane.b32.xlu0 %v4101, 64
    %v4107 = vpop.permute.xlu0 %4106
    %4110 = vst.msk [vmem:[%s4054] sm:$0x3] %vm3997, %v4105
    %4111 = vst.msk [vmem:[%s4054 + $0x4] sm:$0x3] %vm3997, %v4107
    %s4112 = scalar_lea.vmem %s3925, 2 [#allocation6]
    %v4113 = vld [vmem:[%s4112] ss:$2 sm:$0x3]
    %s4114 = scalar_lea.vmem %s3925, 18 [#allocation6]
    %v4115 = vld [vmem:[%s4114] ss:$2 sm:$0x3]
    %4118 = vrot.lane.b32.xlu0 %v4113, 80
    %v4119 = vpop.permute.xlu0 %4118
    %4120 = vrot.lane.b32.xlu0 %v4115, 80
    %v4121 = vpop.permute.xlu0 %4120
    %4124 = vst.msk [vmem:[%s4054] sm:$0x3] %vm4012, %v4119
    %4125 = vst.msk [vmem:[%s4054 + $0x4] sm:$0x3] %vm4012, %v4121
    %s4126 = scalar_lea.vmem [#allocation6], 64
    %v4127 = vld [vmem:[%s4126] ss:$2 sm:$0x3]
    %s4128 = scalar_lea.vmem %s4126, 16 [#allocation6]
    %v4129 = vld [vmem:[%s4128] ss:$2 sm:$0x3]
    %4132 = vrot.lane.b32.xlu0 %v4127, 96
    %v4133 = vpop.permute.xlu0 %4132
    %4134 = vrot.lane.b32.xlu0 %v4129, 96
    %v4135 = vpop.permute.xlu0 %4134
    %4138 = vst.msk [vmem:[%s4054] sm:$0x3] %vm4027, %v4133
    %4139 = vst.msk [vmem:[%s4054 + $0x4] sm:$0x3] %vm4027, %v4135
    %s4140 = scalar_lea.vmem %s4126, 1 [#allocation6]
    %v4141 = vld [vmem:[%s4140] ss:$2 sm:$0x3]
    %s4142 = scalar_lea.vmem %s4126, 17 [#allocation6]
    %v4143 = vld [vmem:[%s4142] ss:$2 sm:$0x3]
    %4146 = vrot.lane.b32.xlu0 %v4141, 112
    %v4147 = vpop.permute.xlu0 %4146
    %4148 = vrot.lane.b32.xlu0 %v4143, 112
    %v4149 = vpop.permute.xlu0 %4148
    %4152 = vst.msk [vmem:[%s4054] sm:$0x3] %vm4042, %v4147
    %4153 = vst.msk [vmem:[%s4054 + $0x4] sm:$0x3] %vm4042, %v4149
    %s4154 = scalar_lea.vmem %s4126, 2 [#allocation6]
    %v4155 = vld [vmem:[%s4154] ss:$2 sm:$0x3]
    %s4156 = scalar_lea.vmem %s4126, 18 [#allocation6]
    %v4157 = vld [vmem:[%s4156] ss:$2 sm:$0x3]
    %4158 = vst.msk [vmem:[%s4054 + $0x2] sm:$0x3] %vm3938, %v4155
    %4159 = vst.msk [vmem:[%s4054 + $0x6] sm:$0x3] %vm3938, %v4157
    %v4160 = vld [vmem:[#allocation7] sm:$0xf]
    %v4161 = vld [vmem:[#allocation7 + $0x4] sm:$0xf]
    %v4162 = vld [vmem:[#allocation7 + $0x8] sm:$0xf]
    %v4163 = vld [vmem:[#allocation7 + $0xc] sm:$0xf]
    %v4164 = vld [vmem:[%s5] sm:$0xff]
    %v4165 = vld [vmem:[%s5 + $0x8] sm:$0xff]
    %v4166 = vld [vmem:[%s5 + $0x10] sm:$0xff]
    %v4167 = vld [vmem:[%s5 + $0x18] sm:$0xff]
    %v4168 = vld [vmem:[%s5 + $0x20] sm:$0xff]
    %v4169 = vld [vmem:[%s5 + $0x28] sm:$0xff]
    %v4170 = vld [vmem:[%s5 + $0x30] sm:$0xff]
    %v4171 = vld [vmem:[%s5 + $0x38] sm:$0xff]
    %v4172 = vld [vmem:[%s5 + $0x40] sm:$0xff]
    %v4173 = vld [vmem:[%s5 + $0x48] sm:$0xff]
    %v4174 = vld [vmem:[%s5 + $0x50] sm:$0xff]
    %v4175 = vld [vmem:[%s5 + $0x58] sm:$0xff]
    %v4176 = vld [vmem:[%s5 + $0x60] sm:$0xff]
    %v4177 = vld [vmem:[%s5 + $0x68] sm:$0xff]
    %v4178 = vld [vmem:[%s5 + $0x70] sm:$0xff]
    %v4179 = vld [vmem:[%s5 + $0x78] sm:$0xff]
    %v4180 = vld [vmem:[%s5 + $0x80] sm:$0xff]
    %v4181 = vld [vmem:[%s5 + $0x88] sm:$0xff]
    %v4182 = vld [vmem:[%s5 + $0x90] sm:$0xff]
    %v4183 = vld [vmem:[%s5 + $0x98] sm:$0xff]
    %v4184 = vld [vmem:[%s5 + $0xa0] sm:$0xff]
    %v4185 = vld [vmem:[%s5 + $0xa8] sm:$0xff]
    %v4186 = vld [vmem:[%s5 + $0xb0] sm:$0xff]
    %v4187 = vld [vmem:[%s5 + $0xb8] sm:$0xff]
    %v4188 = vld [vmem:[%s5 + $0xc0] sm:$0xff]
    %v4189 = vld [vmem:[%s5 + $0xc8] sm:$0xff]
    %v4190 = vld [vmem:[%s5 + $0xd0] sm:$0xff]
    %v4191 = vld [vmem:[%s5 + $0xd8] sm:$0xff]
    %v4192 = vld [vmem:[%s5 + $0xe0] sm:$0xff]
    %v4193 = vld [vmem:[%s5 + $0xe8] sm:$0xff]
    %v4194 = vld [vmem:[%s5 + $0xf0] sm:$0xff]
    %v4195 = vld [vmem:[%s5 + $0xf8] sm:$0xff]
    %v4196 = vld [vmem:[%s6] sm:$0x1]
    %v4198 = vperm.slane %v4196, 0
    %4204 = vst [vmem:[#allocation1] ss:$4 sm:$0xff] %v4160
    %s4205 = scalar_lea.vmem [#allocation1], 1
    %4206 = vst [vmem:[%s4205] ss:$4 sm:$0xff] %v4161
    %s4207 = scalar_lea.vmem [#allocation1], 2
    %4208 = vst [vmem:[%s4207] ss:$4 sm:$0xff] %v4162
    %s4209 = scalar_lea.vmem [#allocation1], 3
    %4210 = vst [vmem:[%s4209] ss:$4 sm:$0xff] %v4163
    %v4211 = vld.sshfl [vmem:[#allocation1] sm:$0xff pattern:$0x73625140]
    %v4212 = vld.sshfl [vmem:[#allocation1 + $0x8] sm:$0xff pattern:$0x73625140]
    %4215 = vmatpush.msra.mxu0 %v4179
    %4216 = vmatpush.msra.mxu0 %v4178
    %4217 = vmatpush.msra.mxu0 %v4177
    %4218 = vmatpush.msra.mxu0 %v4176
    %4219 = vmatpush.msra.mxu0 %v4175
    %4220 = vmatpush.msra.mxu0 %v4174
    %4221 = vmatpush.msra.mxu0 %v4173
    %4222 = vmatpush.msra.mxu0 %v4172
    %4223 = vmatpush.msra.mxu0 %v4171
    %4224 = vmatpush.msra.mxu0 %v4170
    %4225 = vmatpush.msra.mxu0 %v4169
    %4226 = vmatpush.msra.mxu0 %v4168
    %4227 = vmatpush.msra.mxu0 %v4167
    %4228 = vmatpush.msra.mxu0 %v4166
    %4229 = vmatpush.msra.mxu0 %v4165
    %4230 = vmatpush.msra.mxu0 %v4164
    %4231 = vmatmul.f32.gmra.mxu0 %v4211
    %v4232 = vpop.f32.mrf.mxu0
    %v4233 = vadd.f32 %v4198, %v4232
    %4234 = vdwg.mxu0
    %4235 = vmatpush.msra.mxu0 %v4195
    %4236 = vmatpush.msra.mxu0 %v4194
    %4237 = vmatpush.msra.mxu0 %v4193
    %4238 = vmatpush.msra.mxu0 %v4192
    %4239 = vmatpush.msra.mxu0 %v4191
    %4240 = vmatpush.msra.mxu0 %v4190
    %4241 = vmatpush.msra.mxu0 %v4189
    %4242 = vmatpush.msra.mxu0 %v4188
    %4243 = vmatpush.msra.mxu0 %v4187
    %4244 = vmatpush.msra.mxu0 %v4186
    %4245 = vmatpush.msra.mxu0 %v4185
    %4246 = vmatpush.msra.mxu0 %v4184
    %4247 = vmatpush.msra.mxu0 %v4183
    %4248 = vmatpush.msra.mxu0 %v4182
    %4249 = vmatpush.msra.mxu0 %v4181
    %4250 = vmatpush.msra.mxu0 %v4180
    %4251 = vmatmul.f32.gmra.mxu0 %v4212
    %v4252 = vpop.f32.mrf.mxu0
    %v4253 = vadd.f32 %v4233, %v4252
    %4254 = vdwg.mxu0
    %vm4255 = vcmp.ge.f32.partialorder %v4253, 0.0
    %v4256 = vmul.f32 %v4253, 0.1
    %v4257 = vsel %vm4255, %v4253, %v4256
    %4258 = vst [vmem:[#allocation12] sm:$0xff] %v4257
    // Predicated region
    $region30: #{tpu_custom_call.1} parent=1 // pred_check
      _
    $region31: #{tpu_custom_call.1} parent=1 // pred_check_branch
      %4260 = sbr.rel (0) target = $region33
    $region32: #{tpu_custom_call.1} parent=1 // pred_region
      %4262 = vsyncadd [#allocation9], 0
      %s4263 = sshll.u32 [#allocation8], 4
      %s4264 = int_to_ptr.vmem [resolvable:$true] %s4263
      %s4265 = sshll.u32 %s7, 4
      %s4266 = int_to_ptr.hbm [resolvable:$true] %s4265
      %4271 = dma.vmem_to_hbm [thread:$0]  %s4264, 2048, %s4266, [#allocation9], 128, 128, 8
    $region33: #{tpu_custom_call.1} parent=1 // pred_fallthru
      _
    // Predicated region
    $region34: #{tpu_custom_call.1} parent=1 // pred_check
      _
    $region35: #{tpu_custom_call.1} parent=1 // pred_check_branch
      %4273 = sbr.rel (0) target = $region37
    $region36: #{tpu_custom_call.1} parent=1 // pred_region
      %4275 = vsyncadd [#allocation11], 0
      %s4276 = sshll.u32 [#allocation10], 4
      %s4277 = int_to_ptr.vmem [resolvable:$true] %s4276
      %s4278 = sshll.u32 %s8, 4
      %s4279 = int_to_ptr.hbm [resolvable:$true] %s4278
      %4284 = dma.vmem_to_hbm [thread:$0]  %s4277, 512, %s4279, [#allocation11], 128, 128, 8
    $region37: #{tpu_custom_call.1} parent=1 // pred_fallthru
      _
    // Predicated region
    $region38: #{tpu_custom_call.1} parent=1 // pred_check
      _
    $region39: #{tpu_custom_call.1} parent=1 // pred_check_branch
      %4286 = sbr.rel (0) target = $region41
    $region40: #{tpu_custom_call.1} parent=1 // pred_region
      %4288 = vsyncadd [#allocation11], 0
      %s4290 = sshll.u32 [#allocation12], 4
      %s4291 = int_to_ptr.vmem [resolvable:$true] %s4290
      %s4292 = sshll.u32 %s9, 4
      %s4293 = int_to_ptr.hbm [resolvable:$true] %s4292
      %4295 = dma.vmem_to_hbm [thread:$0]  %s4291, 128, %s4293, [#allocation11]
    $region41: #{tpu_custom_call.1} parent=1 // pred_fallthru
      _
    // Predicated region
    $region42: #{tpu_custom_call.1} parent=1 // pred_check
      _
    $region43: #{tpu_custom_call.1} parent=1 // pred_check_branch
      %4297 = sbr.rel (0) target = $region45
    $region44: #{tpu_custom_call.1} parent=1 // pred_region
      %4299 = dma.done [#allocation9], 2048
    $region45: #{tpu_custom_call.1} parent=1 // pred_fallthru
      _
    // Predicated region
    $region46: #{tpu_custom_call.1} parent=1 // pred_check
      _
    $region47: #{tpu_custom_call.1} parent=1 // pred_check_branch
      %4301 = sbr.rel (0) target = $region49
    $region48: #{tpu_custom_call.1} parent=1 // pred_region
      %4303 = dma.done [#allocation11], 512
    $region49: #{tpu_custom_call.1} parent=1 // pred_fallthru
      _
    // Predicated region
    $region50: #{tpu_custom_call.1} parent=1 // pred_check
      _
    $region51: #{tpu_custom_call.1} parent=1 // pred_check_branch
      %4305 = sbr.rel (0) target = $region53
    $region52: #{tpu_custom_call.1} parent=1 // pred_region
      %4307 = dma.done [#allocation11], 128
    $region53: #{tpu_custom_call.1} parent=1 // pred_fallthru
      _
    %4308 = vsyncpa [#allocation9], 1
    %4309 = vsyncpa [#allocation11], 1

</llo_original>
